<compile_context>
chip_gen: v7x
topology: tpu7x:2x2x1
jax: 0.10.0
libtpu: 0.0.40
codegen_flags: <defaults>
</compile_context>

<pallas_src>
import functools
import math

import jax
import jax.numpy as jnp
from jax.experimental import pallas as pl
from jax.experimental.pallas import tpu as pltpu

LN_EPS = 1e-6  # timm ViT LayerNorm eps


# ---------------------------------------------------------------------------
# In-kernel helpers (pure jnp, traced inside the Pallas kernels)
# ---------------------------------------------------------------------------
def _layernorm(x, w, b, eps=LN_EPS):
    mu = jnp.mean(x, axis=-1, keepdims=True)
    var = jnp.mean(jnp.square(x - mu), axis=-1, keepdims=True)
    return (x - mu) * jax.lax.rsqrt(var + eps) * w + b


def _gelu(x):
    # TODO(synk): timm ViT uses exact erf-GELU; tanh approximation kept here for
    # guaranteed Mosaic lowering (max abs error ~1e-3).
    c = math.sqrt(2.0 / math.pi)
    return 0.5 * x * (1.0 + jnp.tanh(c * (x + 0.044715 * x * x * x)))


# ---------------------------------------------------------------------------
# Prologue kernel: patch-embed matmul + (cls | pos | patch-bias) slab add.
# One [M, K] @ [K, D] MXU pass per batch block.
# ---------------------------------------------------------------------------
def _patch_embed_kernel(patches_ref, slab_ref, patch_w_ref, x0_ref):
    x0_ref[...] = (
        jnp.dot(patches_ref[...], patch_w_ref[...],
                preferred_element_type=jnp.float32)
        + slab_ref[...]
    )


# ---------------------------------------------------------------------------
# Main kernel: all `depth` transformer blocks + final CLS LayerNorm.
# Grid = (num_batch_blocks, depth); activation resident in VMEM scratch.
# ---------------------------------------------------------------------------
def _vit_layers_kernel(
    x0_ref, kmask_ref,
    ln1w_ref, ln1b_ref, qkvw_ref, qkvb_ref, projw_ref, projb_ref,
    ln2w_ref, ln2b_ref, w1_ref, b1_ref, w2_ref, b2_ref,
    normw_ref, normb_ref,
    o_ref,
    x_ref, ctx_ref,
    *, num_heads, head_dim, b_blk, t_pad,
):
    layer = pl.program_id(1)
    n_layers = pl.num_programs(1)
    dim = num_heads * head_dim
    scale = 1.0 / math.sqrt(head_dim)

    # ---- layer 0: load the patch-embedded slab for this batch block ----
    @pl.when(layer == 0)
    def _init():
        x_ref[...] = x0_ref[...]

    x = x_ref[...]                      # [M, D] f32, M = b_blk * t_pad
    kmask = kmask_ref[...]              # [1, t_pad] f32 (precomputed, 0 / -1e30)

    # ---- attention (pre-LN): one fused QKV matmul over all M rows ----
    xn = _layernorm(x, ln1w_ref[...], ln1b_ref[...]).astype(jnp.bfloat16)
    qkv = jnp.dot(xn, qkvw_ref[...],
                  preferred_element_type=jnp.float32) + qkvb_ref[...]
    qkv = qkv.astype(jnp.bfloat16)      # bf16 feeds all per-head MXU passes

    # per-image, per-head score/context matmuls; contexts written straight into
    # the [M, D] ctx scratch (no concat / head relayout).
    for img in range(b_blk):
        r0 = img * t_pad
        for h in range(num_heads):
            lo = h * head_dim
            q = qkv[r0:r0 + t_pad, lo:lo + head_dim]
            k = qkv[r0:r0 + t_pad, dim + lo:dim + lo + head_dim]
            v = qkv[r0:r0 + t_pad, 2 * dim + lo:2 * dim + lo + head_dim]
            s = jax.lax.dot_general(
                q, k, (((1,), (1,)), ((), ())),
                preferred_element_type=jnp.float32) * scale + kmask
            s = s - jnp.max(s, axis=-1, keepdims=True)
            p = jnp.exp(s)
            p = p * pl.reciprocal(jnp.sum(p, axis=-1, keepdims=True), approx=True)
            ctx_ref[r0:r0 + t_pad, lo:lo + head_dim] = jnp.dot(
                p.astype(jnp.bfloat16), v, preferred_element_type=jnp.float32)

    attn = jnp.dot(ctx_ref[...].astype(jnp.bfloat16), projw_ref[...],
                   preferred_element_type=jnp.float32) + projb_ref[...]
    x = x + attn

    # ---- MLP (pre-LN) ----
    xn2 = _layernorm(x, ln2w_ref[...], ln2b_ref[...]).astype(jnp.bfloat16)
    h1 = jnp.dot(xn2, w1_ref[...], preferred_element_type=jnp.float32) + b1_ref[...]
    h1 = _gelu(h1)
    h2 = jnp.dot(h1.astype(jnp.bfloat16), w2_ref[...],
                 preferred_element_type=jnp.float32) + b2_ref[...]
    x = x + h2
    x_ref[...] = x

    # ---- final LayerNorm of the CLS rows only, after the last layer ----
    @pl.when(layer == n_layers - 1)
    def _final():
        if b_blk == 1:
            cls = x[0:1, :]
        else:
            cls = jnp.concatenate(
                [x[i * t_pad:i * t_pad + 1, :] for i in range(b_blk)], axis=0)
        o_ref[...] = _layernorm(cls, normw_ref[...], normb_ref[...])


# ---------------------------------------------------------------------------
# Glue: patchify + input slab prep, params, forward wrapper
# ---------------------------------------------------------------------------
def _prepare_inputs(img, params, *, p, D, Np, T, Tpad, K, B_pad, b_blk):
    B, C, H, W = img.shape
    gh, gw = H // p, W // p

    # patchify in (C, ph, pw) order (matches torch conv-weight flattening)
    x = img.reshape(B, C, gh, p, gw, p).transpose(0, 2, 4, 1, 3, 5)
    patches = x.reshape(B, Np, K)
    patches_pad = jnp.zeros((B_pad, Tpad, K), jnp.float32)
    patches_pad = patches_pad.at[:B, 1:1 + Np, :].set(patches)
    patches_flat = patches_pad.reshape(B_pad * Tpad, K).astype(jnp.bfloat16)

    # additive slab, per image: row0 = cls+pos[0]; rows 1..Np = pos[1:]+patch_b
    slab1 = jnp.zeros((Tpad, D), jnp.float32)
    slab1 = slab1.at[0, :].set(params["cls_token"][0] + params["pos_embed"][0])
    slab1 = slab1.at[1:1 + Np, :].set(
        params["pos_embed"][1:] + params["patch_b"][None, :])
    slab = jnp.tile(slab1, (b_blk, 1))                      # [b_blk*Tpad, D]

    # key-padding mask (valid token columns < T), computed once on host
    kmask = jnp.where(jnp.arange(Tpad)[None, :] < T, 0.0, -1e30).astype(jnp.float32)
    return patches_flat, slab, kmask


def init_params(key, cfg):
    D, C, p, L, Dh = cfg["dim"], cfg["chans"], cfg["patch"], cfg["depth"], cfg["mlp"]
    Np = (cfg["img"] // p) ** 2
    ki = iter(jax.random.split(key, 8))
    rnd = lambda shape: 0.02 * jax.random.normal(next(ki), shape, jnp.float32)
    ones = lambda shape: jnp.ones(shape, jnp.float32)
    zeros = lambda shape: jnp.zeros(shape, jnp.float32)
    return {
        "patch_w": rnd((C * p * p, D)),
        "patch_b": zeros((D,)),
        "cls_token": rnd((1, D)),
        "pos_embed": rnd((Np + 1, D)),
        "norm_w": ones((1, D)),
        "norm_b": zeros((1, D)),
        # per-layer weights stacked along a leading depth axis
        "ln1_w": ones((L, 1, D)), "ln1_b": zeros((L, 1, D)),
        "qkv_w": rnd((L, D, 3 * D)), "qkv_b": zeros((L, 1, 3 * D)),
        "proj_w": rnd((L, D, D)), "proj_b": zeros((L, 1, D)),
        "ln2_w": ones((L, 1, D)), "ln2_b": zeros((L, 1, D)),
        "mlp_w1": rnd((L, D, Dh)), "mlp_b1": zeros((L, 1, Dh)),
        "mlp_w2": rnd((L, Dh, D)), "mlp_b2": zeros((L, 1, D)),
    }


def image_encoder_forward(img, params, cfg):
    B, C, H, W = img.shape
    p, D, heads, L, Dh = cfg["patch"], cfg["dim"], cfg["heads"], cfg["depth"], cfg["mlp"]
    head_dim = D // heads
    Np = (H // p) * (W // p)
    T = Np + 1
    Tpad = ((T + 7) // 8) * 8
    K = C * p * p

    # batch-block size: target M = b_blk*Tpad ≈ 256 MXU rows per matmul
    b_blk = max(1, min(B, 256 // Tpad))
    n_bblk = -(-B // b_blk)
    B_pad = n_bblk * b_blk
    M = b_blk * Tpad

    patches_flat, slab, kmask = _prepare_inputs(
        img, params, p=p, D=D, Np=Np, T=T, Tpad=Tpad, K=K, B_pad=B_pad, b_blk=b_blk)
    bf16 = lambda a: a.astype(jnp.bfloat16)

    # ---- prologue: patch-embed + cls/pos slab (not held resident later) ----
    x0 = pl.pallas_call(
        _patch_embed_kernel,
        out_shape=jax.ShapeDtypeStruct((B_pad * Tpad, D), jnp.float32),
        grid=(n_bblk,),
        in_specs=[
            pl.BlockSpec((M, K), lambda b: (b, 0)),          # patches
            pl.BlockSpec((M, D), lambda b: (0, 0)),          # cls/pos/bias slab
            pl.BlockSpec((K, D), lambda b: (0, 0)),          # patch_w
        ],
        out_specs=pl.BlockSpec((M, D), lambda b: (b, 0)),
        compiler_params=pltpu.CompilerParams(
            dimension_semantics=("parallel",)),
    )(patches_flat, slab, bf16(params["patch_w"]))

    # ---- main: depth-streamed transformer blocks + final CLS LayerNorm ----
    layer_spec = lambda *dims: pl.BlockSpec((None,) + dims, lambda b, l: (l, 0, 0))
    shared_spec = lambda *dims: pl.BlockSpec(dims, lambda b, l: (0,) * len(dims))

    out = pl.pallas_call(
        functools.partial(_vit_layers_kernel, num_heads=heads, head_dim=head_dim,
                          b_blk=b_blk, t_pad=Tpad),
        out_shape=jax.ShapeDtypeStruct((n_bblk, b_blk, D), jnp.float32),
        grid=(n_bblk, L),
        in_specs=[
            pl.BlockSpec((M, D), lambda b, l: (b, 0)),       # x0 (read at layer 0)
            pl.BlockSpec((1, Tpad), lambda b, l: (0, 0)),    # key-padding mask
            layer_spec(1, D), layer_spec(1, D),              # ln1 w,b
            layer_spec(D, 3 * D), layer_spec(1, 3 * D),      # qkv w,b
            layer_spec(D, D), layer_spec(1, D),              # proj w,b
            layer_spec(1, D), layer_spec(1, D),              # ln2 w,b
            layer_spec(D, Dh), layer_spec(1, Dh),            # mlp1 w,b
            layer_spec(Dh, D), layer_spec(1, D),             # mlp2 w,b
            shared_spec(1, D), shared_spec(1, D),            # final norm w,b
        ],
        out_specs=pl.BlockSpec((None, b_blk, D), lambda b, l: (b, 0, 0)),
        scratch_shapes=[
            pltpu.VMEM((M, D), jnp.float32),                 # resident activation
            pltpu.VMEM((M, D), jnp.float32),                 # per-head ctx staging
        ],
        compiler_params=pltpu.CompilerParams(
            # TODO(synk): on v7x use pltpu.CORE_PARALLEL on the batch-block axis
            # (2 TensorCores); kept "parallel" for cross-generation portability.
            dimension_semantics=("parallel", "arbitrary"),
            # 48 MiB is safe on every generation (v7x physical VMEM = 64 MiB).
            # TODO(synk): raise to ~96 MiB on v5e/v6e for real ViT-B weight stacks.
            vmem_limit_bytes=48 * 1024 * 1024,
        ),
    )(
        x0, kmask,
        params["ln1_w"], params["ln1_b"],
        bf16(params["qkv_w"]), params["qkv_b"],
        bf16(params["proj_w"]), params["proj_b"],
        params["ln2_w"], params["ln2_b"],
        bf16(params["mlp_w1"]), params["mlp_b1"],
        bf16(params["mlp_w2"]), params["mlp_b2"],
        params["norm_w"], params["norm_b"],
    )
    return out.reshape(B_pad, D)[:B]


if __name__ == "__main__":
    # mini ViT config (same forward structure as vit_base_patch16_224),
    # lane/sublane friendly: D=128, Dh=512, K=768, tokens 17 -> pad 24,
    # batch block 2 -> M=48 MXU rows per step on this demo.
    cfg = dict(img=64, patch=16, chans=3, dim=128, heads=4, depth=2, mlp=512)

    key = jax.random.PRNGKey(0)
    k_img, k_param = jax.random.split(key)
    img = jax.random.normal(k_img, (2, cfg["chans"], cfg["img"], cfg["img"]),
                            jnp.float32)
    params = init_params(k_param, cfg)

    fwd = jax.jit(lambda im, pr: image_encoder_forward(im, pr, cfg))
    out = jax.block_until_ready(fwd(img, params))

    assert out.shape == (2, cfg["dim"]) and out.dtype == jnp.float32
    assert bool(jnp.all(jnp.isfinite(out)))
    print("KERNEL_OK")
</pallas_src>

<mosaic_0001>
module attributes {stable_mosaic.version = 11 : i64} {
  func.func @_patch_embed_kernel(%arg0: i32, %arg1: memref<48x768xbf16, #tpu.memory_space<vmem>>, %arg2: memref<48x128xf32, #tpu.memory_space<vmem>>, %arg3: memref<768x128xbf16, #tpu.memory_space<vmem>>, %arg4: memref<48x128xf32, #tpu.memory_space<vmem>>) attributes {dimension_semantics = [#tpu.dimension_semantics<parallel>], iteration_bounds = array<i64: 1>, scalar_prefetch = 0 : i64, scratch_operands = 0 : i64, tpu.core_type = #tpu.core_type<tc>, window_params = [{transform_indices = @transform_0, window_bounds = array<i64: 48, 768>}, {pipeline_mode = #tpu.pipeline_mode<synchronous>, transform_indices = @transform_1, window_bounds = array<i64: 48, 128>}, {pipeline_mode = #tpu.pipeline_mode<synchronous>, transform_indices = @transform_2, window_bounds = array<i64: 768, 128>}, {transform_indices = @transform_3, window_bounds = array<i64: 48, 128>}]} {
    %c0 = arith.constant 0 : index
    %c0_0 = arith.constant 0 : index
    %0 = vector.load %arg1[%c0, %c0_0] : memref<48x768xbf16, #tpu.memory_space<vmem>>, vector<48x768xbf16>
    %c0_1 = arith.constant 0 : index
    %c0_2 = arith.constant 0 : index
    %1 = vector.load %arg3[%c0_1, %c0_2] : memref<768x128xbf16, #tpu.memory_space<vmem>>, vector<768x128xbf16>
    %cst = arith.constant dense<0.000000e+00> : vector<48x128xf32>
    %2 = tpu.matmul %0, %1, %cst {dimension_numbers = #tpu.dot_dimension_numbers<[1], [0], [0], [1], [0, 0, 1, 1], [], []>} : vector<48x768xbf16>, vector<768x128xbf16>, vector<48x128xf32> -> vector<48x128xf32>
    %c0_3 = arith.constant 0 : index
    %c0_4 = arith.constant 0 : index
    %3 = vector.load %arg2[%c0_3, %c0_4] : memref<48x128xf32, #tpu.memory_space<vmem>>, vector<48x128xf32>
    %4 = arith.addf %2, %3 : vector<48x128xf32>
    %c0_5 = arith.constant 0 : index
    %c0_6 = arith.constant 0 : index
    %5 = vector.load %arg4[%c0_5, %c0_6] : memref<48x128xf32, #tpu.memory_space<vmem>>, vector<48x128xf32>
    tpu.vector_store %arg4[%c0_5, %c0_6], %4 {strides = array<i32>} : memref<48x128xf32, #tpu.memory_space<vmem>>, vector<48x128xf32>,
    return
  }
  func.func @transform_0(%arg0: i32) -> (i32, i32) {
    %c0_i32 = arith.constant 0 : i32
    %c0_i32_0 = arith.constant 0 : i32
    return %arg0, %c0_i32 : i32, i32
  }
  func.func @transform_1(%arg0: i32) -> (i32, i32) {
    %c0_i32 = arith.constant 0 : i32
    %c0_i32_0 = arith.constant 0 : i32
    %c0_i32_1 = arith.constant 0 : i32
    return %c0_i32, %c0_i32_0 : i32, i32
  }
  func.func @transform_2(%arg0: i32) -> (i32, i32) {
    %c0_i32 = arith.constant 0 : i32
    %c0_i32_0 = arith.constant 0 : i32
    %c0_i32_1 = arith.constant 0 : i32
    return %c0_i32, %c0_i32_0 : i32, i32
  }
  func.func @transform_3(%arg0: i32) -> (i32, i32) {
    %c0_i32 = arith.constant 0 : i32
    %c0_i32_0 = arith.constant 0 : i32
    return %arg0, %c0_i32 : i32, i32
  }
}

module attributes {stable_mosaic.version = 11 : i64} {
  func.func @_vit_layers_kernel(%arg0: i32, %arg1: i32, %arg2: memref<48x128xf32, #tpu.memory_space<vmem>>, %arg3: memref<1x24xf32, #tpu.memory_space<vmem>>, %arg4: memref<1x1x128xf32, #tpu.memory_space<vmem>>, %arg5: memref<1x1x128xf32, #tpu.memory_space<vmem>>, %arg6: memref<1x128x384xbf16, #tpu.memory_space<vmem>>, %arg7: memref<1x1x384xf32, #tpu.memory_space<vmem>>, %arg8: memref<1x128x128xbf16, #tpu.memory_space<vmem>>, %arg9: memref<1x1x128xf32, #tpu.memory_space<vmem>>, %arg10: memref<1x1x128xf32, #tpu.memory_space<vmem>>, %arg11: memref<1x1x128xf32, #tpu.memory_space<vmem>>, %arg12: memref<1x128x512xbf16, #tpu.memory_space<vmem>>, %arg13: memref<1x1x512xf32, #tpu.memory_space<vmem>>, %arg14: memref<1x512x128xbf16, #tpu.memory_space<vmem>>, %arg15: memref<1x1x128xf32, #tpu.memory_space<vmem>>, %arg16: memref<1x128xf32, #tpu.memory_space<vmem>>, %arg17: memref<1x128xf32, #tpu.memory_space<vmem>>, %arg18: memref<1x2x128xf32, #tpu.memory_space<vmem>>, %arg19: memref<48x128xf32, #tpu.memory_space<vmem>>, %arg20: memref<48x128xf32, #tpu.memory_space<vmem>>) attributes {dimension_semantics = [#tpu.dimension_semantics<parallel>, #tpu.dimension_semantics<arbitrary>], iteration_bounds = array<i64: 1, 2>, scalar_prefetch = 0 : i64, scratch_operands = 2 : i64, tpu.core_type = #tpu.core_type<tc>, window_params = [{transform_indices = @transform_0, window_bounds = array<i64: 48, 128>}, {pipeline_mode = #tpu.pipeline_mode<synchronous>, transform_indices = @transform_1, window_bounds = array<i64: 1, 24>}, {transform_indices = @transform_2, window_bounds = array<i64: 1, 1, 128>}, {transform_indices = @transform_3, window_bounds = array<i64: 1, 1, 128>}, {transform_indices = @transform_4, window_bounds = array<i64: 1, 128, 384>}, {transform_indices = @transform_5, window_bounds = array<i64: 1, 1, 384>}, {transform_indices = @transform_6, window_bounds = array<i64: 1, 128, 128>}, {transform_indices = @transform_7, window_bounds = array<i64: 1, 1, 128>}, {transform_indices = @transform_8, window_bounds = array<i64: 1, 1, 128>}, {transform_indices = @transform_9, window_bounds = array<i64: 1, 1, 128>}, {transform_indices = @transform_10, window_bounds = array<i64: 1, 128, 512>}, {transform_indices = @transform_11, window_bounds = array<i64: 1, 1, 512>}, {transform_indices = @transform_12, window_bounds = array<i64: 1, 512, 128>}, {transform_indices = @transform_13, window_bounds = array<i64: 1, 1, 128>}, {pipeline_mode = #tpu.pipeline_mode<synchronous>, transform_indices = @transform_14, window_bounds = array<i64: 1, 128>}, {pipeline_mode = #tpu.pipeline_mode<synchronous>, transform_indices = @transform_15, window_bounds = array<i64: 1, 128>}, {transform_indices = @transform_16, window_bounds = array<i64: 1, 2, 128>}]} {
    %c0_i32 = arith.constant 0 : i32
    %0 = arith.cmpi eq, %arg1, %c0_i32 : i32
    %1 = arith.extui %0 : i1 to i32
    %c0_i32_0 = arith.constant 0 : i32
    %2 = arith.cmpi ne, %1, %c0_i32_0 : i32
    scf.if %2 {
      %c0_114 = arith.constant 0 : index
      %c0_115 = arith.constant 0 : index
      %278 = vector.load %arg2[%c0_114, %c0_115] : memref<48x128xf32, #tpu.memory_space<vmem>>, vector<48x128xf32>
      %c0_116 = arith.constant 0 : index
      %c0_117 = arith.constant 0 : index
      %279 = vector.load %arg19[%c0_116, %c0_117] : memref<48x128xf32, #tpu.memory_space<vmem>>, vector<48x128xf32>
      tpu.vector_store %arg19[%c0_116, %c0_117], %278 {strides = array<i32>} : memref<48x128xf32, #tpu.memory_space<vmem>>, vector<48x128xf32>,
    } else {
    }
    %c0 = arith.constant 0 : index
    %c0_1 = arith.constant 0 : index
    %3 = vector.load %arg19[%c0, %c0_1] : memref<48x128xf32, #tpu.memory_space<vmem>>, vector<48x128xf32>
    %c0_2 = arith.constant 0 : index
    %c0_3 = arith.constant 0 : index
    %4 = vector.load %arg3[%c0_2, %c0_3] : memref<1x24xf32, #tpu.memory_space<vmem>>, vector<1x24xf32>
    %c0_4 = arith.constant 0 : index
    %c0_5 = arith.constant 0 : index
    %c0_6 = arith.constant 0 : index
    %5 = vector.load %arg4[%c0_4, %c0_5, %c0_6] : memref<1x1x128xf32, #tpu.memory_space<vmem>>, vector<1x1x128xf32>
    %6 = vector.shape_cast %5 : vector<1x1x128xf32> to vector<1x128xf32>
    %c0_7 = arith.constant 0 : index
    %c0_8 = arith.constant 0 : index
    %c0_9 = arith.constant 0 : index
    %7 = vector.load %arg5[%c0_7, %c0_8, %c0_9] : memref<1x1x128xf32, #tpu.memory_space<vmem>>, vector<1x1x128xf32>
    %8 = vector.shape_cast %7 : vector<1x1x128xf32> to vector<1x128xf32>
    %cst = arith.constant dense<0.000000e+00> : vector<48xf32>
    %9 = vector.multi_reduction <add>, %3, %cst [1] : vector<48x128xf32> to vector<48xf32>
    %10 = vector.shape_cast %9 : vector<48xf32> to vector<48x1xf32>
    %cst_10 = arith.constant 1.280000e+02 : f32
    %11 = vector.broadcast %cst_10 : f32 to vector<48x1xf32>
    %12 = arith.divf %10, %11 : vector<48x1xf32>
    %13 = vector.broadcast %12 : vector<48x1xf32> to vector<48x128xf32>
    %14 = arith.subf %3, %13 : vector<48x128xf32>
    %15 = arith.mulf %14, %14 : vector<48x128xf32>
    %cst_11 = arith.constant dense<0.000000e+00> : vector<48xf32>
    %16 = vector.multi_reduction <add>, %15, %cst_11 [1] : vector<48x128xf32> to vector<48xf32>
    %17 = vector.shape_cast %16 : vector<48xf32> to vector<48x1xf32>
    %cst_12 = arith.constant 1.280000e+02 : f32
    %18 = vector.broadcast %cst_12 : f32 to vector<48x1xf32>
    %19 = arith.divf %17, %18 : vector<48x1xf32>
    %20 = vector.broadcast %12 : vector<48x1xf32> to vector<48x128xf32>
    %21 = arith.subf %3, %20 : vector<48x128xf32>
    %cst_13 = arith.constant 9.99999997E-7 : f32
    %22 = vector.broadcast %cst_13 : f32 to vector<48x1xf32>
    %23 = arith.addf %19, %22 : vector<48x1xf32>
    %24 = math.rsqrt %23 : vector<48x1xf32>
    %25 = vector.broadcast %24 : vector<48x1xf32> to vector<48x128xf32>
    %26 = arith.mulf %21, %25 : vector<48x128xf32>
    %27 = vector.broadcast %6 : vector<1x128xf32> to vector<48x128xf32>
    %28 = arith.mulf %26, %27 : vector<48x128xf32>
    %29 = vector.broadcast %8 : vector<1x128xf32> to vector<48x128xf32>
    %30 = arith.addf %28, %29 : vector<48x128xf32>
    %31 = arith.truncf %30 : vector<48x128xf32> to vector<48x128xbf16>
    %c0_14 = arith.constant 0 : index
    %c0_15 = arith.constant 0 : index
    %c0_16 = arith.constant 0 : index
    %32 = vector.load %arg6[%c0_14, %c0_15, %c0_16] : memref<1x128x384xbf16, #tpu.memory_space<vmem>>, vector<1x128x384xbf16>
    %33 = vector.shape_cast %32 : vector<1x128x384xbf16> to vector<128x384xbf16>
    %cst_17 = arith.constant dense<0.000000e+00> : vector<48x384xf32>
    %34 = tpu.matmul %31, %33, %cst_17 {dimension_numbers = #tpu.dot_dimension_numbers<[1], [0], [0], [1], [0, 0, 1, 1], [], []>} : vector<48x128xbf16>, vector<128x384xbf16>, vector<48x384xf32> -> vector<48x384xf32>
    %c0_18 = arith.constant 0 : index
    %c0_19 = arith.constant 0 : index
    %c0_20 = arith.constant 0 : index
    %35 = vector.load %arg7[%c0_18, %c0_19, %c0_20] : memref<1x1x384xf32, #tpu.memory_space<vmem>>, vector<1x1x384xf32>
    %36 = vector.shape_cast %35 : vector<1x1x384xf32> to vector<1x384xf32>
    %37 = vector.broadcast %36 : vector<1x384xf32> to vector<48x384xf32>
    %38 = arith.addf %34, %37 : vector<48x384xf32>
    %39 = arith.truncf %38 : vector<48x384xf32> to vector<48x384xbf16>
    %40 = vector.extract_strided_slice %39 {offsets = [0, 0], sizes = [24, 32], strides = [1, 1]} : vector<48x384xbf16> to vector<24x32xbf16>
    %41 = vector.extract_strided_slice %39 {offsets = [0, 128], sizes = [24, 32], strides = [1, 1]} : vector<48x384xbf16> to vector<24x32xbf16>
    %42 = vector.extract_strided_slice %39 {offsets = [0, 256], sizes = [24, 32], strides = [1, 1]} : vector<48x384xbf16> to vector<24x32xbf16>
    %cst_21 = arith.constant dense<0.000000e+00> : vector<24x24xf32>
    %43 = tpu.matmul %40, %41, %cst_21 {dimension_numbers = #tpu.dot_dimension_numbers<[1], [1], [0], [0], [0, 0, 1, 0], [], []>} : vector<24x32xbf16>, vector<24x32xbf16>, vector<24x24xf32> -> vector<24x24xf32>
    %cst_22 = arith.constant 0.176776692 : f32
    %44 = vector.broadcast %cst_22 : f32 to vector<24x24xf32>
    %45 = arith.mulf %43, %44 : vector<24x24xf32>
    %46 = vector.broadcast %4 : vector<1x24xf32> to vector<24x24xf32>
    %47 = arith.addf %45, %46 : vector<24x24xf32>
    %cst_23 = arith.constant dense<0xFF800000> : vector<24xf32>
    %48 = vector.multi_reduction <maximumf>, %47, %cst_23 [1] : vector<24x24xf32> to vector<24xf32>
    %49 = vector.shape_cast %48 : vector<24xf32> to vector<24x1xf32>
    %50 = vector.broadcast %49 : vector<24x1xf32> to vector<24x24xf32>
    %51 = arith.subf %47, %50 : vector<24x24xf32>
    %52 = math.exp %51 : vector<24x24xf32>
    %cst_24 = arith.constant dense<0.000000e+00> : vector<24xf32>
    %53 = vector.multi_reduction <add>, %52, %cst_24 [1] : vector<24x24xf32> to vector<24xf32>
    %54 = vector.shape_cast %53 : vector<24xf32> to vector<24x1xf32>
    %55 = tpu.reciprocal %54 {approx = true} : vector<24x1xf32> -> vector<24x1xf32>
    %56 = vector.broadcast %55 : vector<24x1xf32> to vector<24x24xf32>
    %57 = arith.mulf %52, %56 : vector<24x24xf32>
    %58 = arith.truncf %57 : vector<24x24xf32> to vector<24x24xbf16>
    %cst_25 = arith.constant dense<0.000000e+00> : vector<24x32xf32>
    %59 = tpu.matmul %58, %42, %cst_25 {dimension_numbers = #tpu.dot_dimension_numbers<[1], [0], [0], [1], [0, 0, 1, 1], [], []>} : vector<24x24xbf16>, vector<24x32xbf16>, vector<24x32xf32> -> vector<24x32xf32>
    %c0_26 = arith.constant 0 : index
    %c0_27 = arith.constant 0 : index
    %60 = vector.load %arg20[%c0_26, %c0_27] : memref<48x128xf32, #tpu.memory_space<vmem>>, vector<24x32xf32>
    tpu.vector_store %arg20[%c0_26, %c0_27], %59 {strides = array<i32>} : memref<48x128xf32, #tpu.memory_space<vmem>>, vector<24x32xf32>,
    %61 = vector.extract_strided_slice %39 {offsets = [0, 32], sizes = [24, 32], strides = [1, 1]} : vector<48x384xbf16> to vector<24x32xbf16>
    %62 = vector.extract_strided_slice %39 {offsets = [0, 160], sizes = [24, 32], strides = [1, 1]} : vector<48x384xbf16> to vector<24x32xbf16>
    %63 = vector.extract_strided_slice %39 {offsets = [0, 288], sizes = [24, 32], strides = [1, 1]} : vector<48x384xbf16> to vector<24x32xbf16>
    %cst_28 = arith.constant dense<0.000000e+00> : vector<24x24xf32>
    %64 = tpu.matmul %61, %62, %cst_28 {dimension_numbers = #tpu.dot_dimension_numbers<[1], [1], [0], [0], [0, 0, 1, 0], [], []>} : vector<24x32xbf16>, vector<24x32xbf16>, vector<24x24xf32> -> vector<24x24xf32>
    %cst_29 = arith.constant 0.176776692 : f32
    %65 = vector.broadcast %cst_29 : f32 to vector<24x24xf32>
    %66 = arith.mulf %64, %65 : vector<24x24xf32>
    %67 = vector.broadcast %4 : vector<1x24xf32> to vector<24x24xf32>
    %68 = arith.addf %66, %67 : vector<24x24xf32>
    %cst_30 = arith.constant dense<0xFF800000> : vector<24xf32>
    %69 = vector.multi_reduction <maximumf>, %68, %cst_30 [1] : vector<24x24xf32> to vector<24xf32>
    %70 = vector.shape_cast %69 : vector<24xf32> to vector<24x1xf32>
    %71 = vector.broadcast %70 : vector<24x1xf32> to vector<24x24xf32>
    %72 = arith.subf %68, %71 : vector<24x24xf32>
    %73 = math.exp %72 : vector<24x24xf32>
    %cst_31 = arith.constant dense<0.000000e+00> : vector<24xf32>
    %74 = vector.multi_reduction <add>, %73, %cst_31 [1] : vector<24x24xf32> to vector<24xf32>
    %75 = vector.shape_cast %74 : vector<24xf32> to vector<24x1xf32>
    %76 = tpu.reciprocal %75 {approx = true} : vector<24x1xf32> -> vector<24x1xf32>
    %77 = vector.broadcast %76 : vector<24x1xf32> to vector<24x24xf32>
    %78 = arith.mulf %73, %77 : vector<24x24xf32>
    %79 = arith.truncf %78 : vector<24x24xf32> to vector<24x24xbf16>
    %cst_32 = arith.constant dense<0.000000e+00> : vector<24x32xf32>
    %80 = tpu.matmul %79, %63, %cst_32 {dimension_numbers = #tpu.dot_dimension_numbers<[1], [0], [0], [1], [0, 0, 1, 1], [], []>} : vector<24x24xbf16>, vector<24x32xbf16>, vector<24x32xf32> -> vector<24x32xf32>
    %c0_33 = arith.constant 0 : index
    %c32 = arith.constant 32 : index
    %81 = vector.load %arg20[%c0_33, %c32] : memref<48x128xf32, #tpu.memory_space<vmem>>, vector<24x32xf32>
    tpu.vector_store %arg20[%c0_33, %c32], %80 {strides = array<i32>} : memref<48x128xf32, #tpu.memory_space<vmem>>, vector<24x32xf32>,
    %82 = vector.extract_strided_slice %39 {offsets = [0, 64], sizes = [24, 32], strides = [1, 1]} : vector<48x384xbf16> to vector<24x32xbf16>
    %83 = vector.extract_strided_slice %39 {offsets = [0, 192], sizes = [24, 32], strides = [1, 1]} : vector<48x384xbf16> to vector<24x32xbf16>
    %84 = vector.extract_strided_slice %39 {offsets = [0, 320], sizes = [24, 32], strides = [1, 1]} : vector<48x384xbf16> to vector<24x32xbf16>
    %cst_34 = arith.constant dense<0.000000e+00> : vector<24x24xf32>
    %85 = tpu.matmul %82, %83, %cst_34 {dimension_numbers = #tpu.dot_dimension_numbers<[1], [1], [0], [0], [0, 0, 1, 0], [], []>} : vector<24x32xbf16>, vector<24x32xbf16>, vector<24x24xf32> -> vector<24x24xf32>
    %cst_35 = arith.constant 0.176776692 : f32
    %86 = vector.broadcast %cst_35 : f32 to vector<24x24xf32>
    %87 = arith.mulf %85, %86 : vector<24x24xf32>
    %88 = vector.broadcast %4 : vector<1x24xf32> to vector<24x24xf32>
    %89 = arith.addf %87, %88 : vector<24x24xf32>
    %cst_36 = arith.constant dense<0xFF800000> : vector<24xf32>
    %90 = vector.multi_reduction <maximumf>, %89, %cst_36 [1] : vector<24x24xf32> to vector<24xf32>
    %91 = vector.shape_cast %90 : vector<24xf32> to vector<24x1xf32>
    %92 = vector.broadcast %91 : vector<24x1xf32> to vector<24x24xf32>
    %93 = arith.subf %89, %92 : vector<24x24xf32>
    %94 = math.exp %93 : vector<24x24xf32>
    %cst_37 = arith.constant dense<0.000000e+00> : vector<24xf32>
    %95 = vector.multi_reduction <add>, %94, %cst_37 [1] : vector<24x24xf32> to vector<24xf32>
    %96 = vector.shape_cast %95 : vector<24xf32> to vector<24x1xf32>
    %97 = tpu.reciprocal %96 {approx = true} : vector<24x1xf32> -> vector<24x1xf32>
    %98 = vector.broadcast %97 : vector<24x1xf32> to vector<24x24xf32>
    %99 = arith.mulf %94, %98 : vector<24x24xf32>
    %100 = arith.truncf %99 : vector<24x24xf32> to vector<24x24xbf16>
    %cst_38 = arith.constant dense<0.000000e+00> : vector<24x32xf32>
    %101 = tpu.matmul %100, %84, %cst_38 {dimension_numbers = #tpu.dot_dimension_numbers<[1], [0], [0], [1], [0, 0, 1, 1], [], []>} : vector<24x24xbf16>, vector<24x32xbf16>, vector<24x32xf32> -> vector<24x32xf32>
    %c0_39 = arith.constant 0 : index
    %c64 = arith.constant 64 : index
    %102 = vector.load %arg20[%c0_39, %c64] : memref<48x128xf32, #tpu.memory_space<vmem>>, vector<24x32xf32>
    tpu.vector_store %arg20[%c0_39, %c64], %101 {strides = array<i32>} : memref<48x128xf32, #tpu.memory_space<vmem>>, vector<24x32xf32>,
    %103 = vector.extract_strided_slice %39 {offsets = [0, 96], sizes = [24, 32], strides = [1, 1]} : vector<48x384xbf16> to vector<24x32xbf16>
    %104 = vector.extract_strided_slice %39 {offsets = [0, 224], sizes = [24, 32], strides = [1, 1]} : vector<48x384xbf16> to vector<24x32xbf16>
    %105 = vector.extract_strided_slice %39 {offsets = [0, 352], sizes = [24, 32], strides = [1, 1]} : vector<48x384xbf16> to vector<24x32xbf16>
    %cst_40 = arith.constant dense<0.000000e+00> : vector<24x24xf32>
    %106 = tpu.matmul %103, %104, %cst_40 {dimension_numbers = #tpu.dot_dimension_numbers<[1], [1], [0], [0], [0, 0, 1, 0], [], []>} : vector<24x32xbf16>, vector<24x32xbf16>, vector<24x24xf32> -> vector<24x24xf32>
    %cst_41 = arith.constant 0.176776692 : f32
    %107 = vector.broadcast %cst_41 : f32 to vector<24x24xf32>
    %108 = arith.mulf %106, %107 : vector<24x24xf32>
    %109 = vector.broadcast %4 : vector<1x24xf32> to vector<24x24xf32>
    %110 = arith.addf %108, %109 : vector<24x24xf32>
    %cst_42 = arith.constant dense<0xFF800000> : vector<24xf32>
    %111 = vector.multi_reduction <maximumf>, %110, %cst_42 [1] : vector<24x24xf32> to vector<24xf32>
    %112 = vector.shape_cast %111 : vector<24xf32> to vector<24x1xf32>
    %113 = vector.broadcast %112 : vector<24x1xf32> to vector<24x24xf32>
    %114 = arith.subf %110, %113 : vector<24x24xf32>
    %115 = math.exp %114 : vector<24x24xf32>
    %cst_43 = arith.constant dense<0.000000e+00> : vector<24xf32>
    %116 = vector.multi_reduction <add>, %115, %cst_43 [1] : vector<24x24xf32> to vector<24xf32>
    %117 = vector.shape_cast %116 : vector<24xf32> to vector<24x1xf32>
    %118 = tpu.reciprocal %117 {approx = true} : vector<24x1xf32> -> vector<24x1xf32>
    %119 = vector.broadcast %118 : vector<24x1xf32> to vector<24x24xf32>
    %120 = arith.mulf %115, %119 : vector<24x24xf32>
    %121 = arith.truncf %120 : vector<24x24xf32> to vector<24x24xbf16>
    %cst_44 = arith.constant dense<0.000000e+00> : vector<24x32xf32>
    %122 = tpu.matmul %121, %105, %cst_44 {dimension_numbers = #tpu.dot_dimension_numbers<[1], [0], [0], [1], [0, 0, 1, 1], [], []>} : vector<24x24xbf16>, vector<24x32xbf16>, vector<24x32xf32> -> vector<24x32xf32>
    %c0_45 = arith.constant 0 : index
    %c96 = arith.constant 96 : index
    %123 = vector.load %arg20[%c0_45, %c96] : memref<48x128xf32, #tpu.memory_space<vmem>>, vector<24x32xf32>
    tpu.vector_store %arg20[%c0_45, %c96], %122 {strides = array<i32>} : memref<48x128xf32, #tpu.memory_space<vmem>>, vector<24x32xf32>,
    %124 = vector.extract_strided_slice %39 {offsets = [24, 0], sizes = [24, 32], strides = [1, 1]} : vector<48x384xbf16> to vector<24x32xbf16>
    %125 = vector.extract_strided_slice %39 {offsets = [24, 128], sizes = [24, 32], strides = [1, 1]} : vector<48x384xbf16> to vector<24x32xbf16>
    %126 = vector.extract_strided_slice %39 {offsets = [24, 256], sizes = [24, 32], strides = [1, 1]} : vector<48x384xbf16> to vector<24x32xbf16>
    %cst_46 = arith.constant dense<0.000000e+00> : vector<24x24xf32>
    %127 = tpu.matmul %124, %125, %cst_46 {dimension_numbers = #tpu.dot_dimension_numbers<[1], [1], [0], [0], [0, 0, 1, 0], [], []>} : vector<24x32xbf16>, vector<24x32xbf16>, vector<24x24xf32> -> vector<24x24xf32>
    %cst_47 = arith.constant 0.176776692 : f32
    %128 = vector.broadcast %cst_47 : f32 to vector<24x24xf32>
    %129 = arith.mulf %127, %128 : vector<24x24xf32>
    %130 = vector.broadcast %4 : vector<1x24xf32> to vector<24x24xf32>
    %131 = arith.addf %129, %130 : vector<24x24xf32>
    %cst_48 = arith.constant dense<0xFF800000> : vector<24xf32>
    %132 = vector.multi_reduction <maximumf>, %131, %cst_48 [1] : vector<24x24xf32> to vector<24xf32>
    %133 = vector.shape_cast %132 : vector<24xf32> to vector<24x1xf32>
    %134 = vector.broadcast %133 : vector<24x1xf32> to vector<24x24xf32>
    %135 = arith.subf %131, %134 : vector<24x24xf32>
    %136 = math.exp %135 : vector<24x24xf32>
    %cst_49 = arith.constant dense<0.000000e+00> : vector<24xf32>
    %137 = vector.multi_reduction <add>, %136, %cst_49 [1] : vector<24x24xf32> to vector<24xf32>
    %138 = vector.shape_cast %137 : vector<24xf32> to vector<24x1xf32>
    %139 = tpu.reciprocal %138 {approx = true} : vector<24x1xf32> -> vector<24x1xf32>
    %140 = vector.broadcast %139 : vector<24x1xf32> to vector<24x24xf32>
    %141 = arith.mulf %136, %140 : vector<24x24xf32>
    %142 = arith.truncf %141 : vector<24x24xf32> to vector<24x24xbf16>
    %cst_50 = arith.constant dense<0.000000e+00> : vector<24x32xf32>
    %143 = tpu.matmul %142, %126, %cst_50 {dimension_numbers = #tpu.dot_dimension_numbers<[1], [0], [0], [1], [0, 0, 1, 1], [], []>} : vector<24x24xbf16>, vector<24x32xbf16>, vector<24x32xf32> -> vector<24x32xf32>
    %c24 = arith.constant 24 : index
    %c0_51 = arith.constant 0 : index
    %144 = vector.load %arg20[%c24, %c0_51] : memref<48x128xf32, #tpu.memory_space<vmem>>, vector<24x32xf32>
    tpu.vector_store %arg20[%c24, %c0_51], %143 {strides = array<i32>} : memref<48x128xf32, #tpu.memory_space<vmem>>, vector<24x32xf32>,
    %145 = vector.extract_strided_slice %39 {offsets = [24, 32], sizes = [24, 32], strides = [1, 1]} : vector<48x384xbf16> to vector<24x32xbf16>
    %146 = vector.extract_strided_slice %39 {offsets = [24, 160], sizes = [24, 32], strides = [1, 1]} : vector<48x384xbf16> to vector<24x32xbf16>
    %147 = vector.extract_strided_slice %39 {offsets = [24, 288], sizes = [24, 32], strides = [1, 1]} : vector<48x384xbf16> to vector<24x32xbf16>
    %cst_52 = arith.constant dense<0.000000e+00> : vector<24x24xf32>
    %148 = tpu.matmul %145, %146, %cst_52 {dimension_numbers = #tpu.dot_dimension_numbers<[1], [1], [0], [0], [0, 0, 1, 0], [], []>} : vector<24x32xbf16>, vector<24x32xbf16>, vector<24x24xf32> -> vector<24x24xf32>
    %cst_53 = arith.constant 0.176776692 : f32
    %149 = vector.broadcast %cst_53 : f32 to vector<24x24xf32>
    %150 = arith.mulf %148, %149 : vector<24x24xf32>
    %151 = vector.broadcast %4 : vector<1x24xf32> to vector<24x24xf32>
    %152 = arith.addf %150, %151 : vector<24x24xf32>
    %cst_54 = arith.constant dense<0xFF800000> : vector<24xf32>
    %153 = vector.multi_reduction <maximumf>, %152, %cst_54 [1] : vector<24x24xf32> to vector<24xf32>
    %154 = vector.shape_cast %153 : vector<24xf32> to vector<24x1xf32>
    %155 = vector.broadcast %154 : vector<24x1xf32> to vector<24x24xf32>
    %156 = arith.subf %152, %155 : vector<24x24xf32>
    %157 = math.exp %156 : vector<24x24xf32>
    %cst_55 = arith.constant dense<0.000000e+00> : vector<24xf32>
    %158 = vector.multi_reduction <add>, %157, %cst_55 [1] : vector<24x24xf32> to vector<24xf32>
    %159 = vector.shape_cast %158 : vector<24xf32> to vector<24x1xf32>
    %160 = tpu.reciprocal %159 {approx = true} : vector<24x1xf32> -> vector<24x1xf32>
    %161 = vector.broadcast %160 : vector<24x1xf32> to vector<24x24xf32>
    %162 = arith.mulf %157, %161 : vector<24x24xf32>
    %163 = arith.truncf %162 : vector<24x24xf32> to vector<24x24xbf16>
    %cst_56 = arith.constant dense<0.000000e+00> : vector<24x32xf32>
    %164 = tpu.matmul %163, %147, %cst_56 {dimension_numbers = #tpu.dot_dimension_numbers<[1], [0], [0], [1], [0, 0, 1, 1], [], []>} : vector<24x24xbf16>, vector<24x32xbf16>, vector<24x32xf32> -> vector<24x32xf32>
    %c24_57 = arith.constant 24 : index
    %c32_58 = arith.constant 32 : index
    %165 = vector.load %arg20[%c24_57, %c32_58] : memref<48x128xf32, #tpu.memory_space<vmem>>, vector<24x32xf32>
    tpu.vector_store %arg20[%c24_57, %c32_58], %164 {strides = array<i32>} : memref<48x128xf32, #tpu.memory_space<vmem>>, vector<24x32xf32>,
    %166 = vector.extract_strided_slice %39 {offsets = [24, 64], sizes = [24, 32], strides = [1, 1]} : vector<48x384xbf16> to vector<24x32xbf16>
    %167 = vector.extract_strided_slice %39 {offsets = [24, 192], sizes = [24, 32], strides = [1, 1]} : vector<48x384xbf16> to vector<24x32xbf16>
    %168 = vector.extract_strided_slice %39 {offsets = [24, 320], sizes = [24, 32], strides = [1, 1]} : vector<48x384xbf16> to vector<24x32xbf16>
    %cst_59 = arith.constant dense<0.000000e+00> : vector<24x24xf32>
    %169 = tpu.matmul %166, %167, %cst_59 {dimension_numbers = #tpu.dot_dimension_numbers<[1], [1], [0], [0], [0, 0, 1, 0], [], []>} : vector<24x32xbf16>, vector<24x32xbf16>, vector<24x24xf32> -> vector<24x24xf32>
    %cst_60 = arith.constant 0.176776692 : f32
    %170 = vector.broadcast %cst_60 : f32 to vector<24x24xf32>
    %171 = arith.mulf %169, %170 : vector<24x24xf32>
    %172 = vector.broadcast %4 : vector<1x24xf32> to vector<24x24xf32>
    %173 = arith.addf %171, %172 : vector<24x24xf32>
    %cst_61 = arith.constant dense<0xFF800000> : vector<24xf32>
    %174 = vector.multi_reduction <maximumf>, %173, %cst_61 [1] : vector<24x24xf32> to vector<24xf32>
    %175 = vector.shape_cast %174 : vector<24xf32> to vector<24x1xf32>
    %176 = vector.broadcast %175 : vector<24x1xf32> to vector<24x24xf32>
    %177 = arith.subf %173, %176 : vector<24x24xf32>
    %178 = math.exp %177 : vector<24x24xf32>
    %cst_62 = arith.constant dense<0.000000e+00> : vector<24xf32>
    %179 = vector.multi_reduction <add>, %178, %cst_62 [1] : vector<24x24xf32> to vector<24xf32>
    %180 = vector.shape_cast %179 : vector<24xf32> to vector<24x1xf32>
    %181 = tpu.reciprocal %180 {approx = true} : vector<24x1xf32> -> vector<24x1xf32>
    %182 = vector.broadcast %181 : vector<24x1xf32> to vector<24x24xf32>
    %183 = arith.mulf %178, %182 : vector<24x24xf32>
    %184 = arith.truncf %183 : vector<24x24xf32> to vector<24x24xbf16>
    %cst_63 = arith.constant dense<0.000000e+00> : vector<24x32xf32>
    %185 = tpu.matmul %184, %168, %cst_63 {dimension_numbers = #tpu.dot_dimension_numbers<[1], [0], [0], [1], [0, 0, 1, 1], [], []>} : vector<24x24xbf16>, vector<24x32xbf16>, vector<24x32xf32> -> vector<24x32xf32>
    %c24_64 = arith.constant 24 : index
    %c64_65 = arith.constant 64 : index
    %186 = vector.load %arg20[%c24_64, %c64_65] : memref<48x128xf32, #tpu.memory_space<vmem>>, vector<24x32xf32>
    tpu.vector_store %arg20[%c24_64, %c64_65], %185 {strides = array<i32>} : memref<48x128xf32, #tpu.memory_space<vmem>>, vector<24x32xf32>,
    %187 = vector.extract_strided_slice %39 {offsets = [24, 96], sizes = [24, 32], strides = [1, 1]} : vector<48x384xbf16> to vector<24x32xbf16>
    %188 = vector.extract_strided_slice %39 {offsets = [24, 224], sizes = [24, 32], strides = [1, 1]} : vector<48x384xbf16> to vector<24x32xbf16>
    %189 = vector.extract_strided_slice %39 {offsets = [24, 352], sizes = [24, 32], strides = [1, 1]} : vector<48x384xbf16> to vector<24x32xbf16>
    %cst_66 = arith.constant dense<0.000000e+00> : vector<24x24xf32>
    %190 = tpu.matmul %187, %188, %cst_66 {dimension_numbers = #tpu.dot_dimension_numbers<[1], [1], [0], [0], [0, 0, 1, 0], [], []>} : vector<24x32xbf16>, vector<24x32xbf16>, vector<24x24xf32> -> vector<24x24xf32>
    %cst_67 = arith.constant 0.176776692 : f32
    %191 = vector.broadcast %cst_67 : f32 to vector<24x24xf32>
    %192 = arith.mulf %190, %191 : vector<24x24xf32>
    %193 = vector.broadcast %4 : vector<1x24xf32> to vector<24x24xf32>
    %194 = arith.addf %192, %193 : vector<24x24xf32>
    %cst_68 = arith.constant dense<0xFF800000> : vector<24xf32>
    %195 = vector.multi_reduction <maximumf>, %194, %cst_68 [1] : vector<24x24xf32> to vector<24xf32>
    %196 = vector.shape_cast %195 : vector<24xf32> to vector<24x1xf32>
    %197 = vector.broadcast %196 : vector<24x1xf32> to vector<24x24xf32>
    %198 = arith.subf %194, %197 : vector<24x24xf32>
    %199 = math.exp %198 : vector<24x24xf32>
    %cst_69 = arith.constant dense<0.000000e+00> : vector<24xf32>
    %200 = vector.multi_reduction <add>, %199, %cst_69 [1] : vector<24x24xf32> to vector<24xf32>
    %201 = vector.shape_cast %200 : vector<24xf32> to vector<24x1xf32>
    %202 = tpu.reciprocal %201 {approx = true} : vector<24x1xf32> -> vector<24x1xf32>
    %203 = vector.broadcast %202 : vector<24x1xf32> to vector<24x24xf32>
    %204 = arith.mulf %199, %203 : vector<24x24xf32>
    %205 = arith.truncf %204 : vector<24x24xf32> to vector<24x24xbf16>
    %cst_70 = arith.constant dense<0.000000e+00> : vector<24x32xf32>
    %206 = tpu.matmul %205, %189, %cst_70 {dimension_numbers = #tpu.dot_dimension_numbers<[1], [0], [0], [1], [0, 0, 1, 1], [], []>} : vector<24x24xbf16>, vector<24x32xbf16>, vector<24x32xf32> -> vector<24x32xf32>
    %c24_71 = arith.constant 24 : index
    %c96_72 = arith.constant 96 : index
    %207 = vector.load %arg20[%c24_71, %c96_72] : memref<48x128xf32, #tpu.memory_space<vmem>>, vector<24x32xf32>
    tpu.vector_store %arg20[%c24_71, %c96_72], %206 {strides = array<i32>} : memref<48x128xf32, #tpu.memory_space<vmem>>, vector<24x32xf32>,
    %c0_73 = arith.constant 0 : index
    %c0_74 = arith.constant 0 : index
    %208 = vector.load %arg20[%c0_73, %c0_74] : memref<48x128xf32, #tpu.memory_space<vmem>>, vector<48x128xf32>
    %209 = arith.truncf %208 : vector<48x128xf32> to vector<48x128xbf16>
    %c0_75 = arith.constant 0 : index
    %c0_76 = arith.constant 0 : index
    %c0_77 = arith.constant 0 : index
    %210 = vector.load %arg8[%c0_75, %c0_76, %c0_77] : memref<1x128x128xbf16, #tpu.memory_space<vmem>>, vector<1x128x128xbf16>
    %211 = vector.shape_cast %210 : vector<1x128x128xbf16> to vector<128x128xbf16>
    %cst_78 = arith.constant dense<0.000000e+00> : vector<48x128xf32>
    %212 = tpu.matmul %209, %211, %cst_78 {dimension_numbers = #tpu.dot_dimension_numbers<[1], [0], [0], [1], [0, 0, 1, 1], [], []>} : vector<48x128xbf16>, vector<128x128xbf16>, vector<48x128xf32> -> vector<48x128xf32>
    %c0_79 = arith.constant 0 : index
    %c0_80 = arith.constant 0 : index
    %c0_81 = arith.constant 0 : index
    %213 = vector.load %arg9[%c0_79, %c0_80, %c0_81] : memref<1x1x128xf32, #tpu.memory_space<vmem>>, vector<1x1x128xf32>
    %214 = vector.shape_cast %213 : vector<1x1x128xf32> to vector<1x128xf32>
    %215 = vector.broadcast %214 : vector<1x128xf32> to vector<48x128xf32>
    %216 = arith.addf %212, %215 : vector<48x128xf32>
    %217 = arith.addf %3, %216 : vector<48x128xf32>
    %c0_82 = arith.constant 0 : index
    %c0_83 = arith.constant 0 : index
    %c0_84 = arith.constant 0 : index
    %218 = vector.load %arg10[%c0_82, %c0_83, %c0_84] : memref<1x1x128xf32, #tpu.memory_space<vmem>>, vector<1x1x128xf32>
    %219 = vector.shape_cast %218 : vector<1x1x128xf32> to vector<1x128xf32>
    %c0_85 = arith.constant 0 : index
    %c0_86 = arith.constant 0 : index
    %c0_87 = arith.constant 0 : index
    %220 = vector.load %arg11[%c0_85, %c0_86, %c0_87] : memref<1x1x128xf32, #tpu.memory_space<vmem>>, vector<1x1x128xf32>
    %221 = vector.shape_cast %220 : vector<1x1x128xf32> to vector<1x128xf32>
    %cst_88 = arith.constant dense<0.000000e+00> : vector<48xf32>
    %222 = vector.multi_reduction <add>, %217, %cst_88 [1] : vector<48x128xf32> to vector<48xf32>
    %223 = vector.shape_cast %222 : vector<48xf32> to vector<48x1xf32>
    %cst_89 = arith.constant 1.280000e+02 : f32
    %224 = vector.broadcast %cst_89 : f32 to vector<48x1xf32>
    %225 = arith.divf %223, %224 : vector<48x1xf32>
    %226 = vector.broadcast %225 : vector<48x1xf32> to vector<48x128xf32>
    %227 = arith.subf %217, %226 : vector<48x128xf32>
    %228 = arith.mulf %227, %227 : vector<48x128xf32>
    %cst_90 = arith.constant dense<0.000000e+00> : vector<48xf32>
    %229 = vector.multi_reduction <add>, %228, %cst_90 [1] : vector<48x128xf32> to vector<48xf32>
    %230 = vector.shape_cast %229 : vector<48xf32> to vector<48x1xf32>
    %cst_91 = arith.constant 1.280000e+02 : f32
    %231 = vector.broadcast %cst_91 : f32 to vector<48x1xf32>
    %232 = arith.divf %230, %231 : vector<48x1xf32>
    %233 = vector.broadcast %225 : vector<48x1xf32> to vector<48x128xf32>
    %234 = arith.subf %217, %233 : vector<48x128xf32>
    %cst_92 = arith.constant 9.99999997E-7 : f32
    %235 = vector.broadcast %cst_92 : f32 to vector<48x1xf32>
    %236 = arith.addf %232, %235 : vector<48x1xf32>
    %237 = math.rsqrt %236 : vector<48x1xf32>
    %238 = vector.broadcast %237 : vector<48x1xf32> to vector<48x128xf32>
    %239 = arith.mulf %234, %238 : vector<48x128xf32>
    %240 = vector.broadcast %219 : vector<1x128xf32> to vector<48x128xf32>
    %241 = arith.mulf %239, %240 : vector<48x128xf32>
    %242 = vector.broadcast %221 : vector<1x128xf32> to vector<48x128xf32>
    %243 = arith.addf %241, %242 : vector<48x128xf32>
    %244 = arith.truncf %243 : vector<48x128xf32> to vector<48x128xbf16>
    %c0_93 = arith.constant 0 : index
    %c0_94 = arith.constant 0 : index
    %c0_95 = arith.constant 0 : index
    %245 = vector.load %arg12[%c0_93, %c0_94, %c0_95] : memref<1x128x512xbf16, #tpu.memory_space<vmem>>, vector<1x128x512xbf16>
    %246 = vector.shape_cast %245 : vector<1x128x512xbf16> to vector<128x512xbf16>
    %cst_96 = arith.constant dense<0.000000e+00> : vector<48x512xf32>
    %247 = tpu.matmul %244, %246, %cst_96 {dimension_numbers = #tpu.dot_dimension_numbers<[1], [0], [0], [1], [0, 0, 1, 1], [], []>} : vector<48x128xbf16>, vector<128x512xbf16>, vector<48x512xf32> -> vector<48x512xf32>
    %c0_97 = arith.constant 0 : index
    %c0_98 = arith.constant 0 : index
    %c0_99 = arith.constant 0 : index
    %248 = vector.load %arg13[%c0_97, %c0_98, %c0_99] : memref<1x1x512xf32, #tpu.memory_space<vmem>>, vector<1x1x512xf32>
    %249 = vector.shape_cast %248 : vector<1x1x512xf32> to vector<1x512xf32>
    %250 = vector.broadcast %249 : vector<1x512xf32> to vector<48x512xf32>
    %251 = arith.addf %247, %250 : vector<48x512xf32>
    %cst_100 = arith.constant 5.000000e-01 : f32
    %252 = vector.broadcast %cst_100 : f32 to vector<48x512xf32>
    %253 = arith.mulf %252, %251 : vector<48x512xf32>
    %cst_101 = arith.constant 4.471500e-02 : f32
    %254 = vector.broadcast %cst_101 : f32 to vector<48x512xf32>
    %255 = arith.mulf %254, %251 : vector<48x512xf32>
    %256 = arith.mulf %255, %251 : vector<48x512xf32>
    %257 = arith.mulf %256, %251 : vector<48x512xf32>
    %258 = arith.addf %251, %257 : vector<48x512xf32>
    %cst_102 = arith.constant 0.797884583 : f32
    %259 = vector.broadcast %cst_102 : f32 to vector<48x512xf32>
    %260 = arith.mulf %259, %258 : vector<48x512xf32>
    %261 = math.tanh %260 : vector<48x512xf32>
    %cst_103 = arith.constant 1.000000e+00 : f32
    %262 = vector.broadcast %cst_103 : f32 to vector<48x512xf32>
    %263 = arith.addf %262, %261 : vector<48x512xf32>
    %264 = arith.mulf %253, %263 : vector<48x512xf32>
    %265 = arith.truncf %264 : vector<48x512xf32> to vector<48x512xbf16>
    %c0_104 = arith.constant 0 : index
    %c0_105 = arith.constant 0 : index
    %c0_106 = arith.constant 0 : index
    %266 = vector.load %arg14[%c0_104, %c0_105, %c0_106] : memref<1x512x128xbf16, #tpu.memory_space<vmem>>, vector<1x512x128xbf16>
    %267 = vector.shape_cast %266 : vector<1x512x128xbf16> to vector<512x128xbf16>
    %cst_107 = arith.constant dense<0.000000e+00> : vector<48x128xf32>
    %268 = tpu.matmul %265, %267, %cst_107 {dimension_numbers = #tpu.dot_dimension_numbers<[1], [0], [0], [1], [0, 0, 1, 1], [], []>} : vector<48x512xbf16>, vector<512x128xbf16>, vector<48x128xf32> -> vector<48x128xf32>
    %c0_108 = arith.constant 0 : index
    %c0_109 = arith.constant 0 : index
    %c0_110 = arith.constant 0 : index
    %269 = vector.load %arg15[%c0_108, %c0_109, %c0_110] : memref<1x1x128xf32, #tpu.memory_space<vmem>>, vector<1x1x128xf32>
    %270 = vector.shape_cast %269 : vector<1x1x128xf32> to vector<1x128xf32>
    %271 = vector.broadcast %270 : vector<1x128xf32> to vector<48x128xf32>
    %272 = arith.addf %268, %271 : vector<48x128xf32>
    %273 = arith.addf %217, %272 : vector<48x128xf32>
    %c0_111 = arith.constant 0 : index
    %c0_112 = arith.constant 0 : index
    %274 = vector.load %arg19[%c0_111, %c0_112] : memref<48x128xf32, #tpu.memory_space<vmem>>, vector<48x128xf32>
    tpu.vector_store %arg19[%c0_111, %c0_112], %273 {strides = array<i32>} : memref<48x128xf32, #tpu.memory_space<vmem>>, vector<48x128xf32>,
    %c1_i32 = arith.constant 1 : i32
    %275 = arith.cmpi eq, %arg1, %c1_i32 : i32
    %276 = arith.extui %275 : i1 to i32
    %c0_i32_113 = arith.constant 0 : i32
    %277 = arith.cmpi ne, %276, %c0_i32_113 : i32
    scf.if %277 {
      %278 = vector.extract_strided_slice %273 {offsets = [0, 0], sizes = [1, 128], strides = [1, 1]} : vector<48x128xf32> to vector<1x128xf32>
      %279 = vector.extract_strided_slice %273 {offsets = [24, 0], sizes = [1, 128], strides = [1, 1]} : vector<48x128xf32> to vector<1x128xf32>
      %280 = tpu.concatenate %278, %279 in 0 : vector<1x128xf32>, vector<1x128xf32> -> vector<2x128xf32>
      %c0_114 = arith.constant 0 : index
      %c0_115 = arith.constant 0 : index
      %281 = vector.load %arg16[%c0_114, %c0_115] : memref<1x128xf32, #tpu.memory_space<vmem>>, vector<1x128xf32>
      %c0_116 = arith.constant 0 : index
      %c0_117 = arith.constant 0 : index
      %282 = vector.load %arg17[%c0_116, %c0_117] : memref<1x128xf32, #tpu.memory_space<vmem>>, vector<1x128xf32>
      %cst_118 = arith.constant dense<0.000000e+00> : vector<2xf32>
      %283 = vector.multi_reduction <add>, %280, %cst_118 [1] : vector<2x128xf32> to vector<2xf32>
      %284 = vector.shape_cast %283 : vector<2xf32> to vector<2x1xf32>
      %cst_119 = arith.constant 1.280000e+02 : f32
      %285 = vector.broadcast %cst_119 : f32 to vector<2x1xf32>
      %286 = arith.divf %284, %285 : vector<2x1xf32>
      %287 = vector.broadcast %286 : vector<2x1xf32> to vector<2x128xf32>
      %288 = arith.subf %280, %287 : vector<2x128xf32>
      %289 = arith.mulf %288, %288 : vector<2x128xf32>
      %cst_120 = arith.constant dense<0.000000e+00> : vector<2xf32>
      %290 = vector.multi_reduction <add>, %289, %cst_120 [1] : vector<2x128xf32> to vector<2xf32>
      %291 = vector.shape_cast %290 : vector<2xf32> to vector<2x1xf32>
      %cst_121 = arith.constant 1.280000e+02 : f32
      %292 = vector.broadcast %cst_121 : f32 to vector<2x1xf32>
      %293 = arith.divf %291, %292 : vector<2x1xf32>
      %294 = vector.broadcast %286 : vector<2x1xf32> to vector<2x128xf32>
      %295 = arith.subf %280, %294 : vector<2x128xf32>
      %cst_122 = arith.constant 9.99999997E-7 : f32
      %296 = vector.broadcast %cst_122 : f32 to vector<2x1xf32>
      %297 = arith.addf %293, %296 : vector<2x1xf32>
      %298 = math.rsqrt %297 : vector<2x1xf32>
      %299 = vector.broadcast %298 : vector<2x1xf32> to vector<2x128xf32>
      %300 = arith.mulf %295, %299 : vector<2x128xf32>
      %301 = vector.broadcast %281 : vector<1x128xf32> to vector<2x128xf32>
      %302 = arith.mulf %300, %301 : vector<2x128xf32>
      %303 = vector.broadcast %282 : vector<1x128xf32> to vector<2x128xf32>
      %304 = arith.addf %302, %303 : vector<2x128xf32>
      %c0_123 = arith.constant 0 : index
      %c0_124 = arith.constant 0 : index
      %c0_125 = arith.constant 0 : index
      %305 = vector.load %arg18[%c0_123, %c0_124, %c0_125] : memref<1x2x128xf32, #tpu.memory_space<vmem>>, vector<1x2x128xf32>
      %306 = vector.shape_cast %305 : vector<1x2x128xf32> to vector<2x128xf32>
      %307 = vector.shape_cast %304 : vector<2x128xf32> to vector<1x2x128xf32>
      tpu.vector_store %arg18[%c0_123, %c0_124, %c0_125], %307 {strides = array<i32>} : memref<1x2x128xf32, #tpu.memory_space<vmem>>, vector<1x2x128xf32>,
    } else {
    }
    return
  }
  func.func @transform_0(%arg0: i32, %arg1: i32) -> (i32, i32) {
    %c0_i32 = arith.constant 0 : i32
    %c0_i32_0 = arith.constant 0 : i32
    return %arg0, %c0_i32 : i32, i32
  }
  func.func @transform_1(%arg0: i32, %arg1: i32) -> (i32, i32) {
    %c0_i32 = arith.constant 0 : i32
    %c0_i32_0 = arith.constant 0 : i32
    %c0_i32_1 = arith.constant 0 : i32
    return %c0_i32, %c0_i32_0 : i32, i32
  }
  func.func @transform_2(%arg0: i32, %arg1: i32) -> (i32, i32, i32) {
    %c0_i32 = arith.constant 0 : i32
    %c0_i32_0 = arith.constant 0 : i32
    %c0_i32_1 = arith.constant 0 : i32
    return %arg1, %c0_i32, %c0_i32_0 : i32, i32, i32
  }
  func.func @transform_3(%arg0: i32, %arg1: i32) -> (i32, i32, i32) {
    %c0_i32 = arith.constant 0 : i32
    %c0_i32_0 = arith.constant 0 : i32
    %c0_i32_1 = arith.constant 0 : i32
    return %arg1, %c0_i32, %c0_i32_0 : i32, i32, i32
  }
  func.func @transform_4(%arg0: i32, %arg1: i32) -> (i32, i32, i32) {
    %c0_i32 = arith.constant 0 : i32
    %c0_i32_0 = arith.constant 0 : i32
    %c0_i32_1 = arith.constant 0 : i32
    return %arg1, %c0_i32, %c0_i32_0 : i32, i32, i32
  }
  func.func @transform_5(%arg0: i32, %arg1: i32) -> (i32, i32, i32) {
    %c0_i32 = arith.constant 0 : i32
    %c0_i32_0 = arith.constant 0 : i32
    %c0_i32_1 = arith.constant 0 : i32
    return %arg1, %c0_i32, %c0_i32_0 : i32, i32, i32
  }
  func.func @transform_6(%arg0: i32, %arg1: i32) -> (i32, i32, i32) {
    %c0_i32 = arith.constant 0 : i32
    %c0_i32_0 = arith.constant 0 : i32
    %c0_i32_1 = arith.constant 0 : i32
    return %arg1, %c0_i32, %c0_i32_0 : i32, i32, i32
  }
  func.func @transform_7(%arg0: i32, %arg1: i32) -> (i32, i32, i32) {
    %c0_i32 = arith.constant 0 : i32
    %c0_i32_0 = arith.constant 0 : i32
    %c0_i32_1 = arith.constant 0 : i32
    return %arg1, %c0_i32, %c0_i32_0 : i32, i32, i32
  }
  func.func @transform_8(%arg0: i32, %arg1: i32) -> (i32, i32, i32) {
    %c0_i32 = arith.constant 0 : i32
    %c0_i32_0 = arith.constant 0 : i32
    %c0_i32_1 = arith.constant 0 : i32
    return %arg1, %c0_i32, %c0_i32_0 : i32, i32, i32
  }
  func.func @transform_9(%arg0: i32, %arg1: i32) -> (i32, i32, i32) {
    %c0_i32 = arith.constant 0 : i32
    %c0_i32_0 = arith.constant 0 : i32
    %c0_i32_1 = arith.constant 0 : i32
    return %arg1, %c0_i32, %c0_i32_0 : i32, i32, i32
  }
  func.func @transform_10(%arg0: i32, %arg1: i32) -> (i32, i32, i32) {
    %c0_i32 = arith.constant 0 : i32
    %c0_i32_0 = arith.constant 0 : i32
    %c0_i32_1 = arith.constant 0 : i32
    return %arg1, %c0_i32, %c0_i32_0 : i32, i32, i32
  }
  func.func @transform_11(%arg0: i32, %arg1: i32) -> (i32, i32, i32) {
    %c0_i32 = arith.constant 0 : i32
    %c0_i32_0 = arith.constant 0 : i32
    %c0_i32_1 = arith.constant 0 : i32
    return %arg1, %c0_i32, %c0_i32_0 : i32, i32, i32
  }
  func.func @transform_12(%arg0: i32, %arg1: i32) -> (i32, i32, i32) {
    %c0_i32 = arith.constant 0 : i32
    %c0_i32_0 = arith.constant 0 : i32
    %c0_i32_1 = arith.constant 0 : i32
    return %arg1, %c0_i32, %c0_i32_0 : i32, i32, i32
  }
  func.func @transform_13(%arg0: i32, %arg1: i32) -> (i32, i32, i32) {
    %c0_i32 = arith.constant 0 : i32
    %c0_i32_0 = arith.constant 0 : i32
    %c0_i32_1 = arith.constant 0 : i32
    return %arg1, %c0_i32, %c0_i32_0 : i32, i32, i32
  }
  func.func @transform_14(%arg0: i32, %arg1: i32) -> (i32, i32) {
    %c0_i32 = arith.constant 0 : i32
    %c0_i32_0 = arith.constant 0 : i32
    %c0_i32_1 = arith.constant 0 : i32
    return %c0_i32, %c0_i32_0 : i32, i32
  }
  func.func @transform_15(%arg0: i32, %arg1: i32) -> (i32, i32) {
    %c0_i32 = arith.constant 0 : i32
    %c0_i32_0 = arith.constant 0 : i32
    %c0_i32_1 = arith.constant 0 : i32
    return %c0_i32, %c0_i32_0 : i32, i32
  }
  func.func @transform_16(%arg0: i32, %arg1: i32) -> (i32, i32, i32) {
    %c0_i32 = arith.constant 0 : i32
    %c0_i32_0 = arith.constant 0 : i32
    %c0_i32_1 = arith.constant 0 : i32
    return %arg0, %c0_i32, %c0_i32_0 : i32, i32, i32
  }
}

</mosaic_0001>

<llo_original>
// kernel: _lambda_.2
$region0: #{_lambda_.2}
  #allocation0 [shape = 'u32[]', space=smem, size = 0x4, offset = 0x4, fixed_abs, tag = 'smem constant byte address 0x4 - core index']
  #allocation1 [shape = 'u32[144,128]{1,0:T(1,128)}', space=vmem, size = 0x12000, scoped, tag = 'internal scratch']
  %s0 = inlined_call_operand.vmem [shape: bf16[48,768], index: 0, kind: input, shape index: {}]
  %s1 = inlined_call_operand.vmem [shape: f32[48,128], index: 1, kind: input, shape index: {}]
  %s2 = inlined_call_operand.vmem [shape: bf16[768,128], index: 2, kind: input, shape index: {}]
  %s3 = inlined_call_operand.vmem [shape: f32[48,128], index: 3, kind: output, shape index: {}]
  %s4 = sld [smem:[#allocation0]]
  $region22: #{_lambda_.2} parent=0
    _
  %s6 = ssub.s32 1, %s4
  %s7 = scalar_select 0, %s6, %s4
  // Predicated region
  $region2: #{_lambda_.2} parent=0 // pred_check
    _
  $region3: #{_lambda_.2} parent=0 // pred_check_branch
    %9 = sbr.rel (0) target = $region5
  $region4: #{_lambda_.2} parent=0 // pred_region
    _
  $region5: #{_lambda_.2} parent=0 // pred_fallthru
    _
  // Predicated region
  $region6: #{_lambda_.2} parent=0 // pred_check
    _
  $region7: #{_lambda_.2} parent=0 // pred_check_branch
    %11 = sbr.rel (0) target = $region9
  $region8: #{_lambda_.2} parent=0 // pred_region
    _
  $region9: #{_lambda_.2} parent=0 // pred_fallthru
    _
  // Predicated region
  $region10: #{_lambda_.2} parent=0 // pred_check
    _
  $region11: #{_lambda_.2} parent=0 // pred_check_branch
    %13 = sbr.rel (0) target = $region13
  $region12: #{_lambda_.2} parent=0 // pred_region
    _
  $region13: #{_lambda_.2} parent=0 // pred_fallthru
    _
  %v15 = vld [vmem:[%s0] sm:$0xff]
  %v16 = vld [vmem:[%s0 + $0x8] sm:$0xff]
  %v17 = vld [vmem:[%s0 + $0x10] sm:$0xff]
  %v18 = vld [vmem:[%s0 + $0x18] sm:$0xff]
  %v19 = vld [vmem:[%s0 + $0x20] sm:$0xff]
  %v20 = vld [vmem:[%s0 + $0x28] sm:$0xff]
  %v21 = vld [vmem:[%s0 + $0x30] sm:$0xff]
  %v22 = vld [vmem:[%s0 + $0x38] sm:$0xff]
  %v23 = vld [vmem:[%s0 + $0x40] sm:$0xff]
  %v24 = vld [vmem:[%s0 + $0x48] sm:$0xff]
  %v25 = vld [vmem:[%s0 + $0x50] sm:$0xff]
  %v26 = vld [vmem:[%s0 + $0x58] sm:$0xff]
  %v27 = vld [vmem:[%s0 + $0x60] sm:$0xff]
  %v28 = vld [vmem:[%s0 + $0x68] sm:$0xff]
  %v29 = vld [vmem:[%s0 + $0x70] sm:$0xff]
  %v30 = vld [vmem:[%s0 + $0x78] sm:$0xff]
  %v31 = vld [vmem:[%s0 + $0x80] sm:$0xff]
  %v32 = vld [vmem:[%s0 + $0x88] sm:$0xff]
  %v33 = vld [vmem:[%s2] sm:$0xf]
  %v34 = vld [vmem:[%s2 + $0x4] sm:$0xf]
  %v35 = vld [vmem:[%s2 + $0x8] sm:$0xf]
  %v36 = vld [vmem:[%s2 + $0xc] sm:$0xf]
  %v37 = vld [vmem:[%s2 + $0x10] sm:$0xf]
  %v38 = vld [vmem:[%s2 + $0x14] sm:$0xf]
  %v39 = vld [vmem:[%s2 + $0x18] sm:$0xf]
  %v40 = vld [vmem:[%s2 + $0x1c] sm:$0xf]
  %v41 = vld [vmem:[%s2 + $0x20] sm:$0xf]
  %v42 = vld [vmem:[%s2 + $0x24] sm:$0xf]
  %v43 = vld [vmem:[%s2 + $0x28] sm:$0xf]
  %v44 = vld [vmem:[%s2 + $0x2c] sm:$0xf]
  %v45 = vld [vmem:[%s2 + $0x30] sm:$0xf]
  %v46 = vld [vmem:[%s2 + $0x34] sm:$0xf]
  %v47 = vld [vmem:[%s2 + $0x38] sm:$0xf]
  %v48 = vld [vmem:[%s2 + $0x3c] sm:$0xf]
  %v49 = vld [vmem:[%s2 + $0x40] sm:$0xf]
  %v50 = vld [vmem:[%s2 + $0x44] sm:$0xf]
  %v51 = vld [vmem:[%s2 + $0x48] sm:$0xf]
  %v52 = vld [vmem:[%s2 + $0x4c] sm:$0xf]
  %v53 = vld [vmem:[%s2 + $0x50] sm:$0xf]
  %v54 = vld [vmem:[%s2 + $0x54] sm:$0xf]
  %v55 = vld [vmem:[%s2 + $0x58] sm:$0xf]
  %v56 = vld [vmem:[%s2 + $0x5c] sm:$0xf]
  %v57 = vld [vmem:[%s2 + $0x60] sm:$0xf]
  %v58 = vld [vmem:[%s2 + $0x64] sm:$0xf]
  %v59 = vld [vmem:[%s2 + $0x68] sm:$0xf]
  %v60 = vld [vmem:[%s2 + $0x6c] sm:$0xf]
  %v61 = vld [vmem:[%s2 + $0x70] sm:$0xf]
  %v62 = vld [vmem:[%s2 + $0x74] sm:$0xf]
  %v63 = vld [vmem:[%s2 + $0x78] sm:$0xf]
  %v64 = vld [vmem:[%s2 + $0x7c] sm:$0xf]
  %v65 = vld [vmem:[%s2 + $0x80] sm:$0xf]
  %v66 = vld [vmem:[%s2 + $0x84] sm:$0xf]
  %v67 = vld [vmem:[%s2 + $0x88] sm:$0xf]
  %v68 = vld [vmem:[%s2 + $0x8c] sm:$0xf]
  %v69 = vld [vmem:[%s2 + $0x90] sm:$0xf]
  %v70 = vld [vmem:[%s2 + $0x94] sm:$0xf]
  %v71 = vld [vmem:[%s2 + $0x98] sm:$0xf]
  %v72 = vld [vmem:[%s2 + $0x9c] sm:$0xf]
  %v73 = vld [vmem:[%s2 + $0xa0] sm:$0xf]
  %v74 = vld [vmem:[%s2 + $0xa4] sm:$0xf]
  %v75 = vld [vmem:[%s2 + $0xa8] sm:$0xf]
  %v76 = vld [vmem:[%s2 + $0xac] sm:$0xf]
  %v77 = vld [vmem:[%s2 + $0xb0] sm:$0xf]
  %v78 = vld [vmem:[%s2 + $0xb4] sm:$0xf]
  %v79 = vld [vmem:[%s2 + $0xb8] sm:$0xf]
  %v80 = vld [vmem:[%s2 + $0xbc] sm:$0xf]
  %v81 = vld [vmem:[%s2 + $0xc0] sm:$0xf]
  %v82 = vld [vmem:[%s2 + $0xc4] sm:$0xf]
  %v83 = vld [vmem:[%s2 + $0xc8] sm:$0xf]
  %v84 = vld [vmem:[%s2 + $0xcc] sm:$0xf]
  %v85 = vld [vmem:[%s2 + $0xd0] sm:$0xf]
  %v86 = vld [vmem:[%s2 + $0xd4] sm:$0xf]
  %v87 = vld [vmem:[%s2 + $0xd8] sm:$0xf]
  %v88 = vld [vmem:[%s2 + $0xdc] sm:$0xf]
  %v89 = vld [vmem:[%s2 + $0xe0] sm:$0xf]
  %v90 = vld [vmem:[%s2 + $0xe4] sm:$0xf]
  %v91 = vld [vmem:[%s2 + $0xe8] sm:$0xf]
  %v92 = vld [vmem:[%s2 + $0xec] sm:$0xf]
  %v93 = vld [vmem:[%s2 + $0xf0] sm:$0xf]
  %v94 = vld [vmem:[%s2 + $0xf4] sm:$0xf]
  %v95 = vld [vmem:[%s2 + $0xf8] sm:$0xf]
  %v96 = vld [vmem:[%s2 + $0xfc] sm:$0xf]
  %v97 = vld [vmem:[%s2 + $0x100] sm:$0xf]
  %v98 = vld [vmem:[%s2 + $0x104] sm:$0xf]
  %v99 = vld [vmem:[%s2 + $0x108] sm:$0xf]
  %v100 = vld [vmem:[%s2 + $0x10c] sm:$0xf]
  %v101 = vld [vmem:[%s2 + $0x110] sm:$0xf]
  %v102 = vld [vmem:[%s2 + $0x114] sm:$0xf]
  %v103 = vld [vmem:[%s2 + $0x118] sm:$0xf]
  %v104 = vld [vmem:[%s2 + $0x11c] sm:$0xf]
  %v105 = vld [vmem:[%s2 + $0x120] sm:$0xf]
  %v106 = vld [vmem:[%s2 + $0x124] sm:$0xf]
  %v107 = vld [vmem:[%s2 + $0x128] sm:$0xf]
  %v108 = vld [vmem:[%s2 + $0x12c] sm:$0xf]
  %v109 = vld [vmem:[%s2 + $0x130] sm:$0xf]
  %v110 = vld [vmem:[%s2 + $0x134] sm:$0xf]
  %v111 = vld [vmem:[%s2 + $0x138] sm:$0xf]
  %v112 = vld [vmem:[%s2 + $0x13c] sm:$0xf]
  %v113 = vld [vmem:[%s2 + $0x140] sm:$0xf]
  %v114 = vld [vmem:[%s2 + $0x144] sm:$0xf]
  %v115 = vld [vmem:[%s2 + $0x148] sm:$0xf]
  %v116 = vld [vmem:[%s2 + $0x14c] sm:$0xf]
  %v117 = vld [vmem:[%s2 + $0x150] sm:$0xf]
  %v118 = vld [vmem:[%s2 + $0x154] sm:$0xf]
  %v119 = vld [vmem:[%s2 + $0x158] sm:$0xf]
  %v120 = vld [vmem:[%s2 + $0x15c] sm:$0xf]
  %v121 = vld [vmem:[%s2 + $0x160] sm:$0xf]
  %v122 = vld [vmem:[%s2 + $0x164] sm:$0xf]
  %v123 = vld [vmem:[%s2 + $0x168] sm:$0xf]
  %v124 = vld [vmem:[%s2 + $0x16c] sm:$0xf]
  %v125 = vld [vmem:[%s2 + $0x170] sm:$0xf]
  %v126 = vld [vmem:[%s2 + $0x174] sm:$0xf]
  %v127 = vld [vmem:[%s2 + $0x178] sm:$0xf]
  %v128 = vld [vmem:[%s2 + $0x17c] sm:$0xf]
  %v129 = vld [vmem:[%s1] sm:$0xff]
  %v130 = vld [vmem:[%s1 + $0x8] sm:$0xff]
  %v131 = vld [vmem:[%s1 + $0x10] sm:$0xff]
  %v132 = vld [vmem:[%s1 + $0x18] sm:$0xff]
  %v133 = vld [vmem:[%s1 + $0x20] sm:$0xff]
  %v134 = vld [vmem:[%s1 + $0x28] sm:$0xff]
  %v153 = vunpack.c.l.b16 %v15
  %v154 = vunpack.c.h.b16 %v15
  %v155 = vunpack.c.l.b16 %v16
  %v156 = vunpack.c.h.b16 %v16
  %v157 = vunpack.c.l.b16 %v17
  %v158 = vunpack.c.h.b16 %v17
  %v159 = vunpack.c.l.b16 %v18
  %v160 = vunpack.c.h.b16 %v18
  %v161 = vunpack.c.l.b16 %v19
  %v162 = vunpack.c.h.b16 %v19
  %v163 = vunpack.c.l.b16 %v20
  %v164 = vunpack.c.h.b16 %v20
  %v165 = vunpack.c.l.b16 %v21
  %v166 = vunpack.c.h.b16 %v21
  %v167 = vunpack.c.l.b16 %v22
  %v168 = vunpack.c.h.b16 %v22
  %v169 = vunpack.c.l.b16 %v23
  %v170 = vunpack.c.h.b16 %v23
  %v171 = vunpack.c.l.b16 %v24
  %v172 = vunpack.c.h.b16 %v24
  %v173 = vunpack.c.l.b16 %v25
  %v174 = vunpack.c.h.b16 %v25
  %v175 = vunpack.c.l.b16 %v26
  %v176 = vunpack.c.h.b16 %v26
  %v177 = vunpack.c.l.b16 %v27
  %v178 = vunpack.c.h.b16 %v27
  %v179 = vunpack.c.l.b16 %v28
  %v180 = vunpack.c.h.b16 %v28
  %v181 = vunpack.c.l.b16 %v29
  %v182 = vunpack.c.h.b16 %v29
  %v183 = vunpack.c.l.b16 %v30
  %v184 = vunpack.c.h.b16 %v30
  %v185 = vunpack.c.l.b16 %v31
  %v186 = vunpack.c.h.b16 %v31
  %v187 = vunpack.c.l.b16 %v32
  %v188 = vunpack.c.h.b16 %v32
  %v189 = vpack.c.b16 %v159, %v153
  %v190 = vpack.c.b16 %v160, %v154
  %v191 = vpack.c.b16 %v161, %v155
  %v192 = vpack.c.b16 %v162, %v156
  %v193 = vpack.c.b16 %v163, %v157
  %v194 = vpack.c.b16 %v164, %v158
  %v195 = vpack.c.b16 %v171, %v165
  %v196 = vpack.c.b16 %v172, %v166
  %v197 = vpack.c.b16 %v173, %v167
  %v198 = vpack.c.b16 %v174, %v168
  %v199 = vpack.c.b16 %v175, %v169
  %v200 = vpack.c.b16 %v176, %v170
  %v201 = vpack.c.b16 %v183, %v177
  %v202 = vpack.c.b16 %v184, %v178
  %v203 = vpack.c.b16 %v185, %v179
  %v204 = vpack.c.b16 %v186, %v180
  %v205 = vpack.c.b16 %v187, %v181
  %v206 = vpack.c.b16 %v188, %v182
  %v321 = vunpack.c.l.b16 %v33
  %v322 = vunpack.c.l.b16 %v34
  %v323 = vunpack.c.l.b16 %v35
  %v324 = vunpack.c.l.b16 %v36
  %v325 = vunpack.c.l.b16 %v37
  %v326 = vunpack.c.l.b16 %v38
  %v327 = vunpack.c.l.b16 %v39
  %v328 = vunpack.c.l.b16 %v40
  %v329 = vunpack.c.l.b16 %v41
  %v330 = vunpack.c.l.b16 %v42
  %v331 = vunpack.c.l.b16 %v43
  %v332 = vunpack.c.l.b16 %v44
  %v333 = vunpack.c.l.b16 %v45
  %v334 = vunpack.c.l.b16 %v46
  %v335 = vunpack.c.l.b16 %v47
  %v336 = vunpack.c.l.b16 %v48
  %v337 = vunpack.c.l.b16 %v49
  %v338 = vunpack.c.l.b16 %v50
  %v339 = vunpack.c.l.b16 %v51
  %v340 = vunpack.c.l.b16 %v52
  %v341 = vunpack.c.l.b16 %v53
  %v342 = vunpack.c.l.b16 %v54
  %v343 = vunpack.c.l.b16 %v55
  %v344 = vunpack.c.l.b16 %v56
  %v345 = vunpack.c.l.b16 %v57
  %v346 = vunpack.c.l.b16 %v58
  %v347 = vunpack.c.l.b16 %v59
  %v348 = vunpack.c.l.b16 %v60
  %v349 = vunpack.c.l.b16 %v61
  %v350 = vunpack.c.l.b16 %v62
  %v351 = vunpack.c.l.b16 %v63
  %v352 = vunpack.c.l.b16 %v64
  %v353 = vunpack.c.l.b16 %v65
  %v354 = vunpack.c.l.b16 %v66
  %v355 = vunpack.c.l.b16 %v67
  %v356 = vunpack.c.l.b16 %v68
  %v357 = vunpack.c.l.b16 %v69
  %v358 = vunpack.c.l.b16 %v70
  %v359 = vunpack.c.l.b16 %v71
  %v360 = vunpack.c.l.b16 %v72
  %v361 = vunpack.c.l.b16 %v73
  %v362 = vunpack.c.l.b16 %v74
  %v363 = vunpack.c.l.b16 %v75
  %v364 = vunpack.c.l.b16 %v76
  %v365 = vunpack.c.l.b16 %v77
  %v366 = vunpack.c.l.b16 %v78
  %v367 = vunpack.c.l.b16 %v79
  %v368 = vunpack.c.l.b16 %v80
  %v369 = vunpack.c.l.b16 %v81
  %v370 = vunpack.c.l.b16 %v82
  %v371 = vunpack.c.l.b16 %v83
  %v372 = vunpack.c.l.b16 %v84
  %v373 = vunpack.c.l.b16 %v85
  %v374 = vunpack.c.l.b16 %v86
  %v375 = vunpack.c.l.b16 %v87
  %v376 = vunpack.c.l.b16 %v88
  %v377 = vunpack.c.l.b16 %v89
  %v378 = vunpack.c.l.b16 %v90
  %v379 = vunpack.c.l.b16 %v91
  %v380 = vunpack.c.l.b16 %v92
  %v381 = vunpack.c.l.b16 %v93
  %v382 = vunpack.c.l.b16 %v94
  %v383 = vunpack.c.l.b16 %v95
  %v384 = vunpack.c.l.b16 %v96
  %v385 = vunpack.c.l.b16 %v97
  %v386 = vunpack.c.l.b16 %v98
  %v387 = vunpack.c.l.b16 %v99
  %v388 = vunpack.c.l.b16 %v100
  %v389 = vunpack.c.l.b16 %v101
  %v390 = vunpack.c.l.b16 %v102
  %v391 = vunpack.c.l.b16 %v103
  %v392 = vunpack.c.l.b16 %v104
  %v393 = vunpack.c.l.b16 %v105
  %v394 = vunpack.c.l.b16 %v106
  %v395 = vunpack.c.l.b16 %v107
  %v396 = vunpack.c.l.b16 %v108
  %v397 = vunpack.c.l.b16 %v109
  %v398 = vunpack.c.l.b16 %v110
  %v399 = vunpack.c.l.b16 %v111
  %v400 = vunpack.c.l.b16 %v112
  %v401 = vunpack.c.l.b16 %v113
  %v402 = vunpack.c.l.b16 %v114
  %v403 = vunpack.c.l.b16 %v115
  %v404 = vunpack.c.l.b16 %v116
  %v405 = vunpack.c.l.b16 %v117
  %v406 = vunpack.c.l.b16 %v118
  %v407 = vunpack.c.l.b16 %v119
  %v408 = vunpack.c.l.b16 %v120
  %v409 = vunpack.c.l.b16 %v121
  %v410 = vunpack.c.l.b16 %v122
  %v411 = vunpack.c.l.b16 %v123
  %v412 = vunpack.c.l.b16 %v124
  %v413 = vunpack.c.l.b16 %v125
  %v414 = vunpack.c.l.b16 %v126
  %v415 = vunpack.c.l.b16 %v127
  %v416 = vunpack.c.l.b16 %v128
  %v417 = vpack.c.b16 %v322, %v321
  %v418 = vpack.c.b16 %v324, %v323
  %v419 = vpack.c.b16 %v326, %v325
  %v420 = vpack.c.b16 %v328, %v327
  %v421 = vpack.c.b16 %v330, %v329
  %v422 = vpack.c.b16 %v332, %v331
  %v423 = vpack.c.b16 %v334, %v333
  %v424 = vpack.c.b16 %v336, %v335
  %v425 = vpack.c.b16 %v338, %v337
  %v426 = vpack.c.b16 %v340, %v339
  %v427 = vpack.c.b16 %v342, %v341
  %v428 = vpack.c.b16 %v344, %v343
  %v429 = vpack.c.b16 %v346, %v345
  %v430 = vpack.c.b16 %v348, %v347
  %v431 = vpack.c.b16 %v350, %v349
  %v432 = vpack.c.b16 %v352, %v351
  %v433 = vpack.c.b16 %v354, %v353
  %v434 = vpack.c.b16 %v356, %v355
  %v435 = vpack.c.b16 %v358, %v357
  %v436 = vpack.c.b16 %v360, %v359
  %v437 = vpack.c.b16 %v362, %v361
  %v438 = vpack.c.b16 %v364, %v363
  %v439 = vpack.c.b16 %v366, %v365
  %v440 = vpack.c.b16 %v368, %v367
  %v441 = vpack.c.b16 %v370, %v369
  %v442 = vpack.c.b16 %v372, %v371
  %v443 = vpack.c.b16 %v374, %v373
  %v444 = vpack.c.b16 %v376, %v375
  %v445 = vpack.c.b16 %v378, %v377
  %v446 = vpack.c.b16 %v380, %v379
  %v447 = vpack.c.b16 %v382, %v381
  %v448 = vpack.c.b16 %v384, %v383
  %v449 = vpack.c.b16 %v386, %v385
  %v450 = vpack.c.b16 %v388, %v387
  %v451 = vpack.c.b16 %v390, %v389
  %v452 = vpack.c.b16 %v392, %v391
  %v453 = vpack.c.b16 %v394, %v393
  %v454 = vpack.c.b16 %v396, %v395
  %v455 = vpack.c.b16 %v398, %v397
  %v456 = vpack.c.b16 %v400, %v399
  %v457 = vpack.c.b16 %v402, %v401
  %v458 = vpack.c.b16 %v404, %v403
  %v459 = vpack.c.b16 %v406, %v405
  %v460 = vpack.c.b16 %v408, %v407
  %v461 = vpack.c.b16 %v410, %v409
  %v462 = vpack.c.b16 %v412, %v411
  %v463 = vpack.c.b16 %v414, %v413
  %v464 = vpack.c.b16 %v416, %v415
  %513 = vmatprep.subr.bf16.mxu0 0
  %514 = vmatpush1.bf16.msra.mxu0 %v417
  %515 = vmatprep.subr.bf16.mxu0 0
  %516 = vmatpush1.bf16.msra.mxu0 %v418
  %517 = vmatprep.subr.bf16.mxu0 0
  %518 = vmatpush1.bf16.msra.mxu0 %v419
  %519 = vmatprep.subr.bf16.mxu0 0
  %520 = vmatpush1.bf16.msra.mxu0 %v420
  %521 = vmatprep.subr.bf16.mxu0 0
  %522 = vmatpush1.bf16.msra.mxu0 %v421
  %523 = vmatprep.subr.bf16.mxu0 0
  %524 = vmatpush1.bf16.msra.mxu0 %v422
  %525 = vmatprep.subr.bf16.mxu0 0
  %526 = vmatpush1.bf16.msra.mxu0 %v423
  %527 = vmatprep.subr.bf16.mxu0 0
  %528 = vmatpush1.bf16.msra.mxu0 %v424
  %529 = vmatprep.subr.bf16.mxu0 0
  %530 = vmatpush1.bf16.msra.mxu0 %v425
  %531 = vmatprep.subr.bf16.mxu0 0
  %532 = vmatpush1.bf16.msra.mxu0 %v426
  %533 = vmatprep.subr.bf16.mxu0 0
  %534 = vmatpush1.bf16.msra.mxu0 %v427
  %535 = vmatprep.subr.bf16.mxu0 0
  %536 = vmatpush1.bf16.msra.mxu0 %v428
  %537 = vmatprep.subr.bf16.mxu0 0
  %538 = vmatpush1.bf16.msra.mxu0 %v429
  %539 = vmatprep.subr.bf16.mxu0 0
  %540 = vmatpush1.bf16.msra.mxu0 %v430
  %541 = vmatprep.subr.bf16.mxu0 0
  %542 = vmatpush1.bf16.msra.mxu0 %v431
  %543 = vmatprep.subr.bf16.mxu0 0
  %544 = vmatpush1.bf16.msra.mxu0 %v432
  %545 = vmatprep.mubr.bf16.mxu0 %v190
  %546 = vmatmul.mubr.bf16.gmra.mrb[0].mxu0 %v189
  %v547 = vpop.f32.mrb[0].mxu0
  %v548 = vadd.f32 %v129, %v547
  %v549 = vpop.f32.mrb[0].mxu0
  %v550 = vpop.f32.mrb[0].mxu0
  %v551 = vadd.f32 %v130, %v550
  %v552 = vpop.f32.mrb[0].mxu0
  %553 = vmatprep.mubr.bf16.mxu0 %v196
  %554 = vmatmul.mubr.bf16.gmra.mrb[0].mxu0 %v195
  %v555 = vpop.f32.mrb[0].mxu0
  %v556 = vadd.f32 %v131, %v555
  %v557 = vpop.f32.mrb[0].mxu0
  %v558 = vpop.f32.mrb[0].mxu0
  %v559 = vadd.f32 %v132, %v558
  %v560 = vpop.f32.mrb[0].mxu0
  %561 = vmatprep.mubr.bf16.mxu0 %v202
  %562 = vmatmul.mubr.bf16.gmra.mrb[0].mxu0 %v201
  %v563 = vpop.f32.mrb[0].mxu0
  %v564 = vadd.f32 %v133, %v563
  %v565 = vpop.f32.mrb[0].mxu0
  %v566 = vpop.f32.mrb[0].mxu0
  %v567 = vadd.f32 %v134, %v566
  %v568 = vpop.f32.mrb[0].mxu0
  %569 = vdwg.mxu0
  %570 = vmatprep.subr.bf16.mxu0 0
  %571 = vmatpush1.bf16.msra.mxu0 %v433
  %572 = vmatprep.subr.bf16.mxu0 0
  %573 = vmatpush1.bf16.msra.mxu0 %v434
  %574 = vmatprep.subr.bf16.mxu0 0
  %575 = vmatpush1.bf16.msra.mxu0 %v435
  %576 = vmatprep.subr.bf16.mxu0 0
  %577 = vmatpush1.bf16.msra.mxu0 %v436
  %578 = vmatprep.subr.bf16.mxu0 0
  %579 = vmatpush1.bf16.msra.mxu0 %v437
  %580 = vmatprep.subr.bf16.mxu0 0
  %581 = vmatpush1.bf16.msra.mxu0 %v438
  %582 = vmatprep.subr.bf16.mxu0 0
  %583 = vmatpush1.bf16.msra.mxu0 %v439
  %584 = vmatprep.subr.bf16.mxu0 0
  %585 = vmatpush1.bf16.msra.mxu0 %v440
  %586 = vmatprep.subr.bf16.mxu0 0
  %587 = vmatpush1.bf16.msra.mxu0 %v441
  %588 = vmatprep.subr.bf16.mxu0 0
  %589 = vmatpush1.bf16.msra.mxu0 %v442
  %590 = vmatprep.subr.bf16.mxu0 0
  %591 = vmatpush1.bf16.msra.mxu0 %v443
  %592 = vmatprep.subr.bf16.mxu0 0
  %593 = vmatpush1.bf16.msra.mxu0 %v444
  %594 = vmatprep.subr.bf16.mxu0 0
  %595 = vmatpush1.bf16.msra.mxu0 %v445
  %596 = vmatprep.subr.bf16.mxu0 0
  %597 = vmatpush1.bf16.msra.mxu0 %v446
  %598 = vmatprep.subr.bf16.mxu0 0
  %599 = vmatpush1.bf16.msra.mxu0 %v447
  %600 = vmatprep.subr.bf16.mxu0 0
  %601 = vmatpush1.bf16.msra.mxu0 %v448
  %602 = vmatprep.mubr.bf16.mxu0 %v192
  %603 = vmatmul.mubr.bf16.gmra.mrb[0].mxu0 %v191
  %v604 = vpop.f32.mrb[0].mxu0
  %v605 = vadd.f32 %v548, %v604
  %v606 = vpop.f32.mrb[0].mxu0
  %v607 = vpop.f32.mrb[0].mxu0
  %v608 = vadd.f32 %v551, %v607
  %v609 = vpop.f32.mrb[0].mxu0
  %610 = vmatprep.mubr.bf16.mxu0 %v198
  %611 = vmatmul.mubr.bf16.gmra.mrb[0].mxu0 %v197
  %v612 = vpop.f32.mrb[0].mxu0
  %v613 = vadd.f32 %v556, %v612
  %v614 = vpop.f32.mrb[0].mxu0
  %v615 = vpop.f32.mrb[0].mxu0
  %v616 = vadd.f32 %v559, %v615
  %v617 = vpop.f32.mrb[0].mxu0
  %618 = vmatprep.mubr.bf16.mxu0 %v204
  %619 = vmatmul.mubr.bf16.gmra.mrb[0].mxu0 %v203
  %v620 = vpop.f32.mrb[0].mxu0
  %v621 = vadd.f32 %v564, %v620
  %v622 = vpop.f32.mrb[0].mxu0
  %v623 = vpop.f32.mrb[0].mxu0
  %v624 = vadd.f32 %v567, %v623
  %v625 = vpop.f32.mrb[0].mxu0
  %626 = vdwg.mxu0
  %627 = vmatprep.subr.bf16.mxu0 0
  %628 = vmatpush1.bf16.msra.mxu0 %v449
  %629 = vmatprep.subr.bf16.mxu0 0
  %630 = vmatpush1.bf16.msra.mxu0 %v450
  %631 = vmatprep.subr.bf16.mxu0 0
  %632 = vmatpush1.bf16.msra.mxu0 %v451
  %633 = vmatprep.subr.bf16.mxu0 0
  %634 = vmatpush1.bf16.msra.mxu0 %v452
  %635 = vmatprep.subr.bf16.mxu0 0
  %636 = vmatpush1.bf16.msra.mxu0 %v453
  %637 = vmatprep.subr.bf16.mxu0 0
  %638 = vmatpush1.bf16.msra.mxu0 %v454
  %639 = vmatprep.subr.bf16.mxu0 0
  %640 = vmatpush1.bf16.msra.mxu0 %v455
  %641 = vmatprep.subr.bf16.mxu0 0
  %642 = vmatpush1.bf16.msra.mxu0 %v456
  %643 = vmatprep.subr.bf16.mxu0 0
  %644 = vmatpush1.bf16.msra.mxu0 %v457
  %645 = vmatprep.subr.bf16.mxu0 0
  %646 = vmatpush1.bf16.msra.mxu0 %v458
  %647 = vmatprep.subr.bf16.mxu0 0
  %648 = vmatpush1.bf16.msra.mxu0 %v459
  %649 = vmatprep.subr.bf16.mxu0 0
  %650 = vmatpush1.bf16.msra.mxu0 %v460
  %651 = vmatprep.subr.bf16.mxu0 0
  %652 = vmatpush1.bf16.msra.mxu0 %v461
  %653 = vmatprep.subr.bf16.mxu0 0
  %654 = vmatpush1.bf16.msra.mxu0 %v462
  %655 = vmatprep.subr.bf16.mxu0 0
  %656 = vmatpush1.bf16.msra.mxu0 %v463
  %657 = vmatprep.subr.bf16.mxu0 0
  %658 = vmatpush1.bf16.msra.mxu0 %v464
  %659 = vmatprep.mubr.bf16.mxu0 %v194
  %660 = vmatmul.mubr.bf16.gmra.mrb[0].mxu0 %v193
  %v661 = vpop.f32.mrb[0].mxu0
  %v662 = vadd.f32 %v605, %v661
  %v663 = vpop.f32.mrb[0].mxu0
  %v664 = vpop.f32.mrb[0].mxu0
  %v665 = vadd.f32 %v608, %v664
  %v666 = vpop.f32.mrb[0].mxu0
  %667 = vmatprep.mubr.bf16.mxu0 %v200
  %668 = vmatmul.mubr.bf16.gmra.mrb[0].mxu0 %v199
  %v669 = vpop.f32.mrb[0].mxu0
  %v670 = vadd.f32 %v613, %v669
  %v671 = vpop.f32.mrb[0].mxu0
  %v672 = vpop.f32.mrb[0].mxu0
  %v673 = vadd.f32 %v616, %v672
  %v674 = vpop.f32.mrb[0].mxu0
  %675 = vmatprep.mubr.bf16.mxu0 %v206
  %676 = vmatmul.mubr.bf16.gmra.mrb[0].mxu0 %v205
  %v677 = vpop.f32.mrb[0].mxu0
  %v678 = vadd.f32 %v621, %v677
  %v679 = vpop.f32.mrb[0].mxu0
  %v680 = vpop.f32.mrb[0].mxu0
  %v681 = vadd.f32 %v624, %v680
  %v682 = vpop.f32.mrb[0].mxu0
  %683 = vdwg.mxu0
  %684 = vst [vmem:[%s3] sm:$0xff] %v662
  %685 = vst [vmem:[%s3 + $0x8] sm:$0xff] %v665
  %686 = vst [vmem:[%s3 + $0x10] sm:$0xff] %v670
  %687 = vst [vmem:[%s3 + $0x18] sm:$0xff] %v673
  %688 = vst [vmem:[%s3 + $0x20] sm:$0xff] %v678
  %689 = vst [vmem:[%s3 + $0x28] sm:$0xff] %v681
  // Predicated region
  $region14: #{_lambda_.2} parent=0 // pred_check
    _
  $region15: #{_lambda_.2} parent=0 // pred_check_branch
    %691 = sbr.rel (0) target = $region17
  $region16: #{_lambda_.2} parent=0 // pred_region
    _
  $region17: #{_lambda_.2} parent=0 // pred_fallthru
    _
  // Predicated region
  $region18: #{_lambda_.2} parent=0 // pred_check
    _
  $region19: #{_lambda_.2} parent=0 // pred_check_branch
    %693 = sbr.rel (0) target = $region21
  $region20: #{_lambda_.2} parent=0 // pred_region
    _
  $region21: #{_lambda_.2} parent=0 // pred_fallthru
    _

// kernel: _lambda_.3
$region0: #{_lambda_.3}
  #allocation0 [shape = 'u32[]', space=smem, size = 0x4, offset = 0x4, fixed_abs, tag = 'smem constant byte address 0x4 - core index']
  #allocation1 [shape = 'u32[144,128]{1,0:T(1,128)}', space=vmem, size = 0x12000, scoped, tag = 'internal scratch']
  #allocation2 [shape = 'f32[48,128]{1,0:T(8,128)}', space=vmem, size = 0x6000, scoped, tag = 'scratch operand']
  #allocation3 [shape = 'f32[48,128]{1,0:T(8,128)}', space=vmem, size = 0x6000, scoped, tag = 'scratch operand']
  %s0 = inlined_call_operand.vmem [shape: f32[48,128], index: 0, kind: input, shape index: {}]
  %s1 = inlined_call_operand.vmem [shape: f32[1,24], index: 1, kind: input, shape index: {}]
  %s2 = inlined_call_operand.vmem [shape: f32[2,1,128], index: 2, kind: input, shape index: {}]
  %s3 = inlined_call_operand.vmem [shape: f32[2,1,128], index: 3, kind: input, shape index: {}]
  %s4 = inlined_call_operand.vmem [shape: bf16[2,128,384], index: 4, kind: input, shape index: {}]
  %s5 = inlined_call_operand.vmem [shape: f32[2,1,384], index: 5, kind: input, shape index: {}]
  %s6 = inlined_call_operand.vmem [shape: bf16[2,128,128], index: 6, kind: input, shape index: {}]
  %s7 = inlined_call_operand.vmem [shape: f32[2,1,128], index: 7, kind: input, shape index: {}]
  %s8 = inlined_call_operand.vmem [shape: f32[2,1,128], index: 8, kind: input, shape index: {}]
  %s9 = inlined_call_operand.vmem [shape: f32[2,1,128], index: 9, kind: input, shape index: {}]
  %s10 = inlined_call_operand.vmem [shape: bf16[2,128,512], index: 10, kind: input, shape index: {}]
  %s11 = inlined_call_operand.vmem [shape: f32[2,1,512], index: 11, kind: input, shape index: {}]
  %s12 = inlined_call_operand.vmem [shape: bf16[2,512,128], index: 12, kind: input, shape index: {}]
  %s13 = inlined_call_operand.vmem [shape: f32[2,1,128], index: 13, kind: input, shape index: {}]
  %s14 = inlined_call_operand.vmem [shape: f32[1,128], index: 14, kind: input, shape index: {}]
  %s15 = inlined_call_operand.vmem [shape: f32[1,128], index: 15, kind: input, shape index: {}]
  %s16 = inlined_call_operand.hbm [shape: f32[1,2,128], index: 16, kind: output, shape index: {}]
  %s17 = sld [smem:[#allocation0]]
  $region105: #{_lambda_.3} parent=0
    _
  %s19 = ssub.s32 1, %s17
  %s20 = scalar_select 0, %s19, %s17
  $region1: #{_lambda_.3} parent=0
    #allocation4 [shape = 'u8[1024]{0}', space=vmem, size = 0x400, scoped, tag = 'output window, operand 0, single buffered']
    #allocation5 [shape = 's32[2]{0}', space=sflag, size = 0x8, scoped, tag = 'scoped memory for _lambda_.3']
    %21 = vsyncpa [#allocation5], 0
    loop: start=0, step=1, limit=4
    $region2: #{_lambda_.3} parent=1 // loop_pre_header
      _
    $region3: #{_lambda_.3} parent=1 // loop_header
      %s23 = sphi 0, %s27
      %p24 = scmp.ge.s32.totalorder %s23, 4
      %s30 = sphi 0, %s42
      %s31 = sphi 0, %s38
      %s32 = sphi 0, %s30
      %s33 = sphi 0, %s31
      %s34 = sphi 0, %s32
      %s35 = sphi 0, %s33
      %s45 = sphi 0, %s47
      %s48 = sphi 0, %s45
      %s49 = sphi 0, %s48
      %s65 = sphi 0, %s49
      %s69 = sphi 0, %s69
      %s71 = sphi 0, %s69
      %s72 = sphi 0, %s71
      %s86 = sphi 0, %s72
      %s92 = sphi 0, %s94
      %s95 = sphi 0, %s92
      %s96 = sphi 0, %s95
      %s112 = sphi 0, %s96
      %s118 = sphi 0, %s120
      %s121 = sphi 0, %s118
      %s122 = sphi 0, %s121
      %s138 = sphi 0, %s122
      %s144 = sphi 0, %s146
      %s147 = sphi 0, %s144
      %s148 = sphi 0, %s147
      %s164 = sphi 0, %s148
      %s170 = sphi 0, %s172
      %s173 = sphi 0, %s170
      %s174 = sphi 0, %s173
      %s190 = sphi 0, %s174
      %s196 = sphi 0, %s198
      %s199 = sphi 0, %s196
      %s200 = sphi 0, %s199
      %s216 = sphi 0, %s200
      %s222 = sphi 0, %s224
      %s225 = sphi 0, %s222
      %s226 = sphi 0, %s225
      %s242 = sphi 0, %s226
      %s248 = sphi 0, %s250
      %s251 = sphi 0, %s248
      %s252 = sphi 0, %s251
      %s268 = sphi 0, %s252
      %s274 = sphi 0, %s276
      %s277 = sphi 0, %s274
      %s278 = sphi 0, %s277
      %s294 = sphi 0, %s278
      %s300 = sphi 0, %s302
      %s303 = sphi 0, %s300
      %s304 = sphi 0, %s303
      %s320 = sphi 0, %s304
      %s326 = sphi 0, %s328
      %s329 = sphi 0, %s326
      %s330 = sphi 0, %s329
      %s346 = sphi 0, %s330
      %s352 = sphi 0, %s354
      %s355 = sphi 0, %s352
      %s356 = sphi 0, %s355
      %s372 = sphi 0, %s356
      %s378 = sphi 0, %s380
      %s381 = sphi 0, %s378
      %s382 = sphi 0, %s381
      %s398 = sphi 0, %s382
      %s402 = sphi 0, %s402
      %s404 = sphi 0, %s402
      %s405 = sphi 0, %s404
      %s419 = sphi 0, %s405
      %s423 = sphi 0, %s423
      %s425 = sphi 0, %s423
      %s426 = sphi 0, %s425
      %s440 = sphi 0, %s426
      %s446 = sphi 0, %s448
      %s449 = sphi 0, %s446
      %s450 = sphi 0, %s449
      %s466 = sphi 0, %s450
    $region4: #{_lambda_.3} parent=1 // loop_header_branch
      %26 = sbr.rel (%p24) target = $region8
    $region5: #{_lambda_.3} parent=1 // loop_body
      %s28 = ssub.s32 %s23, 1
      %s29 = ssub.s32 %s23, 2
      %s36 = sadd.s32 1, %s31
      %p37 = scmp.ge.s32.totalorder %s36, 2
      %s38 = scalar_select %p37, 0, %s36
      %s39 = sadd.s32 1, %s30
      %s40 = scalar_select %p37, %s39, %s30
      %p41 = scmp.ge.s32.totalorder %s40, 1
      %s42 = scalar_select %p41, 0, %s40
      %s43 = ssub.s32 %s30, %s42
      %p44 = scmp.eq.s32.totalorder %s43, 0
      %s46 = sadd.s32 %s45, 1
      %s47 = scalar_select %p44, %s45, %s46
      %p50 = pneg %p44
      %p51 = scmp.eq.s32.totalorder %s23, 1
      %p52 = por %p50, %p51
      %p53 = scmp.ne.s32.totalorder %s45, %s48
      %p54 = scmp.eq.s32.totalorder %s23, 0
      %p55 = por %p53, %p54
      %p56 = scmp.ne.s32.totalorder %s45, %s48
      %p57 = scmp.eq.s32.totalorder %s28, 1
      %p58 = por %p56, %p57
      %p59 = scmp.ne.s32.totalorder %s48, %s49
      %p60 = scmp.eq.s32.totalorder %s28, 0
      %p61 = por %p59, %p60
      %p62 = scmp.ne.s32.totalorder %s48, %s49
      %p63 = scmp.eq.s32.totalorder %s29, 1
      %p64 = por %p62, %p63
      %p66 = scmp.ne.s32.totalorder %s49, %s65
      %p67 = scmp.eq.s32.totalorder %s29, 0
      %p68 = por %p66, %p67
      %s70 = sadd.s32 %s69, 1
      %p73 = scmp.eq.s32.totalorder %s23, 1
      %p74 = scmp.ne.s32.totalorder %s69, %s71
      %p75 = scmp.eq.s32.totalorder %s23, 0
      %p76 = por %p74, %p75
      %p77 = scmp.ne.s32.totalorder %s69, %s71
      %p78 = scmp.eq.s32.totalorder %s28, 1
      %p79 = por %p77, %p78
      %p80 = scmp.ne.s32.totalorder %s71, %s72
      %p81 = scmp.eq.s32.totalorder %s28, 0
      %p82 = por %p80, %p81
      %p83 = scmp.ne.s32.totalorder %s71, %s72
      %p84 = scmp.eq.s32.totalorder %s29, 1
      %p85 = por %p83, %p84
      %p87 = scmp.ne.s32.totalorder %s72, %s86
      %p88 = scmp.eq.s32.totalorder %s29, 0
      %p89 = por %p87, %p88
      %s90 = ssub.s32 %s31, %s38
      %p91 = scmp.eq.s32.totalorder %s90, 0
      %s93 = sadd.s32 %s92, 1
      %s94 = scalar_select %p91, %s92, %s93
      %p97 = pneg %p91
      %p98 = scmp.eq.s32.totalorder %s23, 1
      %p99 = por %p97, %p98
      %p100 = scmp.ne.s32.totalorder %s92, %s95
      %p101 = scmp.eq.s32.totalorder %s23, 0
      %p102 = por %p100, %p101
      %p103 = scmp.ne.s32.totalorder %s92, %s95
      %p104 = scmp.eq.s32.totalorder %s28, 1
      %p105 = por %p103, %p104
      %p106 = scmp.ne.s32.totalorder %s95, %s96
      %p107 = scmp.eq.s32.totalorder %s28, 0
      %p108 = por %p106, %p107
      %p109 = scmp.ne.s32.totalorder %s95, %s96
      %p110 = scmp.eq.s32.totalorder %s29, 1
      %p111 = por %p109, %p110
      %p113 = scmp.ne.s32.totalorder %s96, %s112
      %p114 = scmp.eq.s32.totalorder %s29, 0
      %p115 = por %p113, %p114
      %s116 = ssub.s32 %s31, %s38
      %p117 = scmp.eq.s32.totalorder %s116, 0
      %s119 = sadd.s32 %s118, 1
      %s120 = scalar_select %p117, %s118, %s119
      %p123 = pneg %p117
      %p124 = scmp.eq.s32.totalorder %s23, 1
      %p125 = por %p123, %p124
      %p126 = scmp.ne.s32.totalorder %s118, %s121
      %p127 = scmp.eq.s32.totalorder %s23, 0
      %p128 = por %p126, %p127
      %p129 = scmp.ne.s32.totalorder %s118, %s121
      %p130 = scmp.eq.s32.totalorder %s28, 1
      %p131 = por %p129, %p130
      %p132 = scmp.ne.s32.totalorder %s121, %s122
      %p133 = scmp.eq.s32.totalorder %s28, 0
      %p134 = por %p132, %p133
      %p135 = scmp.ne.s32.totalorder %s121, %s122
      %p136 = scmp.eq.s32.totalorder %s29, 1
      %p137 = por %p135, %p136
      %p139 = scmp.ne.s32.totalorder %s122, %s138
      %p140 = scmp.eq.s32.totalorder %s29, 0
      %p141 = por %p139, %p140
      %s142 = ssub.s32 %s31, %s38
      %p143 = scmp.eq.s32.totalorder %s142, 0
      %s145 = sadd.s32 %s144, 1
      %s146 = scalar_select %p143, %s144, %s145
      %p149 = pneg %p143
      %p150 = scmp.eq.s32.totalorder %s23, 1
      %p151 = por %p149, %p150
      %p152 = scmp.ne.s32.totalorder %s144, %s147
      %p153 = scmp.eq.s32.totalorder %s23, 0
      %p154 = por %p152, %p153
      %p155 = scmp.ne.s32.totalorder %s144, %s147
      %p156 = scmp.eq.s32.totalorder %s28, 1
      %p157 = por %p155, %p156
      %p158 = scmp.ne.s32.totalorder %s147, %s148
      %p159 = scmp.eq.s32.totalorder %s28, 0
      %p160 = por %p158, %p159
      %p161 = scmp.ne.s32.totalorder %s147, %s148
      %p162 = scmp.eq.s32.totalorder %s29, 1
      %p163 = por %p161, %p162
      %p165 = scmp.ne.s32.totalorder %s148, %s164
      %p166 = scmp.eq.s32.totalorder %s29, 0
      %p167 = por %p165, %p166
      %s168 = ssub.s32 %s31, %s38
      %p169 = scmp.eq.s32.totalorder %s168, 0
      %s171 = sadd.s32 %s170, 1
      %s172 = scalar_select %p169, %s170, %s171
      %p175 = pneg %p169
      %p176 = scmp.eq.s32.totalorder %s23, 1
      %p177 = por %p175, %p176
      %p178 = scmp.ne.s32.totalorder %s170, %s173
      %p179 = scmp.eq.s32.totalorder %s23, 0
      %p180 = por %p178, %p179
      %p181 = scmp.ne.s32.totalorder %s170, %s173
      %p182 = scmp.eq.s32.totalorder %s28, 1
      %p183 = por %p181, %p182
      %p184 = scmp.ne.s32.totalorder %s173, %s174
      %p185 = scmp.eq.s32.totalorder %s28, 0
      %p186 = por %p184, %p185
      %p187 = scmp.ne.s32.totalorder %s173, %s174
      %p188 = scmp.eq.s32.totalorder %s29, 1
      %p189 = por %p187, %p188
      %p191 = scmp.ne.s32.totalorder %s174, %s190
      %p192 = scmp.eq.s32.totalorder %s29, 0
      %p193 = por %p191, %p192
      %s194 = ssub.s32 %s31, %s38
      %p195 = scmp.eq.s32.totalorder %s194, 0
      %s197 = sadd.s32 %s196, 1
      %s198 = scalar_select %p195, %s196, %s197
      %p201 = pneg %p195
      %p202 = scmp.eq.s32.totalorder %s23, 1
      %p203 = por %p201, %p202
      %p204 = scmp.ne.s32.totalorder %s196, %s199
      %p205 = scmp.eq.s32.totalorder %s23, 0
      %p206 = por %p204, %p205
      %p207 = scmp.ne.s32.totalorder %s196, %s199
      %p208 = scmp.eq.s32.totalorder %s28, 1
      %p209 = por %p207, %p208
      %p210 = scmp.ne.s32.totalorder %s199, %s200
      %p211 = scmp.eq.s32.totalorder %s28, 0
      %p212 = por %p210, %p211
      %p213 = scmp.ne.s32.totalorder %s199, %s200
      %p214 = scmp.eq.s32.totalorder %s29, 1
      %p215 = por %p213, %p214
      %p217 = scmp.ne.s32.totalorder %s200, %s216
      %p218 = scmp.eq.s32.totalorder %s29, 0
      %p219 = por %p217, %p218
      %s220 = ssub.s32 %s31, %s38
      %p221 = scmp.eq.s32.totalorder %s220, 0
      %s223 = sadd.s32 %s222, 1
      %s224 = scalar_select %p221, %s222, %s223
      %p227 = pneg %p221
      %p228 = scmp.eq.s32.totalorder %s23, 1
      %p229 = por %p227, %p228
      %p230 = scmp.ne.s32.totalorder %s222, %s225
      %p231 = scmp.eq.s32.totalorder %s23, 0
      %p232 = por %p230, %p231
      %p233 = scmp.ne.s32.totalorder %s222, %s225
      %p234 = scmp.eq.s32.totalorder %s28, 1
      %p235 = por %p233, %p234
      %p236 = scmp.ne.s32.totalorder %s225, %s226
      %p237 = scmp.eq.s32.totalorder %s28, 0
      %p238 = por %p236, %p237
      %p239 = scmp.ne.s32.totalorder %s225, %s226
      %p240 = scmp.eq.s32.totalorder %s29, 1
      %p241 = por %p239, %p240
      %p243 = scmp.ne.s32.totalorder %s226, %s242
      %p244 = scmp.eq.s32.totalorder %s29, 0
      %p245 = por %p243, %p244
      %s246 = ssub.s32 %s31, %s38
      %p247 = scmp.eq.s32.totalorder %s246, 0
      %s249 = sadd.s32 %s248, 1
      %s250 = scalar_select %p247, %s248, %s249
      %p253 = pneg %p247
      %p254 = scmp.eq.s32.totalorder %s23, 1
      %p255 = por %p253, %p254
      %p256 = scmp.ne.s32.totalorder %s248, %s251
      %p257 = scmp.eq.s32.totalorder %s23, 0
      %p258 = por %p256, %p257
      %p259 = scmp.ne.s32.totalorder %s248, %s251
      %p260 = scmp.eq.s32.totalorder %s28, 1
      %p261 = por %p259, %p260
      %p262 = scmp.ne.s32.totalorder %s251, %s252
      %p263 = scmp.eq.s32.totalorder %s28, 0
      %p264 = por %p262, %p263
      %p265 = scmp.ne.s32.totalorder %s251, %s252
      %p266 = scmp.eq.s32.totalorder %s29, 1
      %p267 = por %p265, %p266
      %p269 = scmp.ne.s32.totalorder %s252, %s268
      %p270 = scmp.eq.s32.totalorder %s29, 0
      %p271 = por %p269, %p270
      %s272 = ssub.s32 %s31, %s38
      %p273 = scmp.eq.s32.totalorder %s272, 0
      %s275 = sadd.s32 %s274, 1
      %s276 = scalar_select %p273, %s274, %s275
      %p279 = pneg %p273
      %p280 = scmp.eq.s32.totalorder %s23, 1
      %p281 = por %p279, %p280
      %p282 = scmp.ne.s32.totalorder %s274, %s277
      %p283 = scmp.eq.s32.totalorder %s23, 0
      %p284 = por %p282, %p283
      %p285 = scmp.ne.s32.totalorder %s274, %s277
      %p286 = scmp.eq.s32.totalorder %s28, 1
      %p287 = por %p285, %p286
      %p288 = scmp.ne.s32.totalorder %s277, %s278
      %p289 = scmp.eq.s32.totalorder %s28, 0
      %p290 = por %p288, %p289
      %p291 = scmp.ne.s32.totalorder %s277, %s278
      %p292 = scmp.eq.s32.totalorder %s29, 1
      %p293 = por %p291, %p292
      %p295 = scmp.ne.s32.totalorder %s278, %s294
      %p296 = scmp.eq.s32.totalorder %s29, 0
      %p297 = por %p295, %p296
      %s298 = ssub.s32 %s31, %s38
      %p299 = scmp.eq.s32.totalorder %s298, 0
      %s301 = sadd.s32 %s300, 1
      %s302 = scalar_select %p299, %s300, %s301
      %p305 = pneg %p299
      %p306 = scmp.eq.s32.totalorder %s23, 1
      %p307 = por %p305, %p306
      %p308 = scmp.ne.s32.totalorder %s300, %s303
      %p309 = scmp.eq.s32.totalorder %s23, 0
      %p310 = por %p308, %p309
      %p311 = scmp.ne.s32.totalorder %s300, %s303
      %p312 = scmp.eq.s32.totalorder %s28, 1
      %p313 = por %p311, %p312
      %p314 = scmp.ne.s32.totalorder %s303, %s304
      %p315 = scmp.eq.s32.totalorder %s28, 0
      %p316 = por %p314, %p315
      %p317 = scmp.ne.s32.totalorder %s303, %s304
      %p318 = scmp.eq.s32.totalorder %s29, 1
      %p319 = por %p317, %p318
      %p321 = scmp.ne.s32.totalorder %s304, %s320
      %p322 = scmp.eq.s32.totalorder %s29, 0
      %p323 = por %p321, %p322
      %s324 = ssub.s32 %s31, %s38
      %p325 = scmp.eq.s32.totalorder %s324, 0
      %s327 = sadd.s32 %s326, 1
      %s328 = scalar_select %p325, %s326, %s327
      %p331 = pneg %p325
      %p332 = scmp.eq.s32.totalorder %s23, 1
      %p333 = por %p331, %p332
      %p334 = scmp.ne.s32.totalorder %s326, %s329
      %p335 = scmp.eq.s32.totalorder %s23, 0
      %p336 = por %p334, %p335
      %p337 = scmp.ne.s32.totalorder %s326, %s329
      %p338 = scmp.eq.s32.totalorder %s28, 1
      %p339 = por %p337, %p338
      %p340 = scmp.ne.s32.totalorder %s329, %s330
      %p341 = scmp.eq.s32.totalorder %s28, 0
      %p342 = por %p340, %p341
      %p343 = scmp.ne.s32.totalorder %s329, %s330
      %p344 = scmp.eq.s32.totalorder %s29, 1
      %p345 = por %p343, %p344
      %p347 = scmp.ne.s32.totalorder %s330, %s346
      %p348 = scmp.eq.s32.totalorder %s29, 0
      %p349 = por %p347, %p348
      %s350 = ssub.s32 %s31, %s38
      %p351 = scmp.eq.s32.totalorder %s350, 0
      %s353 = sadd.s32 %s352, 1
      %s354 = scalar_select %p351, %s352, %s353
      %p357 = pneg %p351
      %p358 = scmp.eq.s32.totalorder %s23, 1
      %p359 = por %p357, %p358
      %p360 = scmp.ne.s32.totalorder %s352, %s355
      %p361 = scmp.eq.s32.totalorder %s23, 0
      %p362 = por %p360, %p361
      %p363 = scmp.ne.s32.totalorder %s352, %s355
      %p364 = scmp.eq.s32.totalorder %s28, 1
      %p365 = por %p363, %p364
      %p366 = scmp.ne.s32.totalorder %s355, %s356
      %p367 = scmp.eq.s32.totalorder %s28, 0
      %p368 = por %p366, %p367
      %p369 = scmp.ne.s32.totalorder %s355, %s356
      %p370 = scmp.eq.s32.totalorder %s29, 1
      %p371 = por %p369, %p370
      %p373 = scmp.ne.s32.totalorder %s356, %s372
      %p374 = scmp.eq.s32.totalorder %s29, 0
      %p375 = por %p373, %p374
      %s376 = ssub.s32 %s31, %s38
      %p377 = scmp.eq.s32.totalorder %s376, 0
      %s379 = sadd.s32 %s378, 1
      %s380 = scalar_select %p377, %s378, %s379
      %p383 = pneg %p377
      %p384 = scmp.eq.s32.totalorder %s23, 1
      %p385 = por %p383, %p384
      %p386 = scmp.ne.s32.totalorder %s378, %s381
      %p387 = scmp.eq.s32.totalorder %s23, 0
      %p388 = por %p386, %p387
      %p389 = scmp.ne.s32.totalorder %s378, %s381
      %p390 = scmp.eq.s32.totalorder %s28, 1
      %p391 = por %p389, %p390
      %p392 = scmp.ne.s32.totalorder %s381, %s382
      %p393 = scmp.eq.s32.totalorder %s28, 0
      %p394 = por %p392, %p393
      %p395 = scmp.ne.s32.totalorder %s381, %s382
      %p396 = scmp.eq.s32.totalorder %s29, 1
      %p397 = por %p395, %p396
      %p399 = scmp.ne.s32.totalorder %s382, %s398
      %p400 = scmp.eq.s32.totalorder %s29, 0
      %p401 = por %p399, %p400
      %s403 = sadd.s32 %s402, 1
      %p406 = scmp.eq.s32.totalorder %s23, 1
      %p407 = scmp.ne.s32.totalorder %s402, %s404
      %p408 = scmp.eq.s32.totalorder %s23, 0
      %p409 = por %p407, %p408
      %p410 = scmp.ne.s32.totalorder %s402, %s404
      %p411 = scmp.eq.s32.totalorder %s28, 1
      %p412 = por %p410, %p411
      %p413 = scmp.ne.s32.totalorder %s404, %s405
      %p414 = scmp.eq.s32.totalorder %s28, 0
      %p415 = por %p413, %p414
      %p416 = scmp.ne.s32.totalorder %s404, %s405
      %p417 = scmp.eq.s32.totalorder %s29, 1
      %p418 = por %p416, %p417
      %p420 = scmp.ne.s32.totalorder %s405, %s419
      %p421 = scmp.eq.s32.totalorder %s29, 0
      %p422 = por %p420, %p421
      %s424 = sadd.s32 %s423, 1
      %p427 = scmp.eq.s32.totalorder %s23, 1
      %p428 = scmp.ne.s32.totalorder %s423, %s425
      %p429 = scmp.eq.s32.totalorder %s23, 0
      %p430 = por %p428, %p429
      %p431 = scmp.ne.s32.totalorder %s423, %s425
      %p432 = scmp.eq.s32.totalorder %s28, 1
      %p433 = por %p431, %p432
      %p434 = scmp.ne.s32.totalorder %s425, %s426
      %p435 = scmp.eq.s32.totalorder %s28, 0
      %p436 = por %p434, %p435
      %p437 = scmp.ne.s32.totalorder %s425, %s426
      %p438 = scmp.eq.s32.totalorder %s29, 1
      %p439 = por %p437, %p438
      %p441 = scmp.ne.s32.totalorder %s426, %s440
      %p442 = scmp.eq.s32.totalorder %s29, 0
      %p443 = por %p441, %p442
      %s444 = ssub.s32 %s30, %s42
      %p445 = scmp.eq.s32.totalorder %s444, 0
      %s447 = sadd.s32 %s446, 1
      %s448 = scalar_select %p445, %s446, %s447
      %p451 = pneg %p445
      %p452 = scmp.eq.s32.totalorder %s23, 1
      %p453 = por %p451, %p452
      %p454 = scmp.ne.s32.totalorder %s446, %s449
      %p455 = scmp.eq.s32.totalorder %s23, 0
      %p456 = por %p454, %p455
      %p457 = scmp.ne.s32.totalorder %s446, %s449
      %p458 = scmp.eq.s32.totalorder %s28, 1
      %p459 = por %p457, %p458
      %p460 = scmp.ne.s32.totalorder %s449, %s450
      %p461 = scmp.eq.s32.totalorder %s28, 0
      %p462 = por %p460, %p461
      %p463 = scmp.ne.s32.totalorder %s449, %s450
      %p464 = scmp.eq.s32.totalorder %s29, 1
      %p465 = por %p463, %p464
      %p467 = scmp.ne.s32.totalorder %s450, %s466
      %p468 = scmp.eq.s32.totalorder %s29, 0
      %p469 = por %p467, %p468
      %p470 = scmp.le.s32.totalorder 1, %s23
      %p471 = scmp.lt.s32.totalorder %s23, 3
      %p472 = pnand %p470, %p471
      %p473 = pneg %p472
      // Predicated region
      $region9: #{_lambda_.3} parent=5 // pred_check
        _
      $region10: #{_lambda_.3} parent=5 // pred_check_branch
        %475 = sbr.rel (%p472) target = $region12
      $region11: #{_lambda_.3} parent=5 // pred_region
        %s476 = ssub.s32 %s23, 1
        // Predicated region
        $region13: #{_lambda_.3} parent=11 // pred_check
          %p477 = pneg %p61
        $region14: #{_lambda_.3} parent=11 // pred_check_branch
          %479 = sbr.rel (%p477) target = $region16
        $region15: #{_lambda_.3} parent=11 // pred_region
          %s480 = smul.u32 6, %s32
          %p481 = scmp.lt.s32.totalorder %s480, 5
          %s482 = scalar_select %p481, %s480, 5
          %s483 = smul.addr %s482, 8
          %s484 = scalar_lea.vmem %s0, %s483
          %s485 = smul.u32 6, %s32
        $region16: #{_lambda_.3} parent=11 // pred_fallthru
          _
        // Predicated region
        $region17: #{_lambda_.3} parent=11 // pred_check
          %p486 = pneg %p82
        $region18: #{_lambda_.3} parent=11 // pred_check_branch
          %488 = sbr.rel (%p486) target = $region20
        $region19: #{_lambda_.3} parent=11 // pred_region
          _
        $region20: #{_lambda_.3} parent=11 // pred_fallthru
          _
        // Predicated region
        $region21: #{_lambda_.3} parent=11 // pred_check
          %p489 = pneg %p415
        $region22: #{_lambda_.3} parent=11 // pred_check_branch
          %491 = sbr.rel (%p489) target = $region24
        $region23: #{_lambda_.3} parent=11 // pred_region
          _
        $region24: #{_lambda_.3} parent=11 // pred_fallthru
          _
        // Predicated region
        $region25: #{_lambda_.3} parent=11 // pred_check
          %p492 = pneg %p436
        $region26: #{_lambda_.3} parent=11 // pred_check_branch
          %494 = sbr.rel (%p492) target = $region28
        $region27: #{_lambda_.3} parent=11 // pred_region
          _
        $region28: #{_lambda_.3} parent=11 // pred_fallthru
          _
      $region12: #{_lambda_.3} parent=5 // pred_fallthru
        _
      %p495 = scmp.lt.s32.totalorder %s23, 2
      // Predicated region
      $region29: #{_lambda_.3} parent=5 // pred_check
        %p496 = pneg %p495
      $region30: #{_lambda_.3} parent=5 // pred_check_branch
        %498 = sbr.rel (%p496) target = $region32
      $region31: #{_lambda_.3} parent=5 // pred_region
        // Predicated region
        $region33: #{_lambda_.3} parent=31 // pred_check
          %p499 = pneg %p102
        $region34: #{_lambda_.3} parent=31 // pred_check_branch
          %501 = sbr.rel (%p499) target = $region36
        $region35: #{_lambda_.3} parent=31 // pred_region
          %p502 = scmp.lt.s32.totalorder %s31, 1
          %s503 = scalar_select %p502, %s31, 1
          %s504 = scalar_lea.vmem %s2, %s503
        $region36: #{_lambda_.3} parent=31 // pred_fallthru
          _
        // Predicated region
        $region37: #{_lambda_.3} parent=31 // pred_check
          %p505 = pneg %p128
        $region38: #{_lambda_.3} parent=31 // pred_check_branch
          %507 = sbr.rel (%p505) target = $region40
        $region39: #{_lambda_.3} parent=31 // pred_region
          %p508 = scmp.lt.s32.totalorder %s31, 1
          %s509 = scalar_select %p508, %s31, 1
          %s510 = scalar_lea.vmem %s3, %s509
        $region40: #{_lambda_.3} parent=31 // pred_fallthru
          _
        // Predicated region
        $region41: #{_lambda_.3} parent=31 // pred_check
          %p511 = pneg %p154
        $region42: #{_lambda_.3} parent=31 // pred_check_branch
          %513 = sbr.rel (%p511) target = $region44
        $region43: #{_lambda_.3} parent=31 // pred_region
          %p514 = scmp.lt.s32.totalorder %s31, 1
          %s515 = scalar_select %p514, %s31, 1
          %s516 = smul.addr %s515, 48
          %s517 = smul.addr %s516, 4
          %s518 = scalar_lea.vmem %s4, %s517
        $region44: #{_lambda_.3} parent=31 // pred_fallthru
          _
        // Predicated region
        $region45: #{_lambda_.3} parent=31 // pred_check
          %p519 = pneg %p180
        $region46: #{_lambda_.3} parent=31 // pred_check_branch
          %521 = sbr.rel (%p519) target = $region48
        $region47: #{_lambda_.3} parent=31 // pred_region
          %p522 = scmp.lt.s32.totalorder %s31, 1
          %s523 = scalar_select %p522, %s31, 1
          %s524 = smul.addr %s523, 3
          %s525 = scalar_lea.vmem %s5, %s524
        $region48: #{_lambda_.3} parent=31 // pred_fallthru
          _
        // Predicated region
        $region49: #{_lambda_.3} parent=31 // pred_check
          %p526 = pneg %p206
        $region50: #{_lambda_.3} parent=31 // pred_check_branch
          %528 = sbr.rel (%p526) target = $region52
        $region51: #{_lambda_.3} parent=31 // pred_region
          %p529 = scmp.lt.s32.totalorder %s31, 1
          %s530 = scalar_select %p529, %s31, 1
          %s531 = smul.addr %s530, 16
          %s532 = smul.addr %s531, 4
          %s533 = scalar_lea.vmem %s6, %s532
        $region52: #{_lambda_.3} parent=31 // pred_fallthru
          _
        // Predicated region
        $region53: #{_lambda_.3} parent=31 // pred_check
          %p534 = pneg %p232
        $region54: #{_lambda_.3} parent=31 // pred_check_branch
          %536 = sbr.rel (%p534) target = $region56
        $region55: #{_lambda_.3} parent=31 // pred_region
          %p537 = scmp.lt.s32.totalorder %s31, 1
          %s538 = scalar_select %p537, %s31, 1
          %s539 = scalar_lea.vmem %s7, %s538
        $region56: #{_lambda_.3} parent=31 // pred_fallthru
          _
        // Predicated region
        $region57: #{_lambda_.3} parent=31 // pred_check
          %p540 = pneg %p258
        $region58: #{_lambda_.3} parent=31 // pred_check_branch
          %542 = sbr.rel (%p540) target = $region60
        $region59: #{_lambda_.3} parent=31 // pred_region
          %p543 = scmp.lt.s32.totalorder %s31, 1
          %s544 = scalar_select %p543, %s31, 1
          %s545 = scalar_lea.vmem %s8, %s544
        $region60: #{_lambda_.3} parent=31 // pred_fallthru
          _
        // Predicated region
        $region61: #{_lambda_.3} parent=31 // pred_check
          %p546 = pneg %p284
        $region62: #{_lambda_.3} parent=31 // pred_check_branch
          %548 = sbr.rel (%p546) target = $region64
        $region63: #{_lambda_.3} parent=31 // pred_region
          %p549 = scmp.lt.s32.totalorder %s31, 1
          %s550 = scalar_select %p549, %s31, 1
          %s551 = scalar_lea.vmem %s9, %s550
        $region64: #{_lambda_.3} parent=31 // pred_fallthru
          _
        // Predicated region
        $region65: #{_lambda_.3} parent=31 // pred_check
          %p552 = pneg %p310
        $region66: #{_lambda_.3} parent=31 // pred_check_branch
          %554 = sbr.rel (%p552) target = $region68
        $region67: #{_lambda_.3} parent=31 // pred_region
          %p555 = scmp.lt.s32.totalorder %s31, 1
          %s556 = scalar_select %p555, %s31, 1
          %s557 = smul.addr %s556, 64
          %s558 = smul.addr %s557, 4
          %s559 = scalar_lea.vmem %s10, %s558
        $region68: #{_lambda_.3} parent=31 // pred_fallthru
          _
        // Predicated region
        $region69: #{_lambda_.3} parent=31 // pred_check
          %p560 = pneg %p336
        $region70: #{_lambda_.3} parent=31 // pred_check_branch
          %562 = sbr.rel (%p560) target = $region72
        $region71: #{_lambda_.3} parent=31 // pred_region
          %p563 = scmp.lt.s32.totalorder %s31, 1
          %s564 = scalar_select %p563, %s31, 1
          %s565 = smul.addr %s564, 4
          %s566 = scalar_lea.vmem %s11, %s565
        $region72: #{_lambda_.3} parent=31 // pred_fallthru
          _
        // Predicated region
        $region73: #{_lambda_.3} parent=31 // pred_check
          %p567 = pneg %p362
        $region74: #{_lambda_.3} parent=31 // pred_check_branch
          %569 = sbr.rel (%p567) target = $region76
        $region75: #{_lambda_.3} parent=31 // pred_region
          %p570 = scmp.lt.s32.totalorder %s31, 1
          %s571 = scalar_select %p570, %s31, 1
          %s572 = smul.addr %s571, 64
          %s573 = smul.addr %s572, 4
          %s574 = scalar_lea.vmem %s12, %s573
        $region76: #{_lambda_.3} parent=31 // pred_fallthru
          _
        // Predicated region
        $region77: #{_lambda_.3} parent=31 // pred_check
          %p575 = pneg %p388
        $region78: #{_lambda_.3} parent=31 // pred_check_branch
          %577 = sbr.rel (%p575) target = $region80
        $region79: #{_lambda_.3} parent=31 // pred_region
          %p578 = scmp.lt.s32.totalorder %s31, 1
          %s579 = scalar_select %p578, %s31, 1
          %s580 = scalar_lea.vmem %s13, %s579
        $region80: #{_lambda_.3} parent=31 // pred_fallthru
          _
      $region32: #{_lambda_.3} parent=5 // pred_fallthru
        _
      %p581 = scmp.le.s32.totalorder 1, %s23
      %p582 = scmp.lt.s32.totalorder %s23, 3
      %p583 = pnand %p581, %p582
      %p584 = pneg %p583
      // Predicated region
      $region81: #{_lambda_.3} parent=5 // pred_check
        _
      $region82: #{_lambda_.3} parent=5 // pred_check_branch
        %586 = sbr.rel (%p583) target = $region84
      $region83: #{_lambda_.3} parent=5 // pred_region
        %s587 = ssub.s32 %s23, 1
        %s588 = smul.u32 6, %s32
        %p589 = scmp.lt.s32.totalorder %s588, 5
        %s590 = scalar_select %p589, %s588, 5
        %s591 = smul.addr %s590, 8
        %s592 = scalar_lea.vmem %s0, %s591
        %p593 = pneg %p61
        %p594 = pneg %p58
        %p595 = pneg %p82
        %p596 = pneg %p79
        %p597 = scmp.lt.s32.totalorder %s33, 1
        %s598 = scalar_select %p597, %s33, 1
        %s599 = scalar_lea.vmem %s2, %s598
        %p600 = pneg %p108
        %p601 = pneg %p105
        %p602 = scmp.lt.s32.totalorder %s33, 1
        %s603 = scalar_select %p602, %s33, 1
        %s604 = scalar_lea.vmem %s3, %s603
        %p605 = pneg %p134
        %p606 = pneg %p131
        %p607 = scmp.lt.s32.totalorder %s33, 1
        %s608 = scalar_select %p607, %s33, 1
        %s609 = smul.addr %s608, 48
        %s610 = smul.addr %s609, 4
        %s611 = scalar_lea.vmem %s4, %s610
        %p612 = pneg %p160
        %p613 = pneg %p157
        %p614 = scmp.lt.s32.totalorder %s33, 1
        %s615 = scalar_select %p614, %s33, 1
        %s616 = smul.addr %s615, 3
        %s617 = scalar_lea.vmem %s5, %s616
        %p618 = pneg %p186
        %p619 = pneg %p183
        %p620 = scmp.lt.s32.totalorder %s33, 1
        %s621 = scalar_select %p620, %s33, 1
        %s622 = smul.addr %s621, 16
        %s623 = smul.addr %s622, 4
        %s624 = scalar_lea.vmem %s6, %s623
        %p625 = pneg %p212
        %p626 = pneg %p209
        %p627 = scmp.lt.s32.totalorder %s33, 1
        %s628 = scalar_select %p627, %s33, 1
        %s629 = scalar_lea.vmem %s7, %s628
        %p630 = pneg %p238
        %p631 = pneg %p235
        %p632 = scmp.lt.s32.totalorder %s33, 1
        %s633 = scalar_select %p632, %s33, 1
        %s634 = scalar_lea.vmem %s8, %s633
        %p635 = pneg %p264
        %p636 = pneg %p261
        %p637 = scmp.lt.s32.totalorder %s33, 1
        %s638 = scalar_select %p637, %s33, 1
        %s639 = scalar_lea.vmem %s9, %s638
        %p640 = pneg %p290
        %p641 = pneg %p287
        %p642 = scmp.lt.s32.totalorder %s33, 1
        %s643 = scalar_select %p642, %s33, 1
        %s644 = smul.addr %s643, 64
        %s645 = smul.addr %s644, 4
        %s646 = scalar_lea.vmem %s10, %s645
        %p647 = pneg %p316
        %p648 = pneg %p313
        %p649 = scmp.lt.s32.totalorder %s33, 1
        %s650 = scalar_select %p649, %s33, 1
        %s651 = smul.addr %s650, 4
        %s652 = scalar_lea.vmem %s11, %s651
        %p653 = pneg %p342
        %p654 = pneg %p339
        %p655 = scmp.lt.s32.totalorder %s33, 1
        %s656 = scalar_select %p655, %s33, 1
        %s657 = smul.addr %s656, 64
        %s658 = smul.addr %s657, 4
        %s659 = scalar_lea.vmem %s12, %s658
        %p660 = pneg %p368
        %p661 = pneg %p365
        %p662 = scmp.lt.s32.totalorder %s33, 1
        %s663 = scalar_select %p662, %s33, 1
        %s664 = scalar_lea.vmem %s13, %s663
        %p665 = pneg %p394
        %p666 = pneg %p391
        %p667 = pneg %p415
        %p668 = pneg %p412
        %p669 = pneg %p436
        %p670 = pneg %p433
        %p671 = pneg %p462
        %p672 = pneg %p459
        %s673 = smul.u32 6, %s32
        %p674 = scmp.lt.s32.totalorder %s673, 5
        %s675 = scalar_select %p674, %s673, 5
        %s676 = smul.addr %s675, 8
        %s677 = scalar_lea.vmem %s0, %s676
        %s678 = smul.u32 6, %s32
        %p679 = scmp.lt.s32.totalorder %s33, 1
        %s680 = scalar_select %p679, %s33, 1
        %s681 = scalar_lea.vmem %s2, %s680
        %p682 = scmp.lt.s32.totalorder %s33, 1
        %s683 = scalar_select %p682, %s33, 1
        %s684 = scalar_lea.vmem %s3, %s683
        %p685 = scmp.lt.s32.totalorder %s33, 1
        %s686 = scalar_select %p685, %s33, 1
        %s687 = smul.addr %s686, 48
        %s688 = smul.addr %s687, 4
        %s689 = scalar_lea.vmem %s4, %s688
        %p690 = scmp.lt.s32.totalorder %s33, 1
        %s691 = scalar_select %p690, %s33, 1
        %s692 = smul.addr %s691, 3
        %s693 = scalar_lea.vmem %s5, %s692
        %p694 = scmp.lt.s32.totalorder %s33, 1
        %s695 = scalar_select %p694, %s33, 1
        %s696 = smul.addr %s695, 16
        %s697 = smul.addr %s696, 4
        %s698 = scalar_lea.vmem %s6, %s697
        %p699 = scmp.lt.s32.totalorder %s33, 1
        %s700 = scalar_select %p699, %s33, 1
        %s701 = scalar_lea.vmem %s7, %s700
        %p702 = scmp.lt.s32.totalorder %s33, 1
        %s703 = scalar_select %p702, %s33, 1
        %s704 = scalar_lea.vmem %s8, %s703
        %p705 = scmp.lt.s32.totalorder %s33, 1
        %s706 = scalar_select %p705, %s33, 1
        %s707 = scalar_lea.vmem %s9, %s706
        %p708 = scmp.lt.s32.totalorder %s33, 1
        %s709 = scalar_select %p708, %s33, 1
        %s710 = smul.addr %s709, 64
        %s711 = smul.addr %s710, 4
        %s712 = scalar_lea.vmem %s10, %s711
        %p713 = scmp.lt.s32.totalorder %s33, 1
        %s714 = scalar_select %p713, %s33, 1
        %s715 = smul.addr %s714, 4
        %s716 = scalar_lea.vmem %s11, %s715
        %p717 = scmp.lt.s32.totalorder %s33, 1
        %s718 = scalar_select %p717, %s33, 1
        %s719 = smul.addr %s718, 64
        %s720 = smul.addr %s719, 4
        %s721 = scalar_lea.vmem %s12, %s720
        %p722 = scmp.lt.s32.totalorder %s33, 1
        %s723 = scalar_select %p722, %s33, 1
        %s724 = scalar_lea.vmem %s13, %s723
        %p726 = scmp.eq.s32.totalorder %s33, 0
        // Predicated region
        $region85: #{_lambda_.3} parent=83 // pred_check
          %p727 = pneg %p726
        $region86: #{_lambda_.3} parent=83 // pred_check_branch
          %729 = sbr.rel (%p727) target = $region88
        $region87: #{_lambda_.3} parent=83 // pred_region
          %v730 = vld [vmem:[%s677] sm:$0xff]
          %v731 = vld [vmem:[%s677 + $0x8] sm:$0xff]
          %v732 = vld [vmem:[%s677 + $0x10] sm:$0xff]
          %v733 = vld [vmem:[%s677 + $0x18] sm:$0xff]
          %v734 = vld [vmem:[%s677 + $0x20] sm:$0xff]
          %v735 = vld [vmem:[%s677 + $0x28] sm:$0xff]
          %736 = vst [vmem:[#allocation2] sm:$0xff] %v730
          %737 = vst [vmem:[#allocation2 + $0x8] sm:$0xff] %v731
          %738 = vst [vmem:[#allocation2 + $0x10] sm:$0xff] %v732
          %739 = vst [vmem:[#allocation2 + $0x18] sm:$0xff] %v733
          %740 = vst [vmem:[#allocation2 + $0x20] sm:$0xff] %v734
          %741 = vst [vmem:[#allocation2 + $0x28] sm:$0xff] %v735
        $region88: #{_lambda_.3} parent=83 // pred_fallthru
          _
        %v742 = vld [vmem:[#allocation2] sm:$0xff]
        %v743 = vld [vmem:[#allocation2 + $0x8] sm:$0xff]
        %v744 = vld [vmem:[#allocation2 + $0x10] sm:$0xff]
        %v745 = vld [vmem:[#allocation2 + $0x18] sm:$0xff]
        %v746 = vld [vmem:[#allocation2 + $0x20] sm:$0xff]
        %v747 = vld [vmem:[#allocation2 + $0x28] sm:$0xff]
        %v748 = vld [vmem:[%s1] sm:$0x1]
        %v749 = vld [vmem:[%s681] sm:$0x1]
        %v750 = vld [vmem:[%s684] sm:$0x1]
        %751 = vadd.xlane.f32.xlu0 %v742
        %v752 = vpop.xlane.xlu0 %751
        %753 = vadd.xlane.f32.xlu0 %v743
        %v754 = vpop.xlane.xlu0 %753
        %755 = vadd.xlane.f32.xlu0 %v744
        %v756 = vpop.xlane.xlu0 %755
        %757 = vadd.xlane.f32.xlu0 %v745
        %v758 = vpop.xlane.xlu0 %757
        %759 = vadd.xlane.f32.xlu0 %v746
        %v760 = vpop.xlane.xlu0 %759
        %761 = vadd.xlane.f32.xlu0 %v747
        %v762 = vpop.xlane.xlu0 %761
        %v763 = vrcp.pop 128.0
        %v764 = vmul.f32 %v752, %v763
        %v765 = vmul.f32 %v754, %v763
        %v766 = vmul.f32 %v756, %v763
        %v767 = vmul.f32 %v758, %v763
        %v768 = vmul.f32 %v760, %v763
        %v769 = vmul.f32 %v762, %v763
        %v770 = vsub.f32 %v742, %v764
        %v771 = vsub.f32 %v743, %v765
        %v772 = vsub.f32 %v744, %v766
        %v773 = vsub.f32 %v745, %v767
        %v774 = vsub.f32 %v746, %v768
        %v775 = vsub.f32 %v747, %v769
        %v776 = vmul.f32 %v770, %v770
        %v777 = vmul.f32 %v771, %v771
        %v778 = vmul.f32 %v772, %v772
        %v779 = vmul.f32 %v773, %v773
        %v780 = vmul.f32 %v774, %v774
        %v781 = vmul.f32 %v775, %v775
        %782 = vadd.xlane.f32.xlu0 %v776
        %v783 = vpop.xlane.xlu0 %782
        %784 = vadd.xlane.f32.xlu0 %v777
        %v785 = vpop.xlane.xlu0 %784
        %786 = vadd.xlane.f32.xlu0 %v778
        %v787 = vpop.xlane.xlu0 %786
        %788 = vadd.xlane.f32.xlu0 %v779
        %v789 = vpop.xlane.xlu0 %788
        %790 = vadd.xlane.f32.xlu0 %v780
        %v791 = vpop.xlane.xlu0 %790
        %792 = vadd.xlane.f32.xlu0 %v781
        %v793 = vpop.xlane.xlu0 %792
        %v794 = vmul.f32 %v783, %v763
        %v795 = vmul.f32 %v785, %v763
        %v796 = vmul.f32 %v787, %v763
        %v797 = vmul.f32 %v789, %v763
        %v798 = vmul.f32 %v791, %v763
        %v799 = vmul.f32 %v793, %v763
        %v800 = vadd.f32 %v794, 1e-06
        %v801 = vadd.f32 %v795, 1e-06
        %v802 = vadd.f32 %v796, 1e-06
        %v803 = vadd.f32 %v797, 1e-06
        %v804 = vadd.f32 %v798, 1e-06
        %v805 = vadd.f32 %v799, 1e-06
        %v806 = vrsqrt.pop %v800
        %v807 = vrsqrt.pop %v801
        %v808 = vrsqrt.pop %v802
        %v809 = vrsqrt.pop %v803
        %v810 = vrsqrt.pop %v804
        %v811 = vrsqrt.pop %v805
        %v812 = vmul.f32 %v770, %v806
        %v813 = vmul.f32 %v771, %v807
        %v814 = vmul.f32 %v772, %v808
        %v815 = vmul.f32 %v773, %v809
        %v816 = vmul.f32 %v774, %v810
        %v817 = vmul.f32 %v775, %v811
        %v819 = vlaneseq
        %v820 = vshrl.u32 %v819, 7
        %v821 = vsub.s32 0, %v820
        %v822 = vrot.slane %v749, %v821
        %v824 = vmul.f32 %v812, %v822
        %v825 = vmul.f32 %v813, %v822
        %v826 = vmul.f32 %v814, %v822
        %v827 = vmul.f32 %v815, %v822
        %v828 = vmul.f32 %v816, %v822
        %v829 = vmul.f32 %v817, %v822
        %v831 = vlaneseq
        %v832 = vshrl.u32 %v831, 7
        %v833 = vsub.s32 0, %v832
        %v834 = vrot.slane %v750, %v833
        %v836 = vadd.f32 %v824, %v834
        %v837 = vadd.f32 %v825, %v834
        %v838 = vadd.f32 %v826, %v834
        %v839 = vadd.f32 %v827, %v834
        %v840 = vadd.f32 %v828, %v834
        %v841 = vadd.f32 %v829, %v834
        %v842 = vpack.c.bf16 %v837, %v836
        %v843 = vpack.c.bf16 %v839, %v838
        %v844 = vpack.c.bf16 %v841, %v840
        %v845 = vld [vmem:[%s689] sm:$0xff]
        %v846 = vld [vmem:[%s689 + $0x8] sm:$0xf]
        %v847 = vld [vmem:[%s689 + $0xc] sm:$0xff]
        %v848 = vld [vmem:[%s689 + $0x14] sm:$0xf]
        %v849 = vld [vmem:[%s689 + $0x18] sm:$0xff]
        %v850 = vld [vmem:[%s689 + $0x20] sm:$0xf]
        %v851 = vld [vmem:[%s689 + $0x24] sm:$0xff]
        %v852 = vld [vmem:[%s689 + $0x2c] sm:$0xf]
        %v853 = vld [vmem:[%s689 + $0x30] sm:$0xff]
        %v854 = vld [vmem:[%s689 + $0x38] sm:$0xf]
        %v855 = vld [vmem:[%s689 + $0x3c] sm:$0xff]
        %v856 = vld [vmem:[%s689 + $0x44] sm:$0xf]
        %v857 = vld [vmem:[%s689 + $0x48] sm:$0xff]
        %v858 = vld [vmem:[%s689 + $0x50] sm:$0xf]
        %v859 = vld [vmem:[%s689 + $0x54] sm:$0xff]
        %v860 = vld [vmem:[%s689 + $0x5c] sm:$0xf]
        %v861 = vld [vmem:[%s689 + $0x60] sm:$0xff]
        %v862 = vld [vmem:[%s689 + $0x68] sm:$0xf]
        %v863 = vld [vmem:[%s689 + $0x6c] sm:$0xff]
        %v864 = vld [vmem:[%s689 + $0x74] sm:$0xf]
        %v865 = vld [vmem:[%s689 + $0x78] sm:$0xff]
        %v866 = vld [vmem:[%s689 + $0x80] sm:$0xf]
        %v867 = vld [vmem:[%s689 + $0x84] sm:$0xff]
        %v868 = vld [vmem:[%s689 + $0x8c] sm:$0xf]
        %v869 = vld [vmem:[%s689 + $0x90] sm:$0xff]
        %v870 = vld [vmem:[%s689 + $0x98] sm:$0xf]
        %v871 = vld [vmem:[%s689 + $0x9c] sm:$0xff]
        %v872 = vld [vmem:[%s689 + $0xa4] sm:$0xf]
        %v873 = vld [vmem:[%s689 + $0xa8] sm:$0xff]
        %v874 = vld [vmem:[%s689 + $0xb0] sm:$0xf]
        %v875 = vld [vmem:[%s689 + $0xb4] sm:$0xff]
        %v876 = vld [vmem:[%s689 + $0xbc] sm:$0xf]
        %v877 = vld [vmem:[%s693] sm:$0x7]
        %v879 = vlaneseq
        %v880 = vshrl.u32 %v879, 7
        %v881 = vsub.s32 0, %v880
        %v882 = vrot.slane %v877, %v881
        %v883 = vlaneseq
        %v884 = vshrl.u32 %v883, 7
        %v885 = vsub.s32 1, %v884
        %v886 = vrot.slane %v877, %v885
        %v887 = vlaneseq
        %v888 = vshrl.u32 %v887, 7
        %v889 = vsub.s32 2, %v888
        %v890 = vrot.slane %v877, %v889
        %v926 = vunpack.c.l.b16 %v845
        %v927 = vunpack.c.h.b16 %v845
        %v928 = vunpack.c.l.b16 %v846
        %v929 = vunpack.c.l.b16 %v847
        %v930 = vunpack.c.h.b16 %v847
        %v931 = vunpack.c.l.b16 %v848
        %v932 = vunpack.c.l.b16 %v849
        %v933 = vunpack.c.h.b16 %v849
        %v934 = vunpack.c.l.b16 %v850
        %v935 = vunpack.c.l.b16 %v851
        %v936 = vunpack.c.h.b16 %v851
        %v937 = vunpack.c.l.b16 %v852
        %v938 = vunpack.c.l.b16 %v853
        %v939 = vunpack.c.h.b16 %v853
        %v940 = vunpack.c.l.b16 %v854
        %v941 = vunpack.c.l.b16 %v855
        %v942 = vunpack.c.h.b16 %v855
        %v943 = vunpack.c.l.b16 %v856
        %v944 = vunpack.c.l.b16 %v857
        %v945 = vunpack.c.h.b16 %v857
        %v946 = vunpack.c.l.b16 %v858
        %v947 = vunpack.c.l.b16 %v859
        %v948 = vunpack.c.h.b16 %v859
        %v949 = vunpack.c.l.b16 %v860
        %v950 = vunpack.c.l.b16 %v861
        %v951 = vunpack.c.h.b16 %v861
        %v952 = vunpack.c.l.b16 %v862
        %v953 = vunpack.c.l.b16 %v863
        %v954 = vunpack.c.h.b16 %v863
        %v955 = vunpack.c.l.b16 %v864
        %v956 = vunpack.c.l.b16 %v865
        %v957 = vunpack.c.h.b16 %v865
        %v958 = vunpack.c.l.b16 %v866
        %v959 = vunpack.c.l.b16 %v867
        %v960 = vunpack.c.h.b16 %v867
        %v961 = vunpack.c.l.b16 %v868
        %v962 = vunpack.c.l.b16 %v869
        %v963 = vunpack.c.h.b16 %v869
        %v964 = vunpack.c.l.b16 %v870
        %v965 = vunpack.c.l.b16 %v871
        %v966 = vunpack.c.h.b16 %v871
        %v967 = vunpack.c.l.b16 %v872
        %v968 = vunpack.c.l.b16 %v873
        %v969 = vunpack.c.h.b16 %v873
        %v970 = vunpack.c.l.b16 %v874
        %v971 = vunpack.c.l.b16 %v875
        %v972 = vunpack.c.h.b16 %v875
        %v973 = vunpack.c.l.b16 %v876
        %v974 = vpack.c.b16 %v929, %v926
        %v975 = vpack.c.b16 %v930, %v927
        %v976 = vpack.c.b16 %v931, %v928
        %v977 = vpack.c.b16 %v935, %v932
        %v978 = vpack.c.b16 %v936, %v933
        %v979 = vpack.c.b16 %v937, %v934
        %v980 = vpack.c.b16 %v941, %v938
        %v981 = vpack.c.b16 %v942, %v939
        %v982 = vpack.c.b16 %v943, %v940
        %v983 = vpack.c.b16 %v947, %v944
        %v984 = vpack.c.b16 %v948, %v945
        %v985 = vpack.c.b16 %v949, %v946
        %v986 = vpack.c.b16 %v953, %v950
        %v987 = vpack.c.b16 %v954, %v951
        %v988 = vpack.c.b16 %v955, %v952
        %v989 = vpack.c.b16 %v959, %v956
        %v990 = vpack.c.b16 %v960, %v957
        %v991 = vpack.c.b16 %v961, %v958
        %v992 = vpack.c.b16 %v965, %v962
        %v993 = vpack.c.b16 %v966, %v963
        %v994 = vpack.c.b16 %v967, %v964
        %v995 = vpack.c.b16 %v971, %v968
        %v996 = vpack.c.b16 %v972, %v969
        %v997 = vpack.c.b16 %v973, %v970
        %1022 = vmatprep.subr.bf16.mxu0 %v975
        %1023 = vmatpush1.bf16.msra.mxu0 %v974
        %1024 = vmatprep.subr.bf16.mxu0 %v978
        %1025 = vmatpush1.bf16.msra.mxu0 %v977
        %1026 = vmatprep.subr.bf16.mxu0 %v981
        %1027 = vmatpush1.bf16.msra.mxu0 %v980
        %1028 = vmatprep.subr.bf16.mxu0 %v984
        %1029 = vmatpush1.bf16.msra.mxu0 %v983
        %1030 = vmatprep.subr.bf16.mxu0 %v987
        %1031 = vmatpush1.bf16.msra.mxu0 %v986
        %1032 = vmatprep.subr.bf16.mxu0 %v990
        %1033 = vmatpush1.bf16.msra.mxu0 %v989
        %1034 = vmatprep.subr.bf16.mxu0 %v993
        %1035 = vmatpush1.bf16.msra.mxu0 %v992
        %1036 = vmatprep.subr.bf16.mxu0 %v996
        %1037 = vmatpush1.bf16.msra.mxu0 %v995
        %1038 = vmatprep.subr.bf16.mxu0 0
        %1039 = vmatpush1.bf16.msra.mxu0 0
        %1040 = vmatprep.subr.bf16.mxu0 0
        %1041 = vmatpush1.bf16.msra.mxu0 0
        %1042 = vmatprep.subr.bf16.mxu0 0
        %1043 = vmatpush1.bf16.msra.mxu0 0
        %1044 = vmatprep.subr.bf16.mxu0 0
        %1045 = vmatpush1.bf16.msra.mxu0 0
        %1046 = vmatprep.subr.bf16.mxu0 0
        %1047 = vmatpush1.bf16.msra.mxu0 0
        %1048 = vmatprep.subr.bf16.mxu0 0
        %1049 = vmatpush1.bf16.msra.mxu0 0
        %1050 = vmatprep.subr.bf16.mxu0 0
        %1051 = vmatpush1.bf16.msra.mxu0 0
        %1052 = vmatprep.subr.bf16.mxu0 0
        %1053 = vmatpush1.bf16.msra.mxu0 0
        %1054 = vmatprep.mubr.bf16.mxu0 0
        %1055 = vmatmul.mubr.bf16.gmra.mrb[0].mxu0 %v842
        %v1056 = vpop.f32.mrb[0].mxu0
        %v1057 = vadd.f32 %v882, %v1056
        %v1058 = vpop.f32.mrb[0].mxu0
        %v1059 = vadd.f32 %v886, %v1058
        %v1060 = vpop.f32.mrb[0].mxu0
        %v1061 = vadd.f32 %v882, %v1060
        %v1062 = vpop.f32.mrb[0].mxu0
        %v1063 = vadd.f32 %v886, %v1062
        %1064 = vmatprep.mubr.bf16.mxu0 0
        %1065 = vmatmul.mubr.bf16.gmra.mrb[0].mxu0 %v843
        %v1066 = vpop.f32.mrb[0].mxu0
        %v1067 = vadd.f32 %v882, %v1066
        %v1068 = vpop.f32.mrb[0].mxu0
        %v1069 = vadd.f32 %v886, %v1068
        %v1070 = vpop.f32.mrb[0].mxu0
        %v1071 = vadd.f32 %v882, %v1070
        %v1072 = vpop.f32.mrb[0].mxu0
        %v1073 = vadd.f32 %v886, %v1072
        %1074 = vmatprep.mubr.bf16.mxu0 0
        %1075 = vmatmul.mubr.bf16.gmra.mrb[0].mxu0 %v844
        %v1076 = vpop.f32.mrb[0].mxu0
        %v1077 = vadd.f32 %v882, %v1076
        %v1078 = vpop.f32.mrb[0].mxu0
        %v1079 = vadd.f32 %v886, %v1078
        %v1080 = vpop.f32.mrb[0].mxu0
        %v1081 = vadd.f32 %v882, %v1080
        %v1082 = vpop.f32.mrb[0].mxu0
        %v1083 = vadd.f32 %v886, %v1082
        %1084 = vdwg.mxu0
        %1085 = vmatprep.subr.bf16.mxu0 0
        %1086 = vmatpush1.bf16.msra.mxu0 %v976
        %1087 = vmatprep.subr.bf16.mxu0 0
        %1088 = vmatpush1.bf16.msra.mxu0 %v979
        %1089 = vmatprep.subr.bf16.mxu0 0
        %1090 = vmatpush1.bf16.msra.mxu0 %v982
        %1091 = vmatprep.subr.bf16.mxu0 0
        %1092 = vmatpush1.bf16.msra.mxu0 %v985
        %1093 = vmatprep.subr.bf16.mxu0 0
        %1094 = vmatpush1.bf16.msra.mxu0 %v988
        %1095 = vmatprep.subr.bf16.mxu0 0
        %1096 = vmatpush1.bf16.msra.mxu0 %v991
        %1097 = vmatprep.subr.bf16.mxu0 0
        %1098 = vmatpush1.bf16.msra.mxu0 %v994
        %1099 = vmatprep.subr.bf16.mxu0 0
        %1100 = vmatpush1.bf16.msra.mxu0 %v997
        %1101 = vmatprep.subr.bf16.mxu0 0
        %1102 = vmatpush1.bf16.msra.mxu0 0
        %1103 = vmatprep.subr.bf16.mxu0 0
        %1104 = vmatpush1.bf16.msra.mxu0 0
        %1105 = vmatprep.subr.bf16.mxu0 0
        %1106 = vmatpush1.bf16.msra.mxu0 0
        %1107 = vmatprep.subr.bf16.mxu0 0
        %1108 = vmatpush1.bf16.msra.mxu0 0
        %1109 = vmatprep.subr.bf16.mxu0 0
        %1110 = vmatpush1.bf16.msra.mxu0 0
        %1111 = vmatprep.subr.bf16.mxu0 0
        %1112 = vmatpush1.bf16.msra.mxu0 0
        %1113 = vmatprep.subr.bf16.mxu0 0
        %1114 = vmatpush1.bf16.msra.mxu0 0
        %1115 = vmatprep.subr.bf16.mxu0 0
        %1116 = vmatpush1.bf16.msra.mxu0 0
        %1117 = vmatprep.mubr.bf16.mxu0 0
        %1118 = vmatmul.mubr.bf16.gmra.mrb[0].mxu0 %v842
        %v1119 = vpop.f32.mrb[0].mxu0
        %v1120 = vadd.f32 %v890, %v1119
        %v1121 = vpop.f32.mrb[0].mxu0
        %v1122 = vpop.f32.mrb[0].mxu0
        %v1123 = vadd.f32 %v890, %v1122
        %v1124 = vpop.f32.mrb[0].mxu0
        %1125 = vmatprep.mubr.bf16.mxu0 0
        %1126 = vmatmul.mubr.bf16.gmra.mrb[0].mxu0 %v843
        %v1127 = vpop.f32.mrb[0].mxu0
        %v1128 = vadd.f32 %v890, %v1127
        %v1129 = vpop.f32.mrb[0].mxu0
        %v1130 = vpop.f32.mrb[0].mxu0
        %v1131 = vadd.f32 %v890, %v1130
        %v1132 = vpop.f32.mrb[0].mxu0
        %1133 = vmatprep.mubr.bf16.mxu0 0
        %1134 = vmatmul.mubr.bf16.gmra.mrb[0].mxu0 %v844
        %v1135 = vpop.f32.mrb[0].mxu0
        %v1136 = vadd.f32 %v890, %v1135
        %v1137 = vpop.f32.mrb[0].mxu0
        %v1138 = vpop.f32.mrb[0].mxu0
        %v1139 = vadd.f32 %v890, %v1138
        %v1140 = vpop.f32.mrb[0].mxu0
        %1141 = vdwg.mxu0
        %v1142 = vpack.c.bf16 %v1061, %v1057
        %v1143 = vpack.c.bf16 %v1063, %v1059
        %v1144 = vpack.c.bf16 %v1123, %v1120
        %v1145 = vpack.c.bf16 %v1071, %v1067
        %v1146 = vpack.c.bf16 %v1073, %v1069
        %v1147 = vpack.c.bf16 %v1131, %v1128
        %v1148 = vpack.c.bf16 %v1081, %v1077
        %v1149 = vpack.c.bf16 %v1083, %v1079
        %v1150 = vpack.c.bf16 %v1139, %v1136
        %vm1151 = vcmask 261120
        %v1153 = vsel %vm1151, %v1142, 0
        %v1156 = vsel %vm1151, %v1145, 0
        %v1159 = vsel %vm1151, %v1143, 0
        %v1162 = vsel %vm1151, %v1146, 0
        %1164 = vmatprep.subr.bf16.mxu0 0
        %1165 = vmatpush1.bf16.xpose.msra.mxu0 %v1159
        %1166 = vmatprep.subr.bf16.mxu0 0
        %1167 = vmatpush1.bf16.xpose.msra.mxu0 %v1162
        %1168 = vmatprep.subr.bf16.mxu0 0
        %1169 = vmatpush1.bf16.xpose.msra.mxu0 0
        %1170 = vmatprep.subr.bf16.mxu0 0
        %1171 = vmatpush1.bf16.xpose.msra.mxu0 0
        %1172 = vmatprep.subr.bf16.mxu0 0
        %1173 = vmatpush1.bf16.xpose.msra.mxu0 0
        %1174 = vmatprep.subr.bf16.mxu0 0
        %1175 = vmatpush1.bf16.xpose.msra.mxu0 0
        %1176 = vmatprep.subr.bf16.mxu0 0
        %1177 = vmatpush1.bf16.xpose.msra.mxu0 0
        %1178 = vmatprep.subr.bf16.mxu0 0
        %1179 = vmatpush1.bf16.xpose.msra.mxu0 0
        %1180 = vmatprep.subr.bf16.mxu0 0
        %1181 = vmatpush1.bf16.xpose.msra.mxu0 0
        %1182 = vmatprep.subr.bf16.mxu0 0
        %1183 = vmatpush1.bf16.xpose.msra.mxu0 0
        %1184 = vmatprep.subr.bf16.mxu0 0
        %1185 = vmatpush1.bf16.xpose.msra.mxu0 0
        %1186 = vmatprep.subr.bf16.mxu0 0
        %1187 = vmatpush1.bf16.xpose.msra.mxu0 0
        %1188 = vmatprep.subr.bf16.mxu0 0
        %1189 = vmatpush1.bf16.xpose.msra.mxu0 0
        %1190 = vmatprep.subr.bf16.mxu0 0
        %1191 = vmatpush1.bf16.xpose.msra.mxu0 0
        %1192 = vmatprep.subr.bf16.mxu0 0
        %1193 = vmatpush1.bf16.xpose.msra.mxu0 0
        %1194 = vmatprep.subr.bf16.mxu0 0
        %1195 = vmatpush1.bf16.xpose.msra.mxu0 0
        %1196 = vmatprep.mubr.bf16.mxu0 0
        %1197 = vmatmul.mubr.bf16.gmra.mrb[0].mxu0 %v1153
        %v1198 = vpop.f32.mrb[0].mxu0
        %v1199 = vadd.f32 0.0, %v1198
        %v1200 = vpop.f32.mrb[0].mxu0
        %v1201 = vpop.f32.mrb[0].mxu0
        %v1202 = vadd.f32 0.0, %v1201
        %v1203 = vpop.f32.mrb[0].mxu0
        %1204 = vmatprep.mubr.bf16.mxu0 0
        %1205 = vmatmul.mubr.bf16.gmra.mrb[0].mxu0 %v1156
        %v1206 = vpop.f32.mrb[0].mxu0
        %v1207 = vadd.f32 0.0, %v1206
        %v1208 = vpop.f32.mrb[0].mxu0
        %v1209 = vpop.f32.mrb[0].mxu0
        %v1210 = vpop.f32.mrb[0].mxu0
        %1211 = vdwg.mxu0
        %v1212 = vmul.f32 %v1199, 0.17677669
        %v1213 = vmul.f32 %v1202, 0.17677669
        %v1214 = vmul.f32 %v1207, 0.17677669
        %v1216 = vlaneseq
        %v1217 = vshrl.u32 %v1216, 7
        %v1218 = vsub.s32 0, %v1217
        %v1219 = vrot.slane %v748, %v1218
        %v1221 = vadd.f32 %v1212, %v1219
        %v1222 = vadd.f32 %v1213, %v1219
        %v1223 = vadd.f32 %v1214, %v1219
        %vm1224 = vcmask 195584
        %v1225 = vsel %vm1224, %v1221, -inf
        %1226 = vmax.xlane.f32.xlu0 %v1225
        %v1227 = vpop.xlane.xlu0 %1226
        %v1228 = vsel %vm1224, %v1222, -inf
        %1229 = vmax.xlane.f32.xlu0 %v1228
        %v1230 = vpop.xlane.xlu0 %1229
        %v1231 = vsel %vm1224, %v1223, -inf
        %1232 = vmax.xlane.f32.xlu0 %v1231
        %v1233 = vpop.xlane.xlu0 %1232
        %v1234 = vsub.f32 %v1221, %v1227
        %v1235 = vsub.f32 %v1222, %v1230
        %v1236 = vsub.f32 %v1223, %v1233
        %v1237 = vmul.f32 %v1234, 1.442695
        %v1238 = vpow.pop %v1237
        %v1239 = vmul.f32 %v1235, 1.442695
        %v1240 = vpow.pop %v1239
        %v1241 = vmul.f32 %v1236, 1.442695
        %v1242 = vpow.pop %v1241
        %v1243 = vsel %vm1224, %v1238, 0.0
        %1244 = vadd.xlane.f32.xlu0 %v1243
        %v1245 = vpop.xlane.xlu0 %1244
        %v1246 = vsel %vm1224, %v1240, 0.0
        %1247 = vadd.xlane.f32.xlu0 %v1246
        %v1248 = vpop.xlane.xlu0 %1247
        %v1249 = vsel %vm1224, %v1242, 0.0
        %1250 = vadd.xlane.f32.xlu0 %v1249
        %v1251 = vpop.xlane.xlu0 %1250
        %v1252 = vrcp.pop %v1245
        %v1253 = vrcp.pop %v1248
        %v1254 = vrcp.pop %v1251
        %v1255 = vmul.f32 %v1238, %v1252
        %v1256 = vmul.f32 %v1240, %v1253
        %v1257 = vmul.f32 %v1242, %v1254
        %v1258 = vpack.c.bf16 %v1256, %v1255
        %v1259 = vpack.c.bf16 %v1257, %v1257
        %v1261 = vsel %vm1224, %v1258, 0
        %v1264 = vsel %vm1224, %v1259, 0
        %vm1266 = vcmask 1043456
        %v1268 = vsel %vm1266, %v1147, 0
        %1270 = vmatprep.subr.bf16.mxu0 0
        %1271 = vmatpush1.bf16.msra.mxu0 %v1144
        %1272 = vmatprep.subr.bf16.mxu0 0
        %1273 = vmatpush1.bf16.msra.mxu0 %v1268
        %1274 = vmatprep.subr.bf16.mxu0 0
        %1275 = vmatpush1.bf16.msra.mxu0 0
        %1276 = vmatprep.subr.bf16.mxu0 0
        %1277 = vmatpush1.bf16.msra.mxu0 0
        %1278 = vmatprep.subr.bf16.mxu0 0
        %1279 = vmatpush1.bf16.msra.mxu0 0
        %1280 = vmatprep.subr.bf16.mxu0 0
        %1281 = vmatpush1.bf16.msra.mxu0 0
        %1282 = vmatprep.subr.bf16.mxu0 0
        %1283 = vmatpush1.bf16.msra.mxu0 0
        %1284 = vmatprep.subr.bf16.mxu0 0
        %1285 = vmatpush1.bf16.msra.mxu0 0
        %1286 = vmatprep.subr.bf16.mxu0 0
        %1287 = vmatpush1.bf16.msra.mxu0 0
        %1288 = vmatprep.subr.bf16.mxu0 0
        %1289 = vmatpush1.bf16.msra.mxu0 0
        %1290 = vmatprep.subr.bf16.mxu0 0
        %1291 = vmatpush1.bf16.msra.mxu0 0
        %1292 = vmatprep.subr.bf16.mxu0 0
        %1293 = vmatpush1.bf16.msra.mxu0 0
        %1294 = vmatprep.subr.bf16.mxu0 0
        %1295 = vmatpush1.bf16.msra.mxu0 0
        %1296 = vmatprep.subr.bf16.mxu0 0
        %1297 = vmatpush1.bf16.msra.mxu0 0
        %1298 = vmatprep.subr.bf16.mxu0 0
        %1299 = vmatpush1.bf16.msra.mxu0 0
        %1300 = vmatprep.subr.bf16.mxu0 0
        %1301 = vmatpush1.bf16.msra.mxu0 0
        %1302 = vmatprep.mubr.bf16.mxu0 0
        %1303 = vmatmul.mubr.bf16.gmra.mrb[0].mxu0 %v1261
        %v1304 = vpop.f32.mrb[0].mxu0
        %v1305 = vadd.f32 0.0, %v1304
        %v1306 = vpop.f32.mrb[0].mxu0
        %v1307 = vpop.f32.mrb[0].mxu0
        %v1308 = vadd.f32 0.0, %v1307
        %v1309 = vpop.f32.mrb[0].mxu0
        %1310 = vmatprep.mubr.bf16.mxu0 0
        %1311 = vmatmul.mubr.bf16.gmra.mrb[0].mxu0 %v1264
        %v1312 = vpop.f32.mrb[0].mxu0
        %v1313 = vadd.f32 0.0, %v1312
        %v1314 = vpop.f32.mrb[0].mxu0
        %v1315 = vpop.f32.mrb[0].mxu0
        %v1316 = vpop.f32.mrb[0].mxu0
        %1317 = vdwg.mxu0
        %1318 = vst.msk [vmem:[#allocation3] sm:$0xff] %vm1151, %v1305
        %1319 = vst.msk [vmem:[#allocation3 + $0x8] sm:$0xff] %vm1151, %v1308
        %1320 = vst.msk [vmem:[#allocation3 + $0x10] sm:$0xff] %vm1151, %v1313
        %1323 = vrot.lane.b32.xlu0 %v1142, 96
        %v1324 = vpop.permute.xlu0 %1323
        %1325 = vrot.lane.b32.xlu0 %v1145, 96
        %v1326 = vpop.permute.xlu0 %1325
        %1329 = vrot.lane.b32.xlu0 %v1143, 96
        %v1330 = vpop.permute.xlu0 %1329
        %1331 = vrot.lane.b32.xlu0 %v1146, 96
        %v1332 = vpop.permute.xlu0 %1331
        %v1334 = vsel %vm1151, %v1324, 0
        %v1337 = vsel %vm1151, %v1326, 0
        %v1340 = vsel %vm1151, %v1330, 0
        %v1343 = vsel %vm1151, %v1332, 0
        %1345 = vmatprep.subr.bf16.mxu0 0
        %1346 = vmatpush1.bf16.xpose.msra.mxu0 %v1340
        %1347 = vmatprep.subr.bf16.mxu0 0
        %1348 = vmatpush1.bf16.xpose.msra.mxu0 %v1343
        %1349 = vmatprep.subr.bf16.mxu0 0
        %1350 = vmatpush1.bf16.xpose.msra.mxu0 0
        %1351 = vmatprep.subr.bf16.mxu0 0
        %1352 = vmatpush1.bf16.xpose.msra.mxu0 0
        %1353 = vmatprep.subr.bf16.mxu0 0
        %1354 = vmatpush1.bf16.xpose.msra.mxu0 0
        %1355 = vmatprep.subr.bf16.mxu0 0
        %1356 = vmatpush1.bf16.xpose.msra.mxu0 0
        %1357 = vmatprep.subr.bf16.mxu0 0
        %1358 = vmatpush1.bf16.xpose.msra.mxu0 0
        %1359 = vmatprep.subr.bf16.mxu0 0
        %1360 = vmatpush1.bf16.xpose.msra.mxu0 0
        %1361 = vmatprep.subr.bf16.mxu0 0
        %1362 = vmatpush1.bf16.xpose.msra.mxu0 0
        %1363 = vmatprep.subr.bf16.mxu0 0
        %1364 = vmatpush1.bf16.xpose.msra.mxu0 0
        %1365 = vmatprep.subr.bf16.mxu0 0
        %1366 = vmatpush1.bf16.xpose.msra.mxu0 0
        %1367 = vmatprep.subr.bf16.mxu0 0
        %1368 = vmatpush1.bf16.xpose.msra.mxu0 0
        %1369 = vmatprep.subr.bf16.mxu0 0
        %1370 = vmatpush1.bf16.xpose.msra.mxu0 0
        %1371 = vmatprep.subr.bf16.mxu0 0
        %1372 = vmatpush1.bf16.xpose.msra.mxu0 0
        %1373 = vmatprep.subr.bf16.mxu0 0
        %1374 = vmatpush1.bf16.xpose.msra.mxu0 0
        %1375 = vmatprep.subr.bf16.mxu0 0
        %1376 = vmatpush1.bf16.xpose.msra.mxu0 0
        %1377 = vmatprep.mubr.bf16.mxu0 0
        %1378 = vmatmul.mubr.bf16.gmra.mrb[0].mxu0 %v1334
        %v1379 = vpop.f32.mrb[0].mxu0
        %v1380 = vadd.f32 0.0, %v1379
        %v1381 = vpop.f32.mrb[0].mxu0
        %v1382 = vpop.f32.mrb[0].mxu0
        %v1383 = vadd.f32 0.0, %v1382
        %v1384 = vpop.f32.mrb[0].mxu0
        %1385 = vmatprep.mubr.bf16.mxu0 0
        %1386 = vmatmul.mubr.bf16.gmra.mrb[0].mxu0 %v1337
        %v1387 = vpop.f32.mrb[0].mxu0
        %v1388 = vadd.f32 0.0, %v1387
        %v1389 = vpop.f32.mrb[0].mxu0
        %v1390 = vpop.f32.mrb[0].mxu0
        %v1391 = vpop.f32.mrb[0].mxu0
        %1392 = vdwg.mxu0
        %v1393 = vmul.f32 %v1380, 0.17677669
        %v1394 = vmul.f32 %v1383, 0.17677669
        %v1395 = vmul.f32 %v1388, 0.17677669
        %v1396 = vadd.f32 %v1393, %v1219
        %v1397 = vadd.f32 %v1394, %v1219
        %v1398 = vadd.f32 %v1395, %v1219
        %v1399 = vsel %vm1224, %v1396, -inf
        %1400 = vmax.xlane.f32.xlu0 %v1399
        %v1401 = vpop.xlane.xlu0 %1400
        %v1402 = vsel %vm1224, %v1397, -inf
        %1403 = vmax.xlane.f32.xlu0 %v1402
        %v1404 = vpop.xlane.xlu0 %1403
        %v1405 = vsel %vm1224, %v1398, -inf
        %1406 = vmax.xlane.f32.xlu0 %v1405
        %v1407 = vpop.xlane.xlu0 %1406
        %v1408 = vsub.f32 %v1396, %v1401
        %v1409 = vsub.f32 %v1397, %v1404
        %v1410 = vsub.f32 %v1398, %v1407
        %v1411 = vmul.f32 %v1408, 1.442695
        %v1412 = vpow.pop %v1411
        %v1413 = vmul.f32 %v1409, 1.442695
        %v1414 = vpow.pop %v1413
        %v1415 = vmul.f32 %v1410, 1.442695
        %v1416 = vpow.pop %v1415
        %v1417 = vsel %vm1224, %v1412, 0.0
        %1418 = vadd.xlane.f32.xlu0 %v1417
        %v1419 = vpop.xlane.xlu0 %1418
        %v1420 = vsel %vm1224, %v1414, 0.0
        %1421 = vadd.xlane.f32.xlu0 %v1420
        %v1422 = vpop.xlane.xlu0 %1421
        %v1423 = vsel %vm1224, %v1416, 0.0
        %1424 = vadd.xlane.f32.xlu0 %v1423
        %v1425 = vpop.xlane.xlu0 %1424
        %v1426 = vrcp.pop %v1419
        %v1427 = vrcp.pop %v1422
        %v1428 = vrcp.pop %v1425
        %v1429 = vmul.f32 %v1412, %v1426
        %v1430 = vmul.f32 %v1414, %v1427
        %v1431 = vmul.f32 %v1416, %v1428
        %v1432 = vpack.c.bf16 %v1430, %v1429
        %v1433 = vpack.c.bf16 %v1431, %v1431
        %1436 = vrot.lane.b32.xlu0 %v1144, 96
        %v1437 = vpop.permute.xlu0 %1436
        %1438 = vrot.lane.b32.xlu0 %v1147, 96
        %v1439 = vpop.permute.xlu0 %1438
        %v1442 = vsel %vm1224, %v1432, 0
        %v1445 = vsel %vm1224, %v1433, 0
        %v1448 = vsel %vm1266, %v1439, 0
        %1450 = vmatprep.subr.bf16.mxu0 0
        %1451 = vmatpush1.bf16.msra.mxu0 %v1437
        %1452 = vmatprep.subr.bf16.mxu0 0
        %1453 = vmatpush1.bf16.msra.mxu0 %v1448
        %1454 = vmatprep.subr.bf16.mxu0 0
        %1455 = vmatpush1.bf16.msra.mxu0 0
        %1456 = vmatprep.subr.bf16.mxu0 0
        %1457 = vmatpush1.bf16.msra.mxu0 0
        %1458 = vmatprep.subr.bf16.mxu0 0
        %1459 = vmatpush1.bf16.msra.mxu0 0
        %1460 = vmatprep.subr.bf16.mxu0 0
        %1461 = vmatpush1.bf16.msra.mxu0 0
        %1462 = vmatprep.subr.bf16.mxu0 0
        %1463 = vmatpush1.bf16.msra.mxu0 0
        %1464 = vmatprep.subr.bf16.mxu0 0
        %1465 = vmatpush1.bf16.msra.mxu0 0
        %1466 = vmatprep.subr.bf16.mxu0 0
        %1467 = vmatpush1.bf16.msra.mxu0 0
        %1468 = vmatprep.subr.bf16.mxu0 0
        %1469 = vmatpush1.bf16.msra.mxu0 0
        %1470 = vmatprep.subr.bf16.mxu0 0
        %1471 = vmatpush1.bf16.msra.mxu0 0
        %1472 = vmatprep.subr.bf16.mxu0 0
        %1473 = vmatpush1.bf16.msra.mxu0 0
        %1474 = vmatprep.subr.bf16.mxu0 0
        %1475 = vmatpush1.bf16.msra.mxu0 0
        %1476 = vmatprep.subr.bf16.mxu0 0
        %1477 = vmatpush1.bf16.msra.mxu0 0
        %1478 = vmatprep.subr.bf16.mxu0 0
        %1479 = vmatpush1.bf16.msra.mxu0 0
        %1480 = vmatprep.subr.bf16.mxu0 0
        %1481 = vmatpush1.bf16.msra.mxu0 0
        %1482 = vmatprep.mubr.bf16.mxu0 0
        %1483 = vmatmul.mubr.bf16.gmra.mrb[0].mxu0 %v1442
        %v1484 = vpop.f32.mrb[0].mxu0
        %v1485 = vadd.f32 0.0, %v1484
        %v1486 = vpop.f32.mrb[0].mxu0
        %v1487 = vpop.f32.mrb[0].mxu0
        %v1488 = vadd.f32 0.0, %v1487
        %v1489 = vpop.f32.mrb[0].mxu0
        %1490 = vmatprep.mubr.bf16.mxu0 0
        %1491 = vmatmul.mubr.bf16.gmra.mrb[0].mxu0 %v1445
        %v1492 = vpop.f32.mrb[0].mxu0
        %v1493 = vadd.f32 0.0, %v1492
        %v1494 = vpop.f32.mrb[0].mxu0
        %v1495 = vpop.f32.mrb[0].mxu0
        %v1496 = vpop.f32.mrb[0].mxu0
        %1497 = vdwg.mxu0
        %1501 = vrot.lane.b32.xlu0 %v1485, 32
        %v1502 = vpop.permute.xlu0 %1501
        %1503 = vrot.lane.b32.xlu0 %v1488, 32
        %v1504 = vpop.permute.xlu0 %1503
        %1505 = vrot.lane.b32.xlu0 %v1493, 32
        %v1506 = vpop.permute.xlu0 %1505
        %vm1510 = vcmask 523520
        %1511 = vst.msk [vmem:[#allocation3] sm:$0xff] %vm1510, %v1502
        %1512 = vst.msk [vmem:[#allocation3 + $0x8] sm:$0xff] %vm1510, %v1504
        %1513 = vst.msk [vmem:[#allocation3 + $0x10] sm:$0xff] %vm1510, %v1506
        %1514 = vrot.lane.b32.xlu0 %v1142, 64
        %v1515 = vpop.permute.xlu0 %1514
        %1516 = vrot.lane.b32.xlu0 %v1145, 64
        %v1517 = vpop.permute.xlu0 %1516
        %1518 = vrot.lane.b32.xlu0 %v1143, 64
        %v1519 = vpop.permute.xlu0 %1518
        %1520 = vrot.lane.b32.xlu0 %v1146, 64
        %v1521 = vpop.permute.xlu0 %1520
        %v1523 = vsel %vm1151, %v1515, 0
        %v1526 = vsel %vm1151, %v1517, 0
        %v1529 = vsel %vm1151, %v1519, 0
        %v1532 = vsel %vm1151, %v1521, 0
        %1534 = vmatprep.subr.bf16.mxu0 0
        %1535 = vmatpush1.bf16.xpose.msra.mxu0 %v1529
        %1536 = vmatprep.subr.bf16.mxu0 0
        %1537 = vmatpush1.bf16.xpose.msra.mxu0 %v1532
        %1538 = vmatprep.subr.bf16.mxu0 0
        %1539 = vmatpush1.bf16.xpose.msra.mxu0 0
        %1540 = vmatprep.subr.bf16.mxu0 0
        %1541 = vmatpush1.bf16.xpose.msra.mxu0 0
        %1542 = vmatprep.subr.bf16.mxu0 0
        %1543 = vmatpush1.bf16.xpose.msra.mxu0 0
        %1544 = vmatprep.subr.bf16.mxu0 0
        %1545 = vmatpush1.bf16.xpose.msra.mxu0 0
        %1546 = vmatprep.subr.bf16.mxu0 0
        %1547 = vmatpush1.bf16.xpose.msra.mxu0 0
        %1548 = vmatprep.subr.bf16.mxu0 0
        %1549 = vmatpush1.bf16.xpose.msra.mxu0 0
        %1550 = vmatprep.subr.bf16.mxu0 0
        %1551 = vmatpush1.bf16.xpose.msra.mxu0 0
        %1552 = vmatprep.subr.bf16.mxu0 0
        %1553 = vmatpush1.bf16.xpose.msra.mxu0 0
        %1554 = vmatprep.subr.bf16.mxu0 0
        %1555 = vmatpush1.bf16.xpose.msra.mxu0 0
        %1556 = vmatprep.subr.bf16.mxu0 0
        %1557 = vmatpush1.bf16.xpose.msra.mxu0 0
        %1558 = vmatprep.subr.bf16.mxu0 0
        %1559 = vmatpush1.bf16.xpose.msra.mxu0 0
        %1560 = vmatprep.subr.bf16.mxu0 0
        %1561 = vmatpush1.bf16.xpose.msra.mxu0 0
        %1562 = vmatprep.subr.bf16.mxu0 0
        %1563 = vmatpush1.bf16.xpose.msra.mxu0 0
        %1564 = vmatprep.subr.bf16.mxu0 0
        %1565 = vmatpush1.bf16.xpose.msra.mxu0 0
        %1566 = vmatprep.mubr.bf16.mxu0 0
        %1567 = vmatmul.mubr.bf16.gmra.mrb[0].mxu0 %v1523
        %v1568 = vpop.f32.mrb[0].mxu0
        %v1569 = vadd.f32 0.0, %v1568
        %v1570 = vpop.f32.mrb[0].mxu0
        %v1571 = vpop.f32.mrb[0].mxu0
        %v1572 = vadd.f32 0.0, %v1571
        %v1573 = vpop.f32.mrb[0].mxu0
        %1574 = vmatprep.mubr.bf16.mxu0 0
        %1575 = vmatmul.mubr.bf16.gmra.mrb[0].mxu0 %v1526
        %v1576 = vpop.f32.mrb[0].mxu0
        %v1577 = vadd.f32 0.0, %v1576
        %v1578 = vpop.f32.mrb[0].mxu0
        %v1579 = vpop.f32.mrb[0].mxu0
        %v1580 = vpop.f32.mrb[0].mxu0
        %1581 = vdwg.mxu0
        %v1582 = vmul.f32 %v1569, 0.17677669
        %v1583 = vmul.f32 %v1572, 0.17677669
        %v1584 = vmul.f32 %v1577, 0.17677669
        %v1585 = vadd.f32 %v1582, %v1219
        %v1586 = vadd.f32 %v1583, %v1219
        %v1587 = vadd.f32 %v1584, %v1219
        %v1588 = vsel %vm1224, %v1585, -inf
        %1589 = vmax.xlane.f32.xlu0 %v1588
        %v1590 = vpop.xlane.xlu0 %1589
        %v1591 = vsel %vm1224, %v1586, -inf
        %1592 = vmax.xlane.f32.xlu0 %v1591
        %v1593 = vpop.xlane.xlu0 %1592
        %v1594 = vsel %vm1224, %v1587, -inf
        %1595 = vmax.xlane.f32.xlu0 %v1594
        %v1596 = vpop.xlane.xlu0 %1595
        %v1597 = vsub.f32 %v1585, %v1590
        %v1598 = vsub.f32 %v1586, %v1593
        %v1599 = vsub.f32 %v1587, %v1596
        %v1600 = vmul.f32 %v1597, 1.442695
        %v1601 = vpow.pop %v1600
        %v1602 = vmul.f32 %v1598, 1.442695
        %v1603 = vpow.pop %v1602
        %v1604 = vmul.f32 %v1599, 1.442695
        %v1605 = vpow.pop %v1604
        %v1606 = vsel %vm1224, %v1601, 0.0
        %1607 = vadd.xlane.f32.xlu0 %v1606
        %v1608 = vpop.xlane.xlu0 %1607
        %v1609 = vsel %vm1224, %v1603, 0.0
        %1610 = vadd.xlane.f32.xlu0 %v1609
        %v1611 = vpop.xlane.xlu0 %1610
        %v1612 = vsel %vm1224, %v1605, 0.0
        %1613 = vadd.xlane.f32.xlu0 %v1612
        %v1614 = vpop.xlane.xlu0 %1613
        %v1615 = vrcp.pop %v1608
        %v1616 = vrcp.pop %v1611
        %v1617 = vrcp.pop %v1614
        %v1618 = vmul.f32 %v1601, %v1615
        %v1619 = vmul.f32 %v1603, %v1616
        %v1620 = vmul.f32 %v1605, %v1617
        %v1621 = vpack.c.bf16 %v1619, %v1618
        %v1622 = vpack.c.bf16 %v1620, %v1620
        %1623 = vrot.lane.b32.xlu0 %v1144, 64
        %v1624 = vpop.permute.xlu0 %1623
        %1625 = vrot.lane.b32.xlu0 %v1147, 64
        %v1626 = vpop.permute.xlu0 %1625
        %v1629 = vsel %vm1224, %v1621, 0
        %v1632 = vsel %vm1224, %v1622, 0
        %v1635 = vsel %vm1266, %v1626, 0
        %1637 = vmatprep.subr.bf16.mxu0 0
        %1638 = vmatpush1.bf16.msra.mxu0 %v1624
        %1639 = vmatprep.subr.bf16.mxu0 0
        %1640 = vmatpush1.bf16.msra.mxu0 %v1635
        %1641 = vmatprep.subr.bf16.mxu0 0
        %1642 = vmatpush1.bf16.msra.mxu0 0
        %1643 = vmatprep.subr.bf16.mxu0 0
        %1644 = vmatpush1.bf16.msra.mxu0 0
        %1645 = vmatprep.subr.bf16.mxu0 0
        %1646 = vmatpush1.bf16.msra.mxu0 0
        %1647 = vmatprep.subr.bf16.mxu0 0
        %1648 = vmatpush1.bf16.msra.mxu0 0
        %1649 = vmatprep.subr.bf16.mxu0 0
        %1650 = vmatpush1.bf16.msra.mxu0 0
        %1651 = vmatprep.subr.bf16.mxu0 0
        %1652 = vmatpush1.bf16.msra.mxu0 0
        %1653 = vmatprep.subr.bf16.mxu0 0
        %1654 = vmatpush1.bf16.msra.mxu0 0
        %1655 = vmatprep.subr.bf16.mxu0 0
        %1656 = vmatpush1.bf16.msra.mxu0 0
        %1657 = vmatprep.subr.bf16.mxu0 0
        %1658 = vmatpush1.bf16.msra.mxu0 0
        %1659 = vmatprep.subr.bf16.mxu0 0
        %1660 = vmatpush1.bf16.msra.mxu0 0
        %1661 = vmatprep.subr.bf16.mxu0 0
        %1662 = vmatpush1.bf16.msra.mxu0 0
        %1663 = vmatprep.subr.bf16.mxu0 0
        %1664 = vmatpush1.bf16.msra.mxu0 0
        %1665 = vmatprep.subr.bf16.mxu0 0
        %1666 = vmatpush1.bf16.msra.mxu0 0
        %1667 = vmatprep.subr.bf16.mxu0 0
        %1668 = vmatpush1.bf16.msra.mxu0 0
        %1669 = vmatprep.mubr.bf16.mxu0 0
        %1670 = vmatmul.mubr.bf16.gmra.mrb[0].mxu0 %v1629
        %v1671 = vpop.f32.mrb[0].mxu0
        %v1672 = vadd.f32 0.0, %v1671
        %v1673 = vpop.f32.mrb[0].mxu0
        %v1674 = vpop.f32.mrb[0].mxu0
        %v1675 = vadd.f32 0.0, %v1674
        %v1676 = vpop.f32.mrb[0].mxu0
        %1677 = vmatprep.mubr.bf16.mxu0 0
        %1678 = vmatmul.mubr.bf16.gmra.mrb[0].mxu0 %v1632
        %v1679 = vpop.f32.mrb[0].mxu0
        %v1680 = vadd.f32 0.0, %v1679
        %v1681 = vpop.f32.mrb[0].mxu0
        %v1682 = vpop.f32.mrb[0].mxu0
        %v1683 = vpop.f32.mrb[0].mxu0
        %1684 = vdwg.mxu0
        %1688 = vrot.lane.b32.xlu0 %v1672, 64
        %v1689 = vpop.permute.xlu0 %1688
        %1690 = vrot.lane.b32.xlu0 %v1675, 64
        %v1691 = vpop.permute.xlu0 %1690
        %1692 = vrot.lane.b32.xlu0 %v1680, 64
        %v1693 = vpop.permute.xlu0 %1692
        %vm1697 = vcmask 785920
        %1698 = vst.msk [vmem:[#allocation3] sm:$0xff] %vm1697, %v1689
        %1699 = vst.msk [vmem:[#allocation3 + $0x8] sm:$0xff] %vm1697, %v1691
        %1700 = vst.msk [vmem:[#allocation3 + $0x10] sm:$0xff] %vm1697, %v1693
        %1701 = vrot.lane.b32.xlu0 %v1142, 32
        %v1702 = vpop.permute.xlu0 %1701
        %1703 = vrot.lane.b32.xlu0 %v1145, 32
        %v1704 = vpop.permute.xlu0 %1703
        %1705 = vrot.lane.b32.xlu0 %v1143, 32
        %v1706 = vpop.permute.xlu0 %1705
        %1707 = vrot.lane.b32.xlu0 %v1146, 32
        %v1708 = vpop.permute.xlu0 %1707
        %v1710 = vsel %vm1151, %v1702, 0
        %v1713 = vsel %vm1151, %v1704, 0
        %v1716 = vsel %vm1151, %v1706, 0
        %v1719 = vsel %vm1151, %v1708, 0
        %1721 = vmatprep.subr.bf16.mxu0 0
        %1722 = vmatpush1.bf16.xpose.msra.mxu0 %v1716
        %1723 = vmatprep.subr.bf16.mxu0 0
        %1724 = vmatpush1.bf16.xpose.msra.mxu0 %v1719
        %1725 = vmatprep.subr.bf16.mxu0 0
        %1726 = vmatpush1.bf16.xpose.msra.mxu0 0
        %1727 = vmatprep.subr.bf16.mxu0 0
        %1728 = vmatpush1.bf16.xpose.msra.mxu0 0
        %1729 = vmatprep.subr.bf16.mxu0 0
        %1730 = vmatpush1.bf16.xpose.msra.mxu0 0
        %1731 = vmatprep.subr.bf16.mxu0 0
        %1732 = vmatpush1.bf16.xpose.msra.mxu0 0
        %1733 = vmatprep.subr.bf16.mxu0 0
        %1734 = vmatpush1.bf16.xpose.msra.mxu0 0
        %1735 = vmatprep.subr.bf16.mxu0 0
        %1736 = vmatpush1.bf16.xpose.msra.mxu0 0
        %1737 = vmatprep.subr.bf16.mxu0 0
        %1738 = vmatpush1.bf16.xpose.msra.mxu0 0
        %1739 = vmatprep.subr.bf16.mxu0 0
        %1740 = vmatpush1.bf16.xpose.msra.mxu0 0
        %1741 = vmatprep.subr.bf16.mxu0 0
        %1742 = vmatpush1.bf16.xpose.msra.mxu0 0
        %1743 = vmatprep.subr.bf16.mxu0 0
        %1744 = vmatpush1.bf16.xpose.msra.mxu0 0
        %1745 = vmatprep.subr.bf16.mxu0 0
        %1746 = vmatpush1.bf16.xpose.msra.mxu0 0
        %1747 = vmatprep.subr.bf16.mxu0 0
        %1748 = vmatpush1.bf16.xpose.msra.mxu0 0
        %1749 = vmatprep.subr.bf16.mxu0 0
        %1750 = vmatpush1.bf16.xpose.msra.mxu0 0
        %1751 = vmatprep.subr.bf16.mxu0 0
        %1752 = vmatpush1.bf16.xpose.msra.mxu0 0
        %1753 = vmatprep.mubr.bf16.mxu0 0
        %1754 = vmatmul.mubr.bf16.gmra.mrb[0].mxu0 %v1710
        %v1755 = vpop.f32.mrb[0].mxu0
        %v1756 = vadd.f32 0.0, %v1755
        %v1757 = vpop.f32.mrb[0].mxu0
        %v1758 = vpop.f32.mrb[0].mxu0
        %v1759 = vadd.f32 0.0, %v1758
        %v1760 = vpop.f32.mrb[0].mxu0
        %1761 = vmatprep.mubr.bf16.mxu0 0
        %1762 = vmatmul.mubr.bf16.gmra.mrb[0].mxu0 %v1713
        %v1763 = vpop.f32.mrb[0].mxu0
        %v1764 = vadd.f32 0.0, %v1763
        %v1765 = vpop.f32.mrb[0].mxu0
        %v1766 = vpop.f32.mrb[0].mxu0
        %v1767 = vpop.f32.mrb[0].mxu0
        %1768 = vdwg.mxu0
        %v1769 = vmul.f32 %v1756, 0.17677669
        %v1770 = vmul.f32 %v1759, 0.17677669
        %v1771 = vmul.f32 %v1764, 0.17677669
        %v1772 = vadd.f32 %v1769, %v1219
        %v1773 = vadd.f32 %v1770, %v1219
        %v1774 = vadd.f32 %v1771, %v1219
        %v1775 = vsel %vm1224, %v1772, -inf
        %1776 = vmax.xlane.f32.xlu0 %v1775
        %v1777 = vpop.xlane.xlu0 %1776
        %v1778 = vsel %vm1224, %v1773, -inf
        %1779 = vmax.xlane.f32.xlu0 %v1778
        %v1780 = vpop.xlane.xlu0 %1779
        %v1781 = vsel %vm1224, %v1774, -inf
        %1782 = vmax.xlane.f32.xlu0 %v1781
        %v1783 = vpop.xlane.xlu0 %1782
        %v1784 = vsub.f32 %v1772, %v1777
        %v1785 = vsub.f32 %v1773, %v1780
        %v1786 = vsub.f32 %v1774, %v1783
        %v1787 = vmul.f32 %v1784, 1.442695
        %v1788 = vpow.pop %v1787
        %v1789 = vmul.f32 %v1785, 1.442695
        %v1790 = vpow.pop %v1789
        %v1791 = vmul.f32 %v1786, 1.442695
        %v1792 = vpow.pop %v1791
        %v1793 = vsel %vm1224, %v1788, 0.0
        %1794 = vadd.xlane.f32.xlu0 %v1793
        %v1795 = vpop.xlane.xlu0 %1794
        %v1796 = vsel %vm1224, %v1790, 0.0
        %1797 = vadd.xlane.f32.xlu0 %v1796
        %v1798 = vpop.xlane.xlu0 %1797
        %v1799 = vsel %vm1224, %v1792, 0.0
        %1800 = vadd.xlane.f32.xlu0 %v1799
        %v1801 = vpop.xlane.xlu0 %1800
        %v1802 = vrcp.pop %v1795
        %v1803 = vrcp.pop %v1798
        %v1804 = vrcp.pop %v1801
        %v1805 = vmul.f32 %v1788, %v1802
        %v1806 = vmul.f32 %v1790, %v1803
        %v1807 = vmul.f32 %v1792, %v1804
        %v1808 = vpack.c.bf16 %v1806, %v1805
        %v1809 = vpack.c.bf16 %v1807, %v1807
        %1810 = vrot.lane.b32.xlu0 %v1144, 32
        %v1811 = vpop.permute.xlu0 %1810
        %1812 = vrot.lane.b32.xlu0 %v1147, 32
        %v1813 = vpop.permute.xlu0 %1812
        %v1816 = vsel %vm1224, %v1808, 0
        %v1819 = vsel %vm1224, %v1809, 0
        %v1822 = vsel %vm1266, %v1813, 0
        %1824 = vmatprep.subr.bf16.mxu0 0
        %1825 = vmatpush1.bf16.msra.mxu0 %v1811
        %1826 = vmatprep.subr.bf16.mxu0 0
        %1827 = vmatpush1.bf16.msra.mxu0 %v1822
        %1828 = vmatprep.subr.bf16.mxu0 0
        %1829 = vmatpush1.bf16.msra.mxu0 0
        %1830 = vmatprep.subr.bf16.mxu0 0
        %1831 = vmatpush1.bf16.msra.mxu0 0
        %1832 = vmatprep.subr.bf16.mxu0 0
        %1833 = vmatpush1.bf16.msra.mxu0 0
        %1834 = vmatprep.subr.bf16.mxu0 0
        %1835 = vmatpush1.bf16.msra.mxu0 0
        %1836 = vmatprep.subr.bf16.mxu0 0
        %1837 = vmatpush1.bf16.msra.mxu0 0
        %1838 = vmatprep.subr.bf16.mxu0 0
        %1839 = vmatpush1.bf16.msra.mxu0 0
        %1840 = vmatprep.subr.bf16.mxu0 0
        %1841 = vmatpush1.bf16.msra.mxu0 0
        %1842 = vmatprep.subr.bf16.mxu0 0
        %1843 = vmatpush1.bf16.msra.mxu0 0
        %1844 = vmatprep.subr.bf16.mxu0 0
        %1845 = vmatpush1.bf16.msra.mxu0 0
        %1846 = vmatprep.subr.bf16.mxu0 0
        %1847 = vmatpush1.bf16.msra.mxu0 0
        %1848 = vmatprep.subr.bf16.mxu0 0
        %1849 = vmatpush1.bf16.msra.mxu0 0
        %1850 = vmatprep.subr.bf16.mxu0 0
        %1851 = vmatpush1.bf16.msra.mxu0 0
        %1852 = vmatprep.subr.bf16.mxu0 0
        %1853 = vmatpush1.bf16.msra.mxu0 0
        %1854 = vmatprep.subr.bf16.mxu0 0
        %1855 = vmatpush1.bf16.msra.mxu0 0
        %1856 = vmatprep.mubr.bf16.mxu0 0
        %1857 = vmatmul.mubr.bf16.gmra.mrb[0].mxu0 %v1816
        %v1858 = vpop.f32.mrb[0].mxu0
        %v1859 = vadd.f32 0.0, %v1858
        %v1860 = vpop.f32.mrb[0].mxu0
        %v1861 = vpop.f32.mrb[0].mxu0
        %v1862 = vadd.f32 0.0, %v1861
        %v1863 = vpop.f32.mrb[0].mxu0
        %1864 = vmatprep.mubr.bf16.mxu0 0
        %1865 = vmatmul.mubr.bf16.gmra.mrb[0].mxu0 %v1819
        %v1866 = vpop.f32.mrb[0].mxu0
        %v1867 = vadd.f32 0.0, %v1866
        %v1868 = vpop.f32.mrb[0].mxu0
        %v1869 = vpop.f32.mrb[0].mxu0
        %v1870 = vpop.f32.mrb[0].mxu0
        %1871 = vdwg.mxu0
        %1875 = vrot.lane.b32.xlu0 %v1859, 96
        %v1876 = vpop.permute.xlu0 %1875
        %1877 = vrot.lane.b32.xlu0 %v1862, 96
        %v1878 = vpop.permute.xlu0 %1877
        %1879 = vrot.lane.b32.xlu0 %v1867, 96
        %v1880 = vpop.permute.xlu0 %1879
        %vm1884 = vcmask 1048320
        %1885 = vst.msk [vmem:[#allocation3] sm:$0xff] %vm1884, %v1876
        %1886 = vst.msk [vmem:[#allocation3 + $0x8] sm:$0xff] %vm1884, %v1878
        %1887 = vst.msk [vmem:[#allocation3 + $0x10] sm:$0xff] %vm1884, %v1880
        %vm1889 = vcmask 1043456
        %v1890 = vrot.slane %v1145, 4
        %v1891 = vrot.slane %v1148, 4
        %v1892 = vsel %vm1889, %v1890, %v1891
        %v1894 = vrot.slane %v1146, 4
        %v1895 = vrot.slane %v1149, 4
        %v1896 = vsel %vm1889, %v1894, %v1895
        %v1898 = vsel %vm1151, %v1892, 0
        %v1901 = vsel %vm1151, %v1891, 0
        %v1904 = vsel %vm1151, %v1896, 0
        %v1907 = vsel %vm1151, %v1895, 0
        %1909 = vmatprep.subr.bf16.mxu0 0
        %1910 = vmatpush1.bf16.xpose.msra.mxu0 %v1904
        %1911 = vmatprep.subr.bf16.mxu0 0
        %1912 = vmatpush1.bf16.xpose.msra.mxu0 %v1907
        %1913 = vmatprep.subr.bf16.mxu0 0
        %1914 = vmatpush1.bf16.xpose.msra.mxu0 0
        %1915 = vmatprep.subr.bf16.mxu0 0
        %1916 = vmatpush1.bf16.xpose.msra.mxu0 0
        %1917 = vmatprep.subr.bf16.mxu0 0
        %1918 = vmatpush1.bf16.xpose.msra.mxu0 0
        %1919 = vmatprep.subr.bf16.mxu0 0
        %1920 = vmatpush1.bf16.xpose.msra.mxu0 0
        %1921 = vmatprep.subr.bf16.mxu0 0
        %1922 = vmatpush1.bf16.xpose.msra.mxu0 0
        %1923 = vmatprep.subr.bf16.mxu0 0
        %1924 = vmatpush1.bf16.xpose.msra.mxu0 0
        %1925 = vmatprep.subr.bf16.mxu0 0
        %1926 = vmatpush1.bf16.xpose.msra.mxu0 0
        %1927 = vmatprep.subr.bf16.mxu0 0
        %1928 = vmatpush1.bf16.xpose.msra.mxu0 0
        %1929 = vmatprep.subr.bf16.mxu0 0
        %1930 = vmatpush1.bf16.xpose.msra.mxu0 0
        %1931 = vmatprep.subr.bf16.mxu0 0
        %1932 = vmatpush1.bf16.xpose.msra.mxu0 0
        %1933 = vmatprep.subr.bf16.mxu0 0
        %1934 = vmatpush1.bf16.xpose.msra.mxu0 0
        %1935 = vmatprep.subr.bf16.mxu0 0
        %1936 = vmatpush1.bf16.xpose.msra.mxu0 0
        %1937 = vmatprep.subr.bf16.mxu0 0
        %1938 = vmatpush1.bf16.xpose.msra.mxu0 0
        %1939 = vmatprep.subr.bf16.mxu0 0
        %1940 = vmatpush1.bf16.xpose.msra.mxu0 0
        %1941 = vmatprep.mubr.bf16.mxu0 0
        %1942 = vmatmul.mubr.bf16.gmra.mrb[0].mxu0 %v1898
        %v1943 = vpop.f32.mrb[0].mxu0
        %v1944 = vadd.f32 0.0, %v1943
        %v1945 = vpop.f32.mrb[0].mxu0
        %v1946 = vpop.f32.mrb[0].mxu0
        %v1947 = vadd.f32 0.0, %v1946
        %v1948 = vpop.f32.mrb[0].mxu0
        %1949 = vmatprep.mubr.bf16.mxu0 0
        %1950 = vmatmul.mubr.bf16.gmra.mrb[0].mxu0 %v1901
        %v1951 = vpop.f32.mrb[0].mxu0
        %v1952 = vadd.f32 0.0, %v1951
        %v1953 = vpop.f32.mrb[0].mxu0
        %v1954 = vpop.f32.mrb[0].mxu0
        %v1955 = vpop.f32.mrb[0].mxu0
        %1956 = vdwg.mxu0
        %v1957 = vmul.f32 %v1944, 0.17677669
        %v1958 = vmul.f32 %v1947, 0.17677669
        %v1959 = vmul.f32 %v1952, 0.17677669
        %v1960 = vadd.f32 %v1957, %v1219
        %v1961 = vadd.f32 %v1958, %v1219
        %v1962 = vadd.f32 %v1959, %v1219
        %v1963 = vsel %vm1224, %v1960, -inf
        %1964 = vmax.xlane.f32.xlu0 %v1963
        %v1965 = vpop.xlane.xlu0 %1964
        %v1966 = vsel %vm1224, %v1961, -inf
        %1967 = vmax.xlane.f32.xlu0 %v1966
        %v1968 = vpop.xlane.xlu0 %1967
        %v1969 = vsel %vm1224, %v1962, -inf
        %1970 = vmax.xlane.f32.xlu0 %v1969
        %v1971 = vpop.xlane.xlu0 %1970
        %v1972 = vsub.f32 %v1960, %v1965
        %v1973 = vsub.f32 %v1961, %v1968
        %v1974 = vsub.f32 %v1962, %v1971
        %v1975 = vmul.f32 %v1972, 1.442695
        %v1976 = vpow.pop %v1975
        %v1977 = vmul.f32 %v1973, 1.442695
        %v1978 = vpow.pop %v1977
        %v1979 = vmul.f32 %v1974, 1.442695
        %v1980 = vpow.pop %v1979
        %v1981 = vsel %vm1224, %v1976, 0.0
        %1982 = vadd.xlane.f32.xlu0 %v1981
        %v1983 = vpop.xlane.xlu0 %1982
        %v1984 = vsel %vm1224, %v1978, 0.0
        %1985 = vadd.xlane.f32.xlu0 %v1984
        %v1986 = vpop.xlane.xlu0 %1985
        %v1987 = vsel %vm1224, %v1980, 0.0
        %1988 = vadd.xlane.f32.xlu0 %v1987
        %v1989 = vpop.xlane.xlu0 %1988
        %v1990 = vrcp.pop %v1983
        %v1991 = vrcp.pop %v1986
        %v1992 = vrcp.pop %v1989
        %v1993 = vmul.f32 %v1976, %v1990
        %v1994 = vmul.f32 %v1978, %v1991
        %v1995 = vmul.f32 %v1980, %v1992
        %v1996 = vpack.c.bf16 %v1994, %v1993
        %v1997 = vpack.c.bf16 %v1995, %v1995
        %v1999 = vrot.slane %v1147, 4
        %v2000 = vrot.slane %v1150, 4
        %v2001 = vsel %vm1889, %v1999, %v2000
        %v2004 = vsel %vm1224, %v1996, 0
        %v2007 = vsel %vm1224, %v1997, 0
        %v2010 = vsel %vm1266, %v2000, 0
        %2012 = vmatprep.subr.bf16.mxu0 0
        %2013 = vmatpush1.bf16.msra.mxu0 %v2001
        %2014 = vmatprep.subr.bf16.mxu0 0
        %2015 = vmatpush1.bf16.msra.mxu0 %v2010
        %2016 = vmatprep.subr.bf16.mxu0 0
        %2017 = vmatpush1.bf16.msra.mxu0 0
        %2018 = vmatprep.subr.bf16.mxu0 0
        %2019 = vmatpush1.bf16.msra.mxu0 0
        %2020 = vmatprep.subr.bf16.mxu0 0
        %2021 = vmatpush1.bf16.msra.mxu0 0
        %2022 = vmatprep.subr.bf16.mxu0 0
        %2023 = vmatpush1.bf16.msra.mxu0 0
        %2024 = vmatprep.subr.bf16.mxu0 0
        %2025 = vmatpush1.bf16.msra.mxu0 0
        %2026 = vmatprep.subr.bf16.mxu0 0
        %2027 = vmatpush1.bf16.msra.mxu0 0
        %2028 = vmatprep.subr.bf16.mxu0 0
        %2029 = vmatpush1.bf16.msra.mxu0 0
        %2030 = vmatprep.subr.bf16.mxu0 0
        %2031 = vmatpush1.bf16.msra.mxu0 0
        %2032 = vmatprep.subr.bf16.mxu0 0
        %2033 = vmatpush1.bf16.msra.mxu0 0
        %2034 = vmatprep.subr.bf16.mxu0 0
        %2035 = vmatpush1.bf16.msra.mxu0 0
        %2036 = vmatprep.subr.bf16.mxu0 0
        %2037 = vmatpush1.bf16.msra.mxu0 0
        %2038 = vmatprep.subr.bf16.mxu0 0
        %2039 = vmatpush1.bf16.msra.mxu0 0
        %2040 = vmatprep.subr.bf16.mxu0 0
        %2041 = vmatpush1.bf16.msra.mxu0 0
        %2042 = vmatprep.subr.bf16.mxu0 0
        %2043 = vmatpush1.bf16.msra.mxu0 0
        %2044 = vmatprep.mubr.bf16.mxu0 0
        %2045 = vmatmul.mubr.bf16.gmra.mrb[0].mxu0 %v2004
        %v2046 = vpop.f32.mrb[0].mxu0
        %v2047 = vadd.f32 0.0, %v2046
        %v2048 = vpop.f32.mrb[0].mxu0
        %v2049 = vpop.f32.mrb[0].mxu0
        %v2050 = vadd.f32 0.0, %v2049
        %v2051 = vpop.f32.mrb[0].mxu0
        %2052 = vmatprep.mubr.bf16.mxu0 0
        %2053 = vmatmul.mubr.bf16.gmra.mrb[0].mxu0 %v2007
        %v2054 = vpop.f32.mrb[0].mxu0
        %v2055 = vadd.f32 0.0, %v2054
        %v2056 = vpop.f32.mrb[0].mxu0
        %v2057 = vpop.f32.mrb[0].mxu0
        %v2058 = vpop.f32.mrb[0].mxu0
        %2059 = vdwg.mxu0
        %2060 = vst.msk [vmem:[#allocation3 + $0x18] sm:$0xff] %vm1151, %v2047
        %2061 = vst.msk [vmem:[#allocation3 + $0x20] sm:$0xff] %vm1151, %v2050
        %2062 = vst.msk [vmem:[#allocation3 + $0x28] sm:$0xff] %vm1151, %v2055
        %2063 = vrot.lane.b32.xlu0 %v1892, 96
        %v2064 = vpop.permute.xlu0 %2063
        %2065 = vrot.lane.b32.xlu0 %v1891, 96
        %v2066 = vpop.permute.xlu0 %2065
        %2067 = vrot.lane.b32.xlu0 %v1896, 96
        %v2068 = vpop.permute.xlu0 %2067
        %2069 = vrot.lane.b32.xlu0 %v1895, 96
        %v2070 = vpop.permute.xlu0 %2069
        %v2072 = vsel %vm1151, %v2064, 0
        %v2075 = vsel %vm1151, %v2066, 0
        %v2078 = vsel %vm1151, %v2068, 0
        %v2081 = vsel %vm1151, %v2070, 0
        %2083 = vmatprep.subr.bf16.mxu0 0
        %2084 = vmatpush1.bf16.xpose.msra.mxu0 %v2078
        %2085 = vmatprep.subr.bf16.mxu0 0
        %2086 = vmatpush1.bf16.xpose.msra.mxu0 %v2081
        %2087 = vmatprep.subr.bf16.mxu0 0
        %2088 = vmatpush1.bf16.xpose.msra.mxu0 0
        %2089 = vmatprep.subr.bf16.mxu0 0
        %2090 = vmatpush1.bf16.xpose.msra.mxu0 0
        %2091 = vmatprep.subr.bf16.mxu0 0
        %2092 = vmatpush1.bf16.xpose.msra.mxu0 0
        %2093 = vmatprep.subr.bf16.mxu0 0
        %2094 = vmatpush1.bf16.xpose.msra.mxu0 0
        %2095 = vmatprep.subr.bf16.mxu0 0
        %2096 = vmatpush1.bf16.xpose.msra.mxu0 0
        %2097 = vmatprep.subr.bf16.mxu0 0
        %2098 = vmatpush1.bf16.xpose.msra.mxu0 0
        %2099 = vmatprep.subr.bf16.mxu0 0
        %2100 = vmatpush1.bf16.xpose.msra.mxu0 0
        %2101 = vmatprep.subr.bf16.mxu0 0
        %2102 = vmatpush1.bf16.xpose.msra.mxu0 0
        %2103 = vmatprep.subr.bf16.mxu0 0
        %2104 = vmatpush1.bf16.xpose.msra.mxu0 0
        %2105 = vmatprep.subr.bf16.mxu0 0
        %2106 = vmatpush1.bf16.xpose.msra.mxu0 0
        %2107 = vmatprep.subr.bf16.mxu0 0
        %2108 = vmatpush1.bf16.xpose.msra.mxu0 0
        %2109 = vmatprep.subr.bf16.mxu0 0
        %2110 = vmatpush1.bf16.xpose.msra.mxu0 0
        %2111 = vmatprep.subr.bf16.mxu0 0
        %2112 = vmatpush1.bf16.xpose.msra.mxu0 0
        %2113 = vmatprep.subr.bf16.mxu0 0
        %2114 = vmatpush1.bf16.xpose.msra.mxu0 0
        %2115 = vmatprep.mubr.bf16.mxu0 0
        %2116 = vmatmul.mubr.bf16.gmra.mrb[0].mxu0 %v2072
        %v2117 = vpop.f32.mrb[0].mxu0
        %v2118 = vadd.f32 0.0, %v2117
        %v2119 = vpop.f32.mrb[0].mxu0
        %v2120 = vpop.f32.mrb[0].mxu0
        %v2121 = vadd.f32 0.0, %v2120
        %v2122 = vpop.f32.mrb[0].mxu0
        %2123 = vmatprep.mubr.bf16.mxu0 0
        %2124 = vmatmul.mubr.bf16.gmra.mrb[0].mxu0 %v2075
        %v2125 = vpop.f32.mrb[0].mxu0
        %v2126 = vadd.f32 0.0, %v2125
        %v2127 = vpop.f32.mrb[0].mxu0
        %v2128 = vpop.f32.mrb[0].mxu0
        %v2129 = vpop.f32.mrb[0].mxu0
        %2130 = vdwg.mxu0
        %v2131 = vmul.f32 %v2118, 0.17677669
        %v2132 = vmul.f32 %v2121, 0.17677669
        %v2133 = vmul.f32 %v2126, 0.17677669
        %v2134 = vadd.f32 %v2131, %v1219
        %v2135 = vadd.f32 %v2132, %v1219
        %v2136 = vadd.f32 %v2133, %v1219
        %v2137 = vsel %vm1224, %v2134, -inf
        %2138 = vmax.xlane.f32.xlu0 %v2137
        %v2139 = vpop.xlane.xlu0 %2138
        %v2140 = vsel %vm1224, %v2135, -inf
        %2141 = vmax.xlane.f32.xlu0 %v2140
        %v2142 = vpop.xlane.xlu0 %2141
        %v2143 = vsel %vm1224, %v2136, -inf
        %2144 = vmax.xlane.f32.xlu0 %v2143
        %v2145 = vpop.xlane.xlu0 %2144
        %v2146 = vsub.f32 %v2134, %v2139
        %v2147 = vsub.f32 %v2135, %v2142
        %v2148 = vsub.f32 %v2136, %v2145
        %v2149 = vmul.f32 %v2146, 1.442695
        %v2150 = vpow.pop %v2149
        %v2151 = vmul.f32 %v2147, 1.442695
        %v2152 = vpow.pop %v2151
        %v2153 = vmul.f32 %v2148, 1.442695
        %v2154 = vpow.pop %v2153
        %v2155 = vsel %vm1224, %v2150, 0.0
        %2156 = vadd.xlane.f32.xlu0 %v2155
        %v2157 = vpop.xlane.xlu0 %2156
        %v2158 = vsel %vm1224, %v2152, 0.0
        %2159 = vadd.xlane.f32.xlu0 %v2158
        %v2160 = vpop.xlane.xlu0 %2159
        %v2161 = vsel %vm1224, %v2154, 0.0
        %2162 = vadd.xlane.f32.xlu0 %v2161
        %v2163 = vpop.xlane.xlu0 %2162
        %v2164 = vrcp.pop %v2157
        %v2165 = vrcp.pop %v2160
        %v2166 = vrcp.pop %v2163
        %v2167 = vmul.f32 %v2150, %v2164
        %v2168 = vmul.f32 %v2152, %v2165
        %v2169 = vmul.f32 %v2154, %v2166
        %v2170 = vpack.c.bf16 %v2168, %v2167
        %v2171 = vpack.c.bf16 %v2169, %v2169
        %2172 = vrot.lane.b32.xlu0 %v2001, 96
        %v2173 = vpop.permute.xlu0 %2172
        %2174 = vrot.lane.b32.xlu0 %v2000, 96
        %v2175 = vpop.permute.xlu0 %2174
        %v2178 = vsel %vm1224, %v2170, 0
        %v2181 = vsel %vm1224, %v2171, 0
        %v2184 = vsel %vm1266, %v2175, 0
        %2186 = vmatprep.subr.bf16.mxu0 0
        %2187 = vmatpush1.bf16.msra.mxu0 %v2173
        %2188 = vmatprep.subr.bf16.mxu0 0
        %2189 = vmatpush1.bf16.msra.mxu0 %v2184
        %2190 = vmatprep.subr.bf16.mxu0 0
        %2191 = vmatpush1.bf16.msra.mxu0 0
        %2192 = vmatprep.subr.bf16.mxu0 0
        %2193 = vmatpush1.bf16.msra.mxu0 0
        %2194 = vmatprep.subr.bf16.mxu0 0
        %2195 = vmatpush1.bf16.msra.mxu0 0
        %2196 = vmatprep.subr.bf16.mxu0 0
        %2197 = vmatpush1.bf16.msra.mxu0 0
        %2198 = vmatprep.subr.bf16.mxu0 0
        %2199 = vmatpush1.bf16.msra.mxu0 0
        %2200 = vmatprep.subr.bf16.mxu0 0
        %2201 = vmatpush1.bf16.msra.mxu0 0
        %2202 = vmatprep.subr.bf16.mxu0 0
        %2203 = vmatpush1.bf16.msra.mxu0 0
        %2204 = vmatprep.subr.bf16.mxu0 0
        %2205 = vmatpush1.bf16.msra.mxu0 0
        %2206 = vmatprep.subr.bf16.mxu0 0
        %2207 = vmatpush1.bf16.msra.mxu0 0
        %2208 = vmatprep.subr.bf16.mxu0 0
        %2209 = vmatpush1.bf16.msra.mxu0 0
        %2210 = vmatprep.subr.bf16.mxu0 0
        %2211 = vmatpush1.bf16.msra.mxu0 0
        %2212 = vmatprep.subr.bf16.mxu0 0
        %2213 = vmatpush1.bf16.msra.mxu0 0
        %2214 = vmatprep.subr.bf16.mxu0 0
        %2215 = vmatpush1.bf16.msra.mxu0 0
        %2216 = vmatprep.subr.bf16.mxu0 0
        %2217 = vmatpush1.bf16.msra.mxu0 0
        %2218 = vmatprep.mubr.bf16.mxu0 0
        %2219 = vmatmul.mubr.bf16.gmra.mrb[0].mxu0 %v2178
        %v2220 = vpop.f32.mrb[0].mxu0
        %v2221 = vadd.f32 0.0, %v2220
        %v2222 = vpop.f32.mrb[0].mxu0
        %v2223 = vpop.f32.mrb[0].mxu0
        %v2224 = vadd.f32 0.0, %v2223
        %v2225 = vpop.f32.mrb[0].mxu0
        %2226 = vmatprep.mubr.bf16.mxu0 0
        %2227 = vmatmul.mubr.bf16.gmra.mrb[0].mxu0 %v2181
        %v2228 = vpop.f32.mrb[0].mxu0
        %v2229 = vadd.f32 0.0, %v2228
        %v2230 = vpop.f32.mrb[0].mxu0
        %v2231 = vpop.f32.mrb[0].mxu0
        %v2232 = vpop.f32.mrb[0].mxu0
        %2233 = vdwg.mxu0
        %2237 = vrot.lane.b32.xlu0 %v2221, 32
        %v2238 = vpop.permute.xlu0 %2237
        %2239 = vrot.lane.b32.xlu0 %v2224, 32
        %v2240 = vpop.permute.xlu0 %2239
        %2241 = vrot.lane.b32.xlu0 %v2229, 32
        %v2242 = vpop.permute.xlu0 %2241
        %2246 = vst.msk [vmem:[#allocation3 + $0x18] sm:$0xff] %vm1510, %v2238
        %2247 = vst.msk [vmem:[#allocation3 + $0x20] sm:$0xff] %vm1510, %v2240
        %2248 = vst.msk [vmem:[#allocation3 + $0x28] sm:$0xff] %vm1510, %v2242
        %2249 = vrot.lane.b32.xlu0 %v1892, 64
        %v2250 = vpop.permute.xlu0 %2249
        %2251 = vrot.lane.b32.xlu0 %v1891, 64
        %v2252 = vpop.permute.xlu0 %2251
        %2253 = vrot.lane.b32.xlu0 %v1896, 64
        %v2254 = vpop.permute.xlu0 %2253
        %2255 = vrot.lane.b32.xlu0 %v1895, 64
        %v2256 = vpop.permute.xlu0 %2255
        %v2258 = vsel %vm1151, %v2250, 0
        %v2261 = vsel %vm1151, %v2252, 0
        %v2264 = vsel %vm1151, %v2254, 0
        %v2267 = vsel %vm1151, %v2256, 0
        %2269 = vmatprep.subr.bf16.mxu0 0
        %2270 = vmatpush1.bf16.xpose.msra.mxu0 %v2264
        %2271 = vmatprep.subr.bf16.mxu0 0
        %2272 = vmatpush1.bf16.xpose.msra.mxu0 %v2267
        %2273 = vmatprep.subr.bf16.mxu0 0
        %2274 = vmatpush1.bf16.xpose.msra.mxu0 0
        %2275 = vmatprep.subr.bf16.mxu0 0
        %2276 = vmatpush1.bf16.xpose.msra.mxu0 0
        %2277 = vmatprep.subr.bf16.mxu0 0
        %2278 = vmatpush1.bf16.xpose.msra.mxu0 0
        %2279 = vmatprep.subr.bf16.mxu0 0
        %2280 = vmatpush1.bf16.xpose.msra.mxu0 0
        %2281 = vmatprep.subr.bf16.mxu0 0
        %2282 = vmatpush1.bf16.xpose.msra.mxu0 0
        %2283 = vmatprep.subr.bf16.mxu0 0
        %2284 = vmatpush1.bf16.xpose.msra.mxu0 0
        %2285 = vmatprep.subr.bf16.mxu0 0
        %2286 = vmatpush1.bf16.xpose.msra.mxu0 0
        %2287 = vmatprep.subr.bf16.mxu0 0
        %2288 = vmatpush1.bf16.xpose.msra.mxu0 0
        %2289 = vmatprep.subr.bf16.mxu0 0
        %2290 = vmatpush1.bf16.xpose.msra.mxu0 0
        %2291 = vmatprep.subr.bf16.mxu0 0
        %2292 = vmatpush1.bf16.xpose.msra.mxu0 0
        %2293 = vmatprep.subr.bf16.mxu0 0
        %2294 = vmatpush1.bf16.xpose.msra.mxu0 0
        %2295 = vmatprep.subr.bf16.mxu0 0
        %2296 = vmatpush1.bf16.xpose.msra.mxu0 0
        %2297 = vmatprep.subr.bf16.mxu0 0
        %2298 = vmatpush1.bf16.xpose.msra.mxu0 0
        %2299 = vmatprep.subr.bf16.mxu0 0
        %2300 = vmatpush1.bf16.xpose.msra.mxu0 0
        %2301 = vmatprep.mubr.bf16.mxu0 0
        %2302 = vmatmul.mubr.bf16.gmra.mrb[0].mxu0 %v2258
        %v2303 = vpop.f32.mrb[0].mxu0
        %v2304 = vadd.f32 0.0, %v2303
        %v2305 = vpop.f32.mrb[0].mxu0
        %v2306 = vpop.f32.mrb[0].mxu0
        %v2307 = vadd.f32 0.0, %v2306
        %v2308 = vpop.f32.mrb[0].mxu0
        %2309 = vmatprep.mubr.bf16.mxu0 0
        %2310 = vmatmul.mubr.bf16.gmra.mrb[0].mxu0 %v2261
        %v2311 = vpop.f32.mrb[0].mxu0
        %v2312 = vadd.f32 0.0, %v2311
        %v2313 = vpop.f32.mrb[0].mxu0
        %v2314 = vpop.f32.mrb[0].mxu0
        %v2315 = vpop.f32.mrb[0].mxu0
        %2316 = vdwg.mxu0
        %v2317 = vmul.f32 %v2304, 0.17677669
        %v2318 = vmul.f32 %v2307, 0.17677669
        %v2319 = vmul.f32 %v2312, 0.17677669
        %v2320 = vadd.f32 %v2317, %v1219
        %v2321 = vadd.f32 %v2318, %v1219
        %v2322 = vadd.f32 %v2319, %v1219
        %v2323 = vsel %vm1224, %v2320, -inf
        %2324 = vmax.xlane.f32.xlu0 %v2323
        %v2325 = vpop.xlane.xlu0 %2324
        %v2326 = vsel %vm1224, %v2321, -inf
        %2327 = vmax.xlane.f32.xlu0 %v2326
        %v2328 = vpop.xlane.xlu0 %2327
        %v2329 = vsel %vm1224, %v2322, -inf
        %2330 = vmax.xlane.f32.xlu0 %v2329
        %v2331 = vpop.xlane.xlu0 %2330
        %v2332 = vsub.f32 %v2320, %v2325
        %v2333 = vsub.f32 %v2321, %v2328
        %v2334 = vsub.f32 %v2322, %v2331
        %v2335 = vmul.f32 %v2332, 1.442695
        %v2336 = vpow.pop %v2335
        %v2337 = vmul.f32 %v2333, 1.442695
        %v2338 = vpow.pop %v2337
        %v2339 = vmul.f32 %v2334, 1.442695
        %v2340 = vpow.pop %v2339
        %v2341 = vsel %vm1224, %v2336, 0.0
        %2342 = vadd.xlane.f32.xlu0 %v2341
        %v2343 = vpop.xlane.xlu0 %2342
        %v2344 = vsel %vm1224, %v2338, 0.0
        %2345 = vadd.xlane.f32.xlu0 %v2344
        %v2346 = vpop.xlane.xlu0 %2345
        %v2347 = vsel %vm1224, %v2340, 0.0
        %2348 = vadd.xlane.f32.xlu0 %v2347
        %v2349 = vpop.xlane.xlu0 %2348
        %v2350 = vrcp.pop %v2343
        %v2351 = vrcp.pop %v2346
        %v2352 = vrcp.pop %v2349
        %v2353 = vmul.f32 %v2336, %v2350
        %v2354 = vmul.f32 %v2338, %v2351
        %v2355 = vmul.f32 %v2340, %v2352
        %v2356 = vpack.c.bf16 %v2354, %v2353
        %v2357 = vpack.c.bf16 %v2355, %v2355
        %2358 = vrot.lane.b32.xlu0 %v2001, 64
        %v2359 = vpop.permute.xlu0 %2358
        %2360 = vrot.lane.b32.xlu0 %v2000, 64
        %v2361 = vpop.permute.xlu0 %2360
        %v2364 = vsel %vm1224, %v2356, 0
        %v2367 = vsel %vm1224, %v2357, 0
        %v2370 = vsel %vm1266, %v2361, 0
        %2372 = vmatprep.subr.bf16.mxu0 0
        %2373 = vmatpush1.bf16.msra.mxu0 %v2359
        %2374 = vmatprep.subr.bf16.mxu0 0
        %2375 = vmatpush1.bf16.msra.mxu0 %v2370
        %2376 = vmatprep.subr.bf16.mxu0 0
        %2377 = vmatpush1.bf16.msra.mxu0 0
        %2378 = vmatprep.subr.bf16.mxu0 0
        %2379 = vmatpush1.bf16.msra.mxu0 0
        %2380 = vmatprep.subr.bf16.mxu0 0
        %2381 = vmatpush1.bf16.msra.mxu0 0
        %2382 = vmatprep.subr.bf16.mxu0 0
        %2383 = vmatpush1.bf16.msra.mxu0 0
        %2384 = vmatprep.subr.bf16.mxu0 0
        %2385 = vmatpush1.bf16.msra.mxu0 0
        %2386 = vmatprep.subr.bf16.mxu0 0
        %2387 = vmatpush1.bf16.msra.mxu0 0
        %2388 = vmatprep.subr.bf16.mxu0 0
        %2389 = vmatpush1.bf16.msra.mxu0 0
        %2390 = vmatprep.subr.bf16.mxu0 0
        %2391 = vmatpush1.bf16.msra.mxu0 0
        %2392 = vmatprep.subr.bf16.mxu0 0
        %2393 = vmatpush1.bf16.msra.mxu0 0
        %2394 = vmatprep.subr.bf16.mxu0 0
        %2395 = vmatpush1.bf16.msra.mxu0 0
        %2396 = vmatprep.subr.bf16.mxu0 0
        %2397 = vmatpush1.bf16.msra.mxu0 0
        %2398 = vmatprep.subr.bf16.mxu0 0
        %2399 = vmatpush1.bf16.msra.mxu0 0
        %2400 = vmatprep.subr.bf16.mxu0 0
        %2401 = vmatpush1.bf16.msra.mxu0 0
        %2402 = vmatprep.subr.bf16.mxu0 0
        %2403 = vmatpush1.bf16.msra.mxu0 0
        %2404 = vmatprep.mubr.bf16.mxu0 0
        %2405 = vmatmul.mubr.bf16.gmra.mrb[0].mxu0 %v2364
        %v2406 = vpop.f32.mrb[0].mxu0
        %v2407 = vadd.f32 0.0, %v2406
        %v2408 = vpop.f32.mrb[0].mxu0
        %v2409 = vpop.f32.mrb[0].mxu0
        %v2410 = vadd.f32 0.0, %v2409
        %v2411 = vpop.f32.mrb[0].mxu0
        %2412 = vmatprep.mubr.bf16.mxu0 0
        %2413 = vmatmul.mubr.bf16.gmra.mrb[0].mxu0 %v2367
        %v2414 = vpop.f32.mrb[0].mxu0
        %v2415 = vadd.f32 0.0, %v2414
        %v2416 = vpop.f32.mrb[0].mxu0
        %v2417 = vpop.f32.mrb[0].mxu0
        %v2418 = vpop.f32.mrb[0].mxu0
        %2419 = vdwg.mxu0
        %2423 = vrot.lane.b32.xlu0 %v2407, 64
        %v2424 = vpop.permute.xlu0 %2423
        %2425 = vrot.lane.b32.xlu0 %v2410, 64
        %v2426 = vpop.permute.xlu0 %2425
        %2427 = vrot.lane.b32.xlu0 %v2415, 64
        %v2428 = vpop.permute.xlu0 %2427
        %2432 = vst.msk [vmem:[#allocation3 + $0x18] sm:$0xff] %vm1697, %v2424
        %2433 = vst.msk [vmem:[#allocation3 + $0x20] sm:$0xff] %vm1697, %v2426
        %2434 = vst.msk [vmem:[#allocation3 + $0x28] sm:$0xff] %vm1697, %v2428
        %2435 = vrot.lane.b32.xlu0 %v1892, 32
        %v2436 = vpop.permute.xlu0 %2435
        %2437 = vrot.lane.b32.xlu0 %v1891, 32
        %v2438 = vpop.permute.xlu0 %2437
        %2439 = vrot.lane.b32.xlu0 %v1896, 32
        %v2440 = vpop.permute.xlu0 %2439
        %2441 = vrot.lane.b32.xlu0 %v1895, 32
        %v2442 = vpop.permute.xlu0 %2441
        %v2444 = vsel %vm1151, %v2436, 0
        %v2447 = vsel %vm1151, %v2438, 0
        %v2450 = vsel %vm1151, %v2440, 0
        %v2453 = vsel %vm1151, %v2442, 0
        %2455 = vmatprep.subr.bf16.mxu0 0
        %2456 = vmatpush1.bf16.xpose.msra.mxu0 %v2450
        %2457 = vmatprep.subr.bf16.mxu0 0
        %2458 = vmatpush1.bf16.xpose.msra.mxu0 %v2453
        %2459 = vmatprep.subr.bf16.mxu0 0
        %2460 = vmatpush1.bf16.xpose.msra.mxu0 0
        %2461 = vmatprep.subr.bf16.mxu0 0
        %2462 = vmatpush1.bf16.xpose.msra.mxu0 0
        %2463 = vmatprep.subr.bf16.mxu0 0
        %2464 = vmatpush1.bf16.xpose.msra.mxu0 0
        %2465 = vmatprep.subr.bf16.mxu0 0
        %2466 = vmatpush1.bf16.xpose.msra.mxu0 0
        %2467 = vmatprep.subr.bf16.mxu0 0
        %2468 = vmatpush1.bf16.xpose.msra.mxu0 0
        %2469 = vmatprep.subr.bf16.mxu0 0
        %2470 = vmatpush1.bf16.xpose.msra.mxu0 0
        %2471 = vmatprep.subr.bf16.mxu0 0
        %2472 = vmatpush1.bf16.xpose.msra.mxu0 0
        %2473 = vmatprep.subr.bf16.mxu0 0
        %2474 = vmatpush1.bf16.xpose.msra.mxu0 0
        %2475 = vmatprep.subr.bf16.mxu0 0
        %2476 = vmatpush1.bf16.xpose.msra.mxu0 0
        %2477 = vmatprep.subr.bf16.mxu0 0
        %2478 = vmatpush1.bf16.xpose.msra.mxu0 0
        %2479 = vmatprep.subr.bf16.mxu0 0
        %2480 = vmatpush1.bf16.xpose.msra.mxu0 0
        %2481 = vmatprep.subr.bf16.mxu0 0
        %2482 = vmatpush1.bf16.xpose.msra.mxu0 0
        %2483 = vmatprep.subr.bf16.mxu0 0
        %2484 = vmatpush1.bf16.xpose.msra.mxu0 0
        %2485 = vmatprep.subr.bf16.mxu0 0
        %2486 = vmatpush1.bf16.xpose.msra.mxu0 0
        %2487 = vmatprep.mubr.bf16.mxu0 0
        %2488 = vmatmul.mubr.bf16.gmra.mrb[0].mxu0 %v2444
        %v2489 = vpop.f32.mrb[0].mxu0
        %v2490 = vadd.f32 0.0, %v2489
        %v2491 = vpop.f32.mrb[0].mxu0
        %v2492 = vpop.f32.mrb[0].mxu0
        %v2493 = vadd.f32 0.0, %v2492
        %v2494 = vpop.f32.mrb[0].mxu0
        %2495 = vmatprep.mubr.bf16.mxu0 0
        %2496 = vmatmul.mubr.bf16.gmra.mrb[0].mxu0 %v2447
        %v2497 = vpop.f32.mrb[0].mxu0
        %v2498 = vadd.f32 0.0, %v2497
        %v2499 = vpop.f32.mrb[0].mxu0
        %v2500 = vpop.f32.mrb[0].mxu0
        %v2501 = vpop.f32.mrb[0].mxu0
        %2502 = vdwg.mxu0
        %v2503 = vmul.f32 %v2490, 0.17677669
        %v2504 = vmul.f32 %v2493, 0.17677669
        %v2505 = vmul.f32 %v2498, 0.17677669
        %v2506 = vadd.f32 %v2503, %v1219
        %v2507 = vadd.f32 %v2504, %v1219
        %v2508 = vadd.f32 %v2505, %v1219
        %v2509 = vsel %vm1224, %v2506, -inf
        %2510 = vmax.xlane.f32.xlu0 %v2509
        %v2511 = vpop.xlane.xlu0 %2510
        %v2512 = vsel %vm1224, %v2507, -inf
        %2513 = vmax.xlane.f32.xlu0 %v2512
        %v2514 = vpop.xlane.xlu0 %2513
        %v2515 = vsel %vm1224, %v2508, -inf
        %2516 = vmax.xlane.f32.xlu0 %v2515
        %v2517 = vpop.xlane.xlu0 %2516
        %v2518 = vsub.f32 %v2506, %v2511
        %v2519 = vsub.f32 %v2507, %v2514
        %v2520 = vsub.f32 %v2508, %v2517
        %v2521 = vmul.f32 %v2518, 1.442695
        %v2522 = vpow.pop %v2521
        %v2523 = vmul.f32 %v2519, 1.442695
        %v2524 = vpow.pop %v2523
        %v2525 = vmul.f32 %v2520, 1.442695
        %v2526 = vpow.pop %v2525
        %v2527 = vsel %vm1224, %v2522, 0.0
        %2528 = vadd.xlane.f32.xlu0 %v2527
        %v2529 = vpop.xlane.xlu0 %2528
        %v2530 = vsel %vm1224, %v2524, 0.0
        %2531 = vadd.xlane.f32.xlu0 %v2530
        %v2532 = vpop.xlane.xlu0 %2531
        %v2533 = vsel %vm1224, %v2526, 0.0
        %2534 = vadd.xlane.f32.xlu0 %v2533
        %v2535 = vpop.xlane.xlu0 %2534
        %v2536 = vrcp.pop %v2529
        %v2537 = vrcp.pop %v2532
        %v2538 = vrcp.pop %v2535
        %v2539 = vmul.f32 %v2522, %v2536
        %v2540 = vmul.f32 %v2524, %v2537
        %v2541 = vmul.f32 %v2526, %v2538
        %v2542 = vpack.c.bf16 %v2540, %v2539
        %v2543 = vpack.c.bf16 %v2541, %v2541
        %2544 = vrot.lane.b32.xlu0 %v2001, 32
        %v2545 = vpop.permute.xlu0 %2544
        %2546 = vrot.lane.b32.xlu0 %v2000, 32
        %v2547 = vpop.permute.xlu0 %2546
        %v2550 = vsel %vm1224, %v2542, 0
        %v2553 = vsel %vm1224, %v2543, 0
        %v2556 = vsel %vm1266, %v2547, 0
        %2558 = vmatprep.subr.bf16.mxu0 0
        %2559 = vmatpush1.bf16.msra.mxu0 %v2545
        %2560 = vmatprep.subr.bf16.mxu0 0
        %2561 = vmatpush1.bf16.msra.mxu0 %v2556
        %2562 = vmatprep.subr.bf16.mxu0 0
        %2563 = vmatpush1.bf16.msra.mxu0 0
        %2564 = vmatprep.subr.bf16.mxu0 0
        %2565 = vmatpush1.bf16.msra.mxu0 0
        %2566 = vmatprep.subr.bf16.mxu0 0
        %2567 = vmatpush1.bf16.msra.mxu0 0
        %2568 = vmatprep.subr.bf16.mxu0 0
        %2569 = vmatpush1.bf16.msra.mxu0 0
        %2570 = vmatprep.subr.bf16.mxu0 0
        %2571 = vmatpush1.bf16.msra.mxu0 0
        %2572 = vmatprep.subr.bf16.mxu0 0
        %2573 = vmatpush1.bf16.msra.mxu0 0
        %2574 = vmatprep.subr.bf16.mxu0 0
        %2575 = vmatpush1.bf16.msra.mxu0 0
        %2576 = vmatprep.subr.bf16.mxu0 0
        %2577 = vmatpush1.bf16.msra.mxu0 0
        %2578 = vmatprep.subr.bf16.mxu0 0
        %2579 = vmatpush1.bf16.msra.mxu0 0
        %2580 = vmatprep.subr.bf16.mxu0 0
        %2581 = vmatpush1.bf16.msra.mxu0 0
        %2582 = vmatprep.subr.bf16.mxu0 0
        %2583 = vmatpush1.bf16.msra.mxu0 0
        %2584 = vmatprep.subr.bf16.mxu0 0
        %2585 = vmatpush1.bf16.msra.mxu0 0
        %2586 = vmatprep.subr.bf16.mxu0 0
        %2587 = vmatpush1.bf16.msra.mxu0 0
        %2588 = vmatprep.subr.bf16.mxu0 0
        %2589 = vmatpush1.bf16.msra.mxu0 0
        %2590 = vmatprep.mubr.bf16.mxu0 0
        %2591 = vmatmul.mubr.bf16.gmra.mrb[0].mxu0 %v2550
        %v2592 = vpop.f32.mrb[0].mxu0
        %v2593 = vadd.f32 0.0, %v2592
        %v2594 = vpop.f32.mrb[0].mxu0
        %v2595 = vpop.f32.mrb[0].mxu0
        %v2596 = vadd.f32 0.0, %v2595
        %v2597 = vpop.f32.mrb[0].mxu0
        %2598 = vmatprep.mubr.bf16.mxu0 0
        %2599 = vmatmul.mubr.bf16.gmra.mrb[0].mxu0 %v2553
        %v2600 = vpop.f32.mrb[0].mxu0
        %v2601 = vadd.f32 0.0, %v2600
        %v2602 = vpop.f32.mrb[0].mxu0
        %v2603 = vpop.f32.mrb[0].mxu0
        %v2604 = vpop.f32.mrb[0].mxu0
        %2605 = vdwg.mxu0
        %2609 = vrot.lane.b32.xlu0 %v2593, 96
        %v2610 = vpop.permute.xlu0 %2609
        %2611 = vrot.lane.b32.xlu0 %v2596, 96
        %v2612 = vpop.permute.xlu0 %2611
        %2613 = vrot.lane.b32.xlu0 %v2601, 96
        %v2614 = vpop.permute.xlu0 %2613
        %2618 = vst.msk [vmem:[#allocation3 + $0x18] sm:$0xff] %vm1884, %v2610
        %2619 = vst.msk [vmem:[#allocation3 + $0x20] sm:$0xff] %vm1884, %v2612
        %2620 = vst.msk [vmem:[#allocation3 + $0x28] sm:$0xff] %vm1884, %v2614
        %v2621 = vld [vmem:[#allocation3] sm:$0xff]
        %v2622 = vld [vmem:[#allocation3 + $0x8] sm:$0xff]
        %v2623 = vld [vmem:[#allocation3 + $0x10] sm:$0xff]
        %v2624 = vld [vmem:[#allocation3 + $0x18] sm:$0xff]
        %v2625 = vld [vmem:[#allocation3 + $0x20] sm:$0xff]
        %v2626 = vld [vmem:[#allocation3 + $0x28] sm:$0xff]
        %v2627 = vpack.c.bf16 %v2622, %v2621
        %v2628 = vpack.c.bf16 %v2624, %v2623
        %v2629 = vpack.c.bf16 %v2626, %v2625
        %v2630 = vld [vmem:[%s698] sm:$0xf]
        %v2631 = vld [vmem:[%s698 + $0x4] sm:$0xf]
        %v2632 = vld [vmem:[%s698 + $0x8] sm:$0xf]
        %v2633 = vld [vmem:[%s698 + $0xc] sm:$0xf]
        %v2634 = vld [vmem:[%s698 + $0x10] sm:$0xf]
        %v2635 = vld [vmem:[%s698 + $0x14] sm:$0xf]
        %v2636 = vld [vmem:[%s698 + $0x18] sm:$0xf]
        %v2637 = vld [vmem:[%s698 + $0x1c] sm:$0xf]
        %v2638 = vld [vmem:[%s698 + $0x20] sm:$0xf]
        %v2639 = vld [vmem:[%s698 + $0x24] sm:$0xf]
        %v2640 = vld [vmem:[%s698 + $0x28] sm:$0xf]
        %v2641 = vld [vmem:[%s698 + $0x2c] sm:$0xf]
        %v2642 = vld [vmem:[%s698 + $0x30] sm:$0xf]
        %v2643 = vld [vmem:[%s698 + $0x34] sm:$0xf]
        %v2644 = vld [vmem:[%s698 + $0x38] sm:$0xf]
        %v2645 = vld [vmem:[%s698 + $0x3c] sm:$0xf]
        %v2646 = vld [vmem:[%s701] sm:$0x1]
        %v2648 = vlaneseq
        %v2649 = vshrl.u32 %v2648, 7
        %v2650 = vsub.s32 0, %v2649
        %v2651 = vrot.slane %v2646, %v2650
        %v2669 = vunpack.c.l.b16 %v2630
        %v2670 = vunpack.c.l.b16 %v2631
        %v2671 = vunpack.c.l.b16 %v2632
        %v2672 = vunpack.c.l.b16 %v2633
        %v2673 = vunpack.c.l.b16 %v2634
        %v2674 = vunpack.c.l.b16 %v2635
        %v2675 = vunpack.c.l.b16 %v2636
        %v2676 = vunpack.c.l.b16 %v2637
        %v2677 = vunpack.c.l.b16 %v2638
        %v2678 = vunpack.c.l.b16 %v2639
        %v2679 = vunpack.c.l.b16 %v2640
        %v2680 = vunpack.c.l.b16 %v2641
        %v2681 = vunpack.c.l.b16 %v2642
        %v2682 = vunpack.c.l.b16 %v2643
        %v2683 = vunpack.c.l.b16 %v2644
        %v2684 = vunpack.c.l.b16 %v2645
        %v2685 = vpack.c.b16 %v2670, %v2669
        %v2686 = vpack.c.b16 %v2672, %v2671
        %v2687 = vpack.c.b16 %v2674, %v2673
        %v2688 = vpack.c.b16 %v2676, %v2675
        %v2689 = vpack.c.b16 %v2678, %v2677
        %v2690 = vpack.c.b16 %v2680, %v2679
        %v2691 = vpack.c.b16 %v2682, %v2681
        %v2692 = vpack.c.b16 %v2684, %v2683
        %2701 = vmatprep.subr.bf16.mxu0 0
        %2702 = vmatpush1.bf16.msra.mxu0 %v2685
        %2703 = vmatprep.subr.bf16.mxu0 0
        %2704 = vmatpush1.bf16.msra.mxu0 %v2686
        %2705 = vmatprep.subr.bf16.mxu0 0
        %2706 = vmatpush1.bf16.msra.mxu0 %v2687
        %2707 = vmatprep.subr.bf16.mxu0 0
        %2708 = vmatpush1.bf16.msra.mxu0 %v2688
        %2709 = vmatprep.subr.bf16.mxu0 0
        %2710 = vmatpush1.bf16.msra.mxu0 %v2689
        %2711 = vmatprep.subr.bf16.mxu0 0
        %2712 = vmatpush1.bf16.msra.mxu0 %v2690
        %2713 = vmatprep.subr.bf16.mxu0 0
        %2714 = vmatpush1.bf16.msra.mxu0 %v2691
        %2715 = vmatprep.subr.bf16.mxu0 0
        %2716 = vmatpush1.bf16.msra.mxu0 %v2692
        %2717 = vmatprep.subr.bf16.mxu0 0
        %2718 = vmatpush1.bf16.msra.mxu0 0
        %2719 = vmatprep.subr.bf16.mxu0 0
        %2720 = vmatpush1.bf16.msra.mxu0 0
        %2721 = vmatprep.subr.bf16.mxu0 0
        %2722 = vmatpush1.bf16.msra.mxu0 0
        %2723 = vmatprep.subr.bf16.mxu0 0
        %2724 = vmatpush1.bf16.msra.mxu0 0
        %2725 = vmatprep.subr.bf16.mxu0 0
        %2726 = vmatpush1.bf16.msra.mxu0 0
        %2727 = vmatprep.subr.bf16.mxu0 0
        %2728 = vmatpush1.bf16.msra.mxu0 0
        %2729 = vmatprep.subr.bf16.mxu0 0
        %2730 = vmatpush1.bf16.msra.mxu0 0
        %2731 = vmatprep.subr.bf16.mxu0 0
        %2732 = vmatpush1.bf16.msra.mxu0 0
        %2733 = vmatprep.mubr.bf16.mxu0 0
        %2734 = vmatmul.mubr.bf16.gmra.mrb[0].mxu0 %v2627
        %v2735 = vpop.f32.mrb[0].mxu0
        %v2736 = vadd.f32 %v2651, %v2735
        %v2737 = vpop.f32.mrb[0].mxu0
        %v2738 = vpop.f32.mrb[0].mxu0
        %v2739 = vadd.f32 %v2651, %v2738
        %v2740 = vpop.f32.mrb[0].mxu0
        %2741 = vmatprep.mubr.bf16.mxu0 0
        %2742 = vmatmul.mubr.bf16.gmra.mrb[0].mxu0 %v2628
        %v2743 = vpop.f32.mrb[0].mxu0
        %v2744 = vadd.f32 %v2651, %v2743
        %v2745 = vpop.f32.mrb[0].mxu0
        %v2746 = vpop.f32.mrb[0].mxu0
        %v2747 = vadd.f32 %v2651, %v2746
        %v2748 = vpop.f32.mrb[0].mxu0
        %2749 = vmatprep.mubr.bf16.mxu0 0
        %2750 = vmatmul.mubr.bf16.gmra.mrb[0].mxu0 %v2629
        %v2751 = vpop.f32.mrb[0].mxu0
        %v2752 = vadd.f32 %v2651, %v2751
        %v2753 = vpop.f32.mrb[0].mxu0
        %v2754 = vpop.f32.mrb[0].mxu0
        %v2755 = vadd.f32 %v2651, %v2754
        %v2756 = vpop.f32.mrb[0].mxu0
        %2757 = vdwg.mxu0
        %v2758 = vadd.f32 %v742, %v2736
        %v2759 = vadd.f32 %v743, %v2739
        %v2760 = vadd.f32 %v744, %v2744
        %v2761 = vadd.f32 %v745, %v2747
        %v2762 = vadd.f32 %v746, %v2752
        %v2763 = vadd.f32 %v747, %v2755
        %v2764 = vld [vmem:[%s704] sm:$0x1]
        %v2765 = vld [vmem:[%s707] sm:$0x1]
        %2766 = vadd.xlane.f32.xlu0 %v2758
        %v2767 = vpop.xlane.xlu0 %2766
        %2768 = vadd.xlane.f32.xlu0 %v2759
        %v2769 = vpop.xlane.xlu0 %2768
        %2770 = vadd.xlane.f32.xlu0 %v2760
        %v2771 = vpop.xlane.xlu0 %2770
        %2772 = vadd.xlane.f32.xlu0 %v2761
        %v2773 = vpop.xlane.xlu0 %2772
        %2774 = vadd.xlane.f32.xlu0 %v2762
        %v2775 = vpop.xlane.xlu0 %2774
        %2776 = vadd.xlane.f32.xlu0 %v2763
        %v2777 = vpop.xlane.xlu0 %2776
        %v2778 = vmul.f32 %v2767, %v763
        %v2779 = vmul.f32 %v2769, %v763
        %v2780 = vmul.f32 %v2771, %v763
        %v2781 = vmul.f32 %v2773, %v763
        %v2782 = vmul.f32 %v2775, %v763
        %v2783 = vmul.f32 %v2777, %v763
        %v2784 = vsub.f32 %v2758, %v2778
        %v2785 = vsub.f32 %v2759, %v2779
        %v2786 = vsub.f32 %v2760, %v2780
        %v2787 = vsub.f32 %v2761, %v2781
        %v2788 = vsub.f32 %v2762, %v2782
        %v2789 = vsub.f32 %v2763, %v2783
        %v2790 = vmul.f32 %v2784, %v2784
        %v2791 = vmul.f32 %v2785, %v2785
        %v2792 = vmul.f32 %v2786, %v2786
        %v2793 = vmul.f32 %v2787, %v2787
        %v2794 = vmul.f32 %v2788, %v2788
        %v2795 = vmul.f32 %v2789, %v2789
        %2796 = vadd.xlane.f32.xlu0 %v2790
        %v2797 = vpop.xlane.xlu0 %2796
        %2798 = vadd.xlane.f32.xlu0 %v2791
        %v2799 = vpop.xlane.xlu0 %2798
        %2800 = vadd.xlane.f32.xlu0 %v2792
        %v2801 = vpop.xlane.xlu0 %2800
        %2802 = vadd.xlane.f32.xlu0 %v2793
        %v2803 = vpop.xlane.xlu0 %2802
        %2804 = vadd.xlane.f32.xlu0 %v2794
        %v2805 = vpop.xlane.xlu0 %2804
        %2806 = vadd.xlane.f32.xlu0 %v2795
        %v2807 = vpop.xlane.xlu0 %2806
        %v2808 = vmul.f32 %v2797, %v763
        %v2809 = vmul.f32 %v2799, %v763
        %v2810 = vmul.f32 %v2801, %v763
        %v2811 = vmul.f32 %v2803, %v763
        %v2812 = vmul.f32 %v2805, %v763
        %v2813 = vmul.f32 %v2807, %v763
        %v2814 = vadd.f32 %v2808, 1e-06
        %v2815 = vadd.f32 %v2809, 1e-06
        %v2816 = vadd.f32 %v2810, 1e-06
        %v2817 = vadd.f32 %v2811, 1e-06
        %v2818 = vadd.f32 %v2812, 1e-06
        %v2819 = vadd.f32 %v2813, 1e-06
        %v2820 = vrsqrt.pop %v2814
        %v2821 = vrsqrt.pop %v2815
        %v2822 = vrsqrt.pop %v2816
        %v2823 = vrsqrt.pop %v2817
        %v2824 = vrsqrt.pop %v2818
        %v2825 = vrsqrt.pop %v2819
        %v2826 = vmul.f32 %v2784, %v2820
        %v2827 = vmul.f32 %v2785, %v2821
        %v2828 = vmul.f32 %v2786, %v2822
        %v2829 = vmul.f32 %v2787, %v2823
        %v2830 = vmul.f32 %v2788, %v2824
        %v2831 = vmul.f32 %v2789, %v2825
        %v2833 = vlaneseq
        %v2834 = vshrl.u32 %v2833, 7
        %v2835 = vsub.s32 0, %v2834
        %v2836 = vrot.slane %v2764, %v2835
        %v2838 = vmul.f32 %v2826, %v2836
        %v2839 = vmul.f32 %v2827, %v2836
        %v2840 = vmul.f32 %v2828, %v2836
        %v2841 = vmul.f32 %v2829, %v2836
        %v2842 = vmul.f32 %v2830, %v2836
        %v2843 = vmul.f32 %v2831, %v2836
        %v2845 = vlaneseq
        %v2846 = vshrl.u32 %v2845, 7
        %v2847 = vsub.s32 0, %v2846
        %v2848 = vrot.slane %v2765, %v2847
        %v2850 = vadd.f32 %v2838, %v2848
        %v2851 = vadd.f32 %v2839, %v2848
        %v2852 = vadd.f32 %v2840, %v2848
        %v2853 = vadd.f32 %v2841, %v2848
        %v2854 = vadd.f32 %v2842, %v2848
        %v2855 = vadd.f32 %v2843, %v2848
        %v2856 = vpack.c.bf16 %v2851, %v2850
        %v2857 = vpack.c.bf16 %v2853, %v2852
        %v2858 = vpack.c.bf16 %v2855, %v2854
        %v2859 = vld [vmem:[%s712] sm:$0xff]
        %v2860 = vld [vmem:[%s712 + $0x8] sm:$0xff]
        %v2861 = vld [vmem:[%s712 + $0x10] sm:$0xff]
        %v2862 = vld [vmem:[%s712 + $0x18] sm:$0xff]
        %v2863 = vld [vmem:[%s712 + $0x20] sm:$0xff]
        %v2864 = vld [vmem:[%s712 + $0x28] sm:$0xff]
        %v2865 = vld [vmem:[%s712 + $0x30] sm:$0xff]
        %v2866 = vld [vmem:[%s712 + $0x38] sm:$0xff]
        %v2867 = vld [vmem:[%s712 + $0x40] sm:$0xff]
        %v2868 = vld [vmem:[%s712 + $0x48] sm:$0xff]
        %v2869 = vld [vmem:[%s712 + $0x50] sm:$0xff]
        %v2870 = vld [vmem:[%s712 + $0x58] sm:$0xff]
        %v2871 = vld [vmem:[%s712 + $0x60] sm:$0xff]
        %v2872 = vld [vmem:[%s712 + $0x68] sm:$0xff]
        %v2873 = vld [vmem:[%s712 + $0x70] sm:$0xff]
        %v2874 = vld [vmem:[%s712 + $0x78] sm:$0xff]
        %v2875 = vld [vmem:[%s712 + $0x80] sm:$0xff]
        %v2876 = vld [vmem:[%s712 + $0x88] sm:$0xff]
        %v2877 = vld [vmem:[%s712 + $0x90] sm:$0xff]
        %v2878 = vld [vmem:[%s712 + $0x98] sm:$0xff]
        %v2879 = vld [vmem:[%s712 + $0xa0] sm:$0xff]
        %v2880 = vld [vmem:[%s712 + $0xa8] sm:$0xff]
        %v2881 = vld [vmem:[%s712 + $0xb0] sm:$0xff]
        %v2882 = vld [vmem:[%s712 + $0xb8] sm:$0xff]
        %v2883 = vld [vmem:[%s712 + $0xc0] sm:$0xff]
        %v2884 = vld [vmem:[%s712 + $0xc8] sm:$0xff]
        %v2885 = vld [vmem:[%s712 + $0xd0] sm:$0xff]
        %v2886 = vld [vmem:[%s712 + $0xd8] sm:$0xff]
        %v2887 = vld [vmem:[%s712 + $0xe0] sm:$0xff]
        %v2888 = vld [vmem:[%s712 + $0xe8] sm:$0xff]
        %v2889 = vld [vmem:[%s712 + $0xf0] sm:$0xff]
        %v2890 = vld [vmem:[%s712 + $0xf8] sm:$0xff]
        %v2891 = vld [vmem:[%s716] sm:$0xf]
        %v2893 = vlaneseq
        %v2894 = vshrl.u32 %v2893, 7
        %v2895 = vsub.s32 0, %v2894
        %v2896 = vrot.slane %v2891, %v2895
        %v2897 = vlaneseq
        %v2898 = vshrl.u32 %v2897, 7
        %v2899 = vsub.s32 1, %v2898
        %v2900 = vrot.slane %v2891, %v2899
        %v2901 = vlaneseq
        %v2902 = vshrl.u32 %v2901, 7
        %v2903 = vsub.s32 2, %v2902
        %v2904 = vrot.slane %v2891, %v2903
        %v2905 = vlaneseq
        %v2906 = vshrl.u32 %v2905, 7
        %v2907 = vsub.s32 3, %v2906
        %v2908 = vrot.slane %v2891, %v2907
        %v2945 = vunpack.c.l.b16 %v2859
        %v2946 = vunpack.c.h.b16 %v2859
        %v2947 = vunpack.c.l.b16 %v2860
        %v2948 = vunpack.c.h.b16 %v2860
        %v2949 = vunpack.c.l.b16 %v2861
        %v2950 = vunpack.c.h.b16 %v2861
        %v2951 = vunpack.c.l.b16 %v2862
        %v2952 = vunpack.c.h.b16 %v2862
        %v2953 = vunpack.c.l.b16 %v2863
        %v2954 = vunpack.c.h.b16 %v2863
        %v2955 = vunpack.c.l.b16 %v2864
        %v2956 = vunpack.c.h.b16 %v2864
        %v2957 = vunpack.c.l.b16 %v2865
        %v2958 = vunpack.c.h.b16 %v2865
        %v2959 = vunpack.c.l.b16 %v2866
        %v2960 = vunpack.c.h.b16 %v2866
        %v2961 = vunpack.c.l.b16 %v2867
        %v2962 = vunpack.c.h.b16 %v2867
        %v2963 = vunpack.c.l.b16 %v2868
        %v2964 = vunpack.c.h.b16 %v2868
        %v2965 = vunpack.c.l.b16 %v2869
        %v2966 = vunpack.c.h.b16 %v2869
        %v2967 = vunpack.c.l.b16 %v2870
        %v2968 = vunpack.c.h.b16 %v2870
        %v2969 = vunpack.c.l.b16 %v2871
        %v2970 = vunpack.c.h.b16 %v2871
        %v2971 = vunpack.c.l.b16 %v2872
        %v2972 = vunpack.c.h.b16 %v2872
        %v2973 = vunpack.c.l.b16 %v2873
        %v2974 = vunpack.c.h.b16 %v2873
        %v2975 = vunpack.c.l.b16 %v2874
        %v2976 = vunpack.c.h.b16 %v2874
        %v2977 = vunpack.c.l.b16 %v2875
        %v2978 = vunpack.c.h.b16 %v2875
        %v2979 = vunpack.c.l.b16 %v2876
        %v2980 = vunpack.c.h.b16 %v2876
        %v2981 = vunpack.c.l.b16 %v2877
        %v2982 = vunpack.c.h.b16 %v2877
        %v2983 = vunpack.c.l.b16 %v2878
        %v2984 = vunpack.c.h.b16 %v2878
        %v2985 = vunpack.c.l.b16 %v2879
        %v2986 = vunpack.c.h.b16 %v2879
        %v2987 = vunpack.c.l.b16 %v2880
        %v2988 = vunpack.c.h.b16 %v2880
        %v2989 = vunpack.c.l.b16 %v2881
        %v2990 = vunpack.c.h.b16 %v2881
        %v2991 = vunpack.c.l.b16 %v2882
        %v2992 = vunpack.c.h.b16 %v2882
        %v2993 = vunpack.c.l.b16 %v2883
        %v2994 = vunpack.c.h.b16 %v2883
        %v2995 = vunpack.c.l.b16 %v2884
        %v2996 = vunpack.c.h.b16 %v2884
        %v2997 = vunpack.c.l.b16 %v2885
        %v2998 = vunpack.c.h.b16 %v2885
        %v2999 = vunpack.c.l.b16 %v2886
        %v3000 = vunpack.c.h.b16 %v2886
        %v3001 = vunpack.c.l.b16 %v2887
        %v3002 = vunpack.c.h.b16 %v2887
        %v3003 = vunpack.c.l.b16 %v2888
        %v3004 = vunpack.c.h.b16 %v2888
        %v3005 = vunpack.c.l.b16 %v2889
        %v3006 = vunpack.c.h.b16 %v2889
        %v3007 = vunpack.c.l.b16 %v2890
        %v3008 = vunpack.c.h.b16 %v2890
        %v3009 = vpack.c.b16 %v2949, %v2945
        %v3010 = vpack.c.b16 %v2950, %v2946
        %v3011 = vpack.c.b16 %v2951, %v2947
        %v3012 = vpack.c.b16 %v2952, %v2948
        %v3013 = vpack.c.b16 %v2957, %v2953
        %v3014 = vpack.c.b16 %v2958, %v2954
        %v3015 = vpack.c.b16 %v2959, %v2955
        %v3016 = vpack.c.b16 %v2960, %v2956
        %v3017 = vpack.c.b16 %v2965, %v2961
        %v3018 = vpack.c.b16 %v2966, %v2962
        %v3019 = vpack.c.b16 %v2967, %v2963
        %v3020 = vpack.c.b16 %v2968, %v2964
        %v3021 = vpack.c.b16 %v2973, %v2969
        %v3022 = vpack.c.b16 %v2974, %v2970
        %v3023 = vpack.c.b16 %v2975, %v2971
        %v3024 = vpack.c.b16 %v2976, %v2972
        %v3025 = vpack.c.b16 %v2981, %v2977
        %v3026 = vpack.c.b16 %v2982, %v2978
        %v3027 = vpack.c.b16 %v2983, %v2979
        %v3028 = vpack.c.b16 %v2984, %v2980
        %v3029 = vpack.c.b16 %v2989, %v2985
        %v3030 = vpack.c.b16 %v2990, %v2986
        %v3031 = vpack.c.b16 %v2991, %v2987
        %v3032 = vpack.c.b16 %v2992, %v2988
        %v3033 = vpack.c.b16 %v2997, %v2993
        %v3034 = vpack.c.b16 %v2998, %v2994
        %v3035 = vpack.c.b16 %v2999, %v2995
        %v3036 = vpack.c.b16 %v3000, %v2996
        %v3037 = vpack.c.b16 %v3005, %v3001
        %v3038 = vpack.c.b16 %v3006, %v3002
        %v3039 = vpack.c.b16 %v3007, %v3003
        %v3040 = vpack.c.b16 %v3008, %v3004
        %3073 = vmatprep.subr.bf16.mxu0 %v3010
        %3074 = vmatpush1.bf16.msra.mxu0 %v3009
        %3075 = vmatprep.subr.bf16.mxu0 %v3014
        %3076 = vmatpush1.bf16.msra.mxu0 %v3013
        %3077 = vmatprep.subr.bf16.mxu0 %v3018
        %3078 = vmatpush1.bf16.msra.mxu0 %v3017
        %3079 = vmatprep.subr.bf16.mxu0 %v3022
        %3080 = vmatpush1.bf16.msra.mxu0 %v3021
        %3081 = vmatprep.subr.bf16.mxu0 %v3026
        %3082 = vmatpush1.bf16.msra.mxu0 %v3025
        %3083 = vmatprep.subr.bf16.mxu0 %v3030
        %3084 = vmatpush1.bf16.msra.mxu0 %v3029
        %3085 = vmatprep.subr.bf16.mxu0 %v3034
        %3086 = vmatpush1.bf16.msra.mxu0 %v3033
        %3087 = vmatprep.subr.bf16.mxu0 %v3038
        %3088 = vmatpush1.bf16.msra.mxu0 %v3037
        %3089 = vmatprep.subr.bf16.mxu0 0
        %3090 = vmatpush1.bf16.msra.mxu0 0
        %3091 = vmatprep.subr.bf16.mxu0 0
        %3092 = vmatpush1.bf16.msra.mxu0 0
        %3093 = vmatprep.subr.bf16.mxu0 0
        %3094 = vmatpush1.bf16.msra.mxu0 0
        %3095 = vmatprep.subr.bf16.mxu0 0
        %3096 = vmatpush1.bf16.msra.mxu0 0
        %3097 = vmatprep.subr.bf16.mxu0 0
        %3098 = vmatpush1.bf16.msra.mxu0 0
        %3099 = vmatprep.subr.bf16.mxu0 0
        %3100 = vmatpush1.bf16.msra.mxu0 0
        %3101 = vmatprep.subr.bf16.mxu0 0
        %3102 = vmatpush1.bf16.msra.mxu0 0
        %3103 = vmatprep.subr.bf16.mxu0 0
        %3104 = vmatpush1.bf16.msra.mxu0 0
        %3105 = vmatprep.mubr.bf16.mxu0 0
        %3106 = vmatmul.mubr.bf16.gmra.mrb[0].mxu0 %v2856
        %v3107 = vpop.f32.mrb[0].mxu0
        %v3108 = vadd.f32 %v2896, %v3107
        %v3109 = vpop.f32.mrb[0].mxu0
        %v3110 = vadd.f32 %v2900, %v3109
        %v3111 = vpop.f32.mrb[0].mxu0
        %v3112 = vadd.f32 %v2896, %v3111
        %v3113 = vpop.f32.mrb[0].mxu0
        %v3114 = vadd.f32 %v2900, %v3113
        %3115 = vmatprep.mubr.bf16.mxu0 0
        %3116 = vmatmul.mubr.bf16.gmra.mrb[0].mxu0 %v2857
        %v3117 = vpop.f32.mrb[0].mxu0
        %v3118 = vadd.f32 %v2896, %v3117
        %v3119 = vpop.f32.mrb[0].mxu0
        %v3120 = vadd.f32 %v2900, %v3119
        %v3121 = vpop.f32.mrb[0].mxu0
        %v3122 = vadd.f32 %v2896, %v3121
        %v3123 = vpop.f32.mrb[0].mxu0
        %v3124 = vadd.f32 %v2900, %v3123
        %3125 = vmatprep.mubr.bf16.mxu0 0
        %3126 = vmatmul.mubr.bf16.gmra.mrb[0].mxu0 %v2858
        %v3127 = vpop.f32.mrb[0].mxu0
        %v3128 = vadd.f32 %v2896, %v3127
        %v3129 = vpop.f32.mrb[0].mxu0
        %v3130 = vadd.f32 %v2900, %v3129
        %v3131 = vpop.f32.mrb[0].mxu0
        %v3132 = vadd.f32 %v2896, %v3131
        %v3133 = vpop.f32.mrb[0].mxu0
        %v3134 = vadd.f32 %v2900, %v3133
        %3135 = vdwg.mxu0
        %3136 = vmatprep.subr.bf16.mxu0 %v3012
        %3137 = vmatpush1.bf16.msra.mxu0 %v3011
        %3138 = vmatprep.subr.bf16.mxu0 %v3016
        %3139 = vmatpush1.bf16.msra.mxu0 %v3015
        %3140 = vmatprep.subr.bf16.mxu0 %v3020
        %3141 = vmatpush1.bf16.msra.mxu0 %v3019
        %3142 = vmatprep.subr.bf16.mxu0 %v3024
        %3143 = vmatpush1.bf16.msra.mxu0 %v3023
        %3144 = vmatprep.subr.bf16.mxu0 %v3028
        %3145 = vmatpush1.bf16.msra.mxu0 %v3027
        %3146 = vmatprep.subr.bf16.mxu0 %v3032
        %3147 = vmatpush1.bf16.msra.mxu0 %v3031
        %3148 = vmatprep.subr.bf16.mxu0 %v3036
        %3149 = vmatpush1.bf16.msra.mxu0 %v3035
        %3150 = vmatprep.subr.bf16.mxu0 %v3040
        %3151 = vmatpush1.bf16.msra.mxu0 %v3039
        %3152 = vmatprep.subr.bf16.mxu0 0
        %3153 = vmatpush1.bf16.msra.mxu0 0
        %3154 = vmatprep.subr.bf16.mxu0 0
        %3155 = vmatpush1.bf16.msra.mxu0 0
        %3156 = vmatprep.subr.bf16.mxu0 0
        %3157 = vmatpush1.bf16.msra.mxu0 0
        %3158 = vmatprep.subr.bf16.mxu0 0
        %3159 = vmatpush1.bf16.msra.mxu0 0
        %3160 = vmatprep.subr.bf16.mxu0 0
        %3161 = vmatpush1.bf16.msra.mxu0 0
        %3162 = vmatprep.subr.bf16.mxu0 0
        %3163 = vmatpush1.bf16.msra.mxu0 0
        %3164 = vmatprep.subr.bf16.mxu0 0
        %3165 = vmatpush1.bf16.msra.mxu0 0
        %3166 = vmatprep.subr.bf16.mxu0 0
        %3167 = vmatpush1.bf16.msra.mxu0 0
        %3168 = vmatprep.mubr.bf16.mxu0 0
        %3169 = vmatmul.mubr.bf16.gmra.mrb[0].mxu0 %v2856
        %v3170 = vpop.f32.mrb[0].mxu0
        %v3171 = vadd.f32 %v2904, %v3170
        %v3172 = vpop.f32.mrb[0].mxu0
        %v3173 = vadd.f32 %v2908, %v3172
        %v3174 = vpop.f32.mrb[0].mxu0
        %v3175 = vadd.f32 %v2904, %v3174
        %v3176 = vpop.f32.mrb[0].mxu0
        %v3177 = vadd.f32 %v2908, %v3176
        %3178 = vmatprep.mubr.bf16.mxu0 0
        %3179 = vmatmul.mubr.bf16.gmra.mrb[0].mxu0 %v2857
        %v3180 = vpop.f32.mrb[0].mxu0
        %v3181 = vadd.f32 %v2904, %v3180
        %v3182 = vpop.f32.mrb[0].mxu0
        %v3183 = vadd.f32 %v2908, %v3182
        %v3184 = vpop.f32.mrb[0].mxu0
        %v3185 = vadd.f32 %v2904, %v3184
        %v3186 = vpop.f32.mrb[0].mxu0
        %v3187 = vadd.f32 %v2908, %v3186
        %3188 = vmatprep.mubr.bf16.mxu0 0
        %3189 = vmatmul.mubr.bf16.gmra.mrb[0].mxu0 %v2858
        %v3190 = vpop.f32.mrb[0].mxu0
        %v3191 = vadd.f32 %v2904, %v3190
        %v3192 = vpop.f32.mrb[0].mxu0
        %v3193 = vadd.f32 %v2908, %v3192
        %v3194 = vpop.f32.mrb[0].mxu0
        %v3195 = vadd.f32 %v2904, %v3194
        %v3196 = vpop.f32.mrb[0].mxu0
        %v3197 = vadd.f32 %v2908, %v3196
        %3198 = vdwg.mxu0
        %v3199 = vmul.f32 %v3108, 0.5
        %v3200 = vmul.f32 %v3110, 0.5
        %v3201 = vmul.f32 %v3171, 0.5
        %v3202 = vmul.f32 %v3173, 0.5
        %v3203 = vmul.f32 %v3112, 0.5
        %v3204 = vmul.f32 %v3114, 0.5
        %v3205 = vmul.f32 %v3175, 0.5
        %v3206 = vmul.f32 %v3177, 0.5
        %v3207 = vmul.f32 %v3118, 0.5
        %v3208 = vmul.f32 %v3120, 0.5
        %v3209 = vmul.f32 %v3181, 0.5
        %v3210 = vmul.f32 %v3183, 0.5
        %v3211 = vmul.f32 %v3122, 0.5
        %v3212 = vmul.f32 %v3124, 0.5
        %v3213 = vmul.f32 %v3185, 0.5
        %v3214 = vmul.f32 %v3187, 0.5
        %v3215 = vmul.f32 %v3128, 0.5
        %v3216 = vmul.f32 %v3130, 0.5
        %v3217 = vmul.f32 %v3191, 0.5
        %v3218 = vmul.f32 %v3193, 0.5
        %v3219 = vmul.f32 %v3132, 0.5
        %v3220 = vmul.f32 %v3134, 0.5
        %v3221 = vmul.f32 %v3195, 0.5
        %v3222 = vmul.f32 %v3197, 0.5
        %v3223 = vmul.f32 %v3108, 0.044715
        %v3224 = vmul.f32 %v3110, 0.044715
        %v3225 = vmul.f32 %v3171, 0.044715
        %v3226 = vmul.f32 %v3173, 0.044715
        %v3227 = vmul.f32 %v3112, 0.044715
        %v3228 = vmul.f32 %v3114, 0.044715
        %v3229 = vmul.f32 %v3175, 0.044715
        %v3230 = vmul.f32 %v3177, 0.044715
        %v3231 = vmul.f32 %v3118, 0.044715
        %v3232 = vmul.f32 %v3120, 0.044715
        %v3233 = vmul.f32 %v3181, 0.044715
        %v3234 = vmul.f32 %v3183, 0.044715
        %v3235 = vmul.f32 %v3122, 0.044715
        %v3236 = vmul.f32 %v3124, 0.044715
        %v3237 = vmul.f32 %v3185, 0.044715
        %v3238 = vmul.f32 %v3187, 0.044715
        %v3239 = vmul.f32 %v3128, 0.044715
        %v3240 = vmul.f32 %v3130, 0.044715
        %v3241 = vmul.f32 %v3191, 0.044715
        %v3242 = vmul.f32 %v3193, 0.044715
        %v3243 = vmul.f32 %v3132, 0.044715
        %v3244 = vmul.f32 %v3134, 0.044715
        %v3245 = vmul.f32 %v3195, 0.044715
        %v3246 = vmul.f32 %v3197, 0.044715
        %v3247 = vmul.f32 %v3223, %v3108
        %v3248 = vmul.f32 %v3224, %v3110
        %v3249 = vmul.f32 %v3225, %v3171
        %v3250 = vmul.f32 %v3226, %v3173
        %v3251 = vmul.f32 %v3227, %v3112
        %v3252 = vmul.f32 %v3228, %v3114
        %v3253 = vmul.f32 %v3229, %v3175
        %v3254 = vmul.f32 %v3230, %v3177
        %v3255 = vmul.f32 %v3231, %v3118
        %v3256 = vmul.f32 %v3232, %v3120
        %v3257 = vmul.f32 %v3233, %v3181
        %v3258 = vmul.f32 %v3234, %v3183
        %v3259 = vmul.f32 %v3235, %v3122
        %v3260 = vmul.f32 %v3236, %v3124
        %v3261 = vmul.f32 %v3237, %v3185
        %v3262 = vmul.f32 %v3238, %v3187
        %v3263 = vmul.f32 %v3239, %v3128
        %v3264 = vmul.f32 %v3240, %v3130
        %v3265 = vmul.f32 %v3241, %v3191
        %v3266 = vmul.f32 %v3242, %v3193
        %v3267 = vmul.f32 %v3243, %v3132
        %v3268 = vmul.f32 %v3244, %v3134
        %v3269 = vmul.f32 %v3245, %v3195
        %v3270 = vmul.f32 %v3246, %v3197
        %v3271 = vmul.f32 %v3247, %v3108
        %v3272 = vmul.f32 %v3248, %v3110
        %v3273 = vmul.f32 %v3249, %v3171
        %v3274 = vmul.f32 %v3250, %v3173
        %v3275 = vmul.f32 %v3251, %v3112
        %v3276 = vmul.f32 %v3252, %v3114
        %v3277 = vmul.f32 %v3253, %v3175
        %v3278 = vmul.f32 %v3254, %v3177
        %v3279 = vmul.f32 %v3255, %v3118
        %v3280 = vmul.f32 %v3256, %v3120
        %v3281 = vmul.f32 %v3257, %v3181
        %v3282 = vmul.f32 %v3258, %v3183
        %v3283 = vmul.f32 %v3259, %v3122
        %v3284 = vmul.f32 %v3260, %v3124
        %v3285 = vmul.f32 %v3261, %v3185
        %v3286 = vmul.f32 %v3262, %v3187
        %v3287 = vmul.f32 %v3263, %v3128
        %v3288 = vmul.f32 %v3264, %v3130
        %v3289 = vmul.f32 %v3265, %v3191
        %v3290 = vmul.f32 %v3266, %v3193
        %v3291 = vmul.f32 %v3267, %v3132
        %v3292 = vmul.f32 %v3268, %v3134
        %v3293 = vmul.f32 %v3269, %v3195
        %v3294 = vmul.f32 %v3270, %v3197
        %v3295 = vadd.f32 %v3108, %v3271
        %v3296 = vadd.f32 %v3110, %v3272
        %v3297 = vadd.f32 %v3171, %v3273
        %v3298 = vadd.f32 %v3173, %v3274
        %v3299 = vadd.f32 %v3112, %v3275
        %v3300 = vadd.f32 %v3114, %v3276
        %v3301 = vadd.f32 %v3175, %v3277
        %v3302 = vadd.f32 %v3177, %v3278
        %v3303 = vadd.f32 %v3118, %v3279
        %v3304 = vadd.f32 %v3120, %v3280
        %v3305 = vadd.f32 %v3181, %v3281
        %v3306 = vadd.f32 %v3183, %v3282
        %v3307 = vadd.f32 %v3122, %v3283
        %v3308 = vadd.f32 %v3124, %v3284
        %v3309 = vadd.f32 %v3185, %v3285
        %v3310 = vadd.f32 %v3187, %v3286
        %v3311 = vadd.f32 %v3128, %v3287
        %v3312 = vadd.f32 %v3130, %v3288
        %v3313 = vadd.f32 %v3191, %v3289
        %v3314 = vadd.f32 %v3193, %v3290
        %v3315 = vadd.f32 %v3132, %v3291
        %v3316 = vadd.f32 %v3134, %v3292
        %v3317 = vadd.f32 %v3195, %v3293
        %v3318 = vadd.f32 %v3197, %v3294
        %v3319 = vmul.f32 %v3295, 0.7978846
        %v3320 = vmul.f32 %v3296, 0.7978846
        %v3321 = vmul.f32 %v3297, 0.7978846
        %v3322 = vmul.f32 %v3298, 0.7978846
        %v3323 = vmul.f32 %v3299, 0.7978846
        %v3324 = vmul.f32 %v3300, 0.7978846
        %v3325 = vmul.f32 %v3301, 0.7978846
        %v3326 = vmul.f32 %v3302, 0.7978846
        %v3327 = vmul.f32 %v3303, 0.7978846
        %v3328 = vmul.f32 %v3304, 0.7978846
        %v3329 = vmul.f32 %v3305, 0.7978846
        %v3330 = vmul.f32 %v3306, 0.7978846
        %v3331 = vmul.f32 %v3307, 0.7978846
        %v3332 = vmul.f32 %v3308, 0.7978846
        %v3333 = vmul.f32 %v3309, 0.7978846
        %v3334 = vmul.f32 %v3310, 0.7978846
        %v3335 = vmul.f32 %v3311, 0.7978846
        %v3336 = vmul.f32 %v3312, 0.7978846
        %v3337 = vmul.f32 %v3313, 0.7978846
        %v3338 = vmul.f32 %v3314, 0.7978846
        %v3339 = vmul.f32 %v3315, 0.7978846
        %v3340 = vmul.f32 %v3316, 0.7978846
        %v3341 = vmul.f32 %v3317, 0.7978846
        %v3342 = vmul.f32 %v3318, 0.7978846
        %v3343 = vtanh.pop %v3319
        %v3344 = vtanh.pop %v3320
        %v3345 = vtanh.pop %v3321
        %v3346 = vtanh.pop %v3322
        %v3347 = vtanh.pop %v3323
        %v3348 = vtanh.pop %v3324
        %v3349 = vtanh.pop %v3325
        %v3350 = vtanh.pop %v3326
        %v3351 = vtanh.pop %v3327
        %v3352 = vtanh.pop %v3328
        %v3353 = vtanh.pop %v3329
        %v3354 = vtanh.pop %v3330
        %v3355 = vtanh.pop %v3331
        %v3356 = vtanh.pop %v3332
        %v3357 = vtanh.pop %v3333
        %v3358 = vtanh.pop %v3334
        %v3359 = vtanh.pop %v3335
        %v3360 = vtanh.pop %v3336
        %v3361 = vtanh.pop %v3337
        %v3362 = vtanh.pop %v3338
        %v3363 = vtanh.pop %v3339
        %v3364 = vtanh.pop %v3340
        %v3365 = vtanh.pop %v3341
        %v3366 = vtanh.pop %v3342
        %v3367 = vadd.f32 %v3343, 1.0
        %v3368 = vadd.f32 %v3344, 1.0
        %v3369 = vadd.f32 %v3345, 1.0
        %v3370 = vadd.f32 %v3346, 1.0
        %v3371 = vadd.f32 %v3347, 1.0
        %v3372 = vadd.f32 %v3348, 1.0
        %v3373 = vadd.f32 %v3349, 1.0
        %v3374 = vadd.f32 %v3350, 1.0
        %v3375 = vadd.f32 %v3351, 1.0
        %v3376 = vadd.f32 %v3352, 1.0
        %v3377 = vadd.f32 %v3353, 1.0
        %v3378 = vadd.f32 %v3354, 1.0
        %v3379 = vadd.f32 %v3355, 1.0
        %v3380 = vadd.f32 %v3356, 1.0
        %v3381 = vadd.f32 %v3357, 1.0
        %v3382 = vadd.f32 %v3358, 1.0
        %v3383 = vadd.f32 %v3359, 1.0
        %v3384 = vadd.f32 %v3360, 1.0
        %v3385 = vadd.f32 %v3361, 1.0
        %v3386 = vadd.f32 %v3362, 1.0
        %v3387 = vadd.f32 %v3363, 1.0
        %v3388 = vadd.f32 %v3364, 1.0
        %v3389 = vadd.f32 %v3365, 1.0
        %v3390 = vadd.f32 %v3366, 1.0
        %v3391 = vmul.f32 %v3199, %v3367
        %v3392 = vmul.f32 %v3200, %v3368
        %v3393 = vmul.f32 %v3201, %v3369
        %v3394 = vmul.f32 %v3202, %v3370
        %v3395 = vmul.f32 %v3203, %v3371
        %v3396 = vmul.f32 %v3204, %v3372
        %v3397 = vmul.f32 %v3205, %v3373
        %v3398 = vmul.f32 %v3206, %v3374
        %v3399 = vmul.f32 %v3207, %v3375
        %v3400 = vmul.f32 %v3208, %v3376
        %v3401 = vmul.f32 %v3209, %v3377
        %v3402 = vmul.f32 %v3210, %v3378
        %v3403 = vmul.f32 %v3211, %v3379
        %v3404 = vmul.f32 %v3212, %v3380
        %v3405 = vmul.f32 %v3213, %v3381
        %v3406 = vmul.f32 %v3214, %v3382
        %v3407 = vmul.f32 %v3215, %v3383
        %v3408 = vmul.f32 %v3216, %v3384
        %v3409 = vmul.f32 %v3217, %v3385
        %v3410 = vmul.f32 %v3218, %v3386
        %v3411 = vmul.f32 %v3219, %v3387
        %v3412 = vmul.f32 %v3220, %v3388
        %v3413 = vmul.f32 %v3221, %v3389
        %v3414 = vmul.f32 %v3222, %v3390
        %v3415 = vpack.c.bf16 %v3395, %v3391
        %v3416 = vpack.c.bf16 %v3396, %v3392
        %v3417 = vpack.c.bf16 %v3397, %v3393
        %v3418 = vpack.c.bf16 %v3398, %v3394
        %v3419 = vpack.c.bf16 %v3403, %v3399
        %v3420 = vpack.c.bf16 %v3404, %v3400
        %v3421 = vpack.c.bf16 %v3405, %v3401
        %v3422 = vpack.c.bf16 %v3406, %v3402
        %v3423 = vpack.c.bf16 %v3411, %v3407
        %v3424 = vpack.c.bf16 %v3412, %v3408
        %v3425 = vpack.c.bf16 %v3413, %v3409
        %v3426 = vpack.c.bf16 %v3414, %v3410
        %v3427 = vld [vmem:[%s721] sm:$0xf]
        %v3428 = vld [vmem:[%s721 + $0x4] sm:$0xf]
        %v3429 = vld [vmem:[%s721 + $0x8] sm:$0xf]
        %v3430 = vld [vmem:[%s721 + $0xc] sm:$0xf]
        %v3431 = vld [vmem:[%s721 + $0x10] sm:$0xf]
        %v3432 = vld [vmem:[%s721 + $0x14] sm:$0xf]
        %v3433 = vld [vmem:[%s721 + $0x18] sm:$0xf]
        %v3434 = vld [vmem:[%s721 + $0x1c] sm:$0xf]
        %v3435 = vld [vmem:[%s721 + $0x20] sm:$0xf]
        %v3436 = vld [vmem:[%s721 + $0x24] sm:$0xf]
        %v3437 = vld [vmem:[%s721 + $0x28] sm:$0xf]
        %v3438 = vld [vmem:[%s721 + $0x2c] sm:$0xf]
        %v3439 = vld [vmem:[%s721 + $0x30] sm:$0xf]
        %v3440 = vld [vmem:[%s721 + $0x34] sm:$0xf]
        %v3441 = vld [vmem:[%s721 + $0x38] sm:$0xf]
        %v3442 = vld [vmem:[%s721 + $0x3c] sm:$0xf]
        %v3443 = vld [vmem:[%s721 + $0x40] sm:$0xf]
        %v3444 = vld [vmem:[%s721 + $0x44] sm:$0xf]
        %v3445 = vld [vmem:[%s721 + $0x48] sm:$0xf]
        %v3446 = vld [vmem:[%s721 + $0x4c] sm:$0xf]
        %v3447 = vld [vmem:[%s721 + $0x50] sm:$0xf]
        %v3448 = vld [vmem:[%s721 + $0x54] sm:$0xf]
        %v3449 = vld [vmem:[%s721 + $0x58] sm:$0xf]
        %v3450 = vld [vmem:[%s721 + $0x5c] sm:$0xf]
        %v3451 = vld [vmem:[%s721 + $0x60] sm:$0xf]
        %v3452 = vld [vmem:[%s721 + $0x64] sm:$0xf]
        %v3453 = vld [vmem:[%s721 + $0x68] sm:$0xf]
        %v3454 = vld [vmem:[%s721 + $0x6c] sm:$0xf]
        %v3455 = vld [vmem:[%s721 + $0x70] sm:$0xf]
        %v3456 = vld [vmem:[%s721 + $0x74] sm:$0xf]
        %v3457 = vld [vmem:[%s721 + $0x78] sm:$0xf]
        %v3458 = vld [vmem:[%s721 + $0x7c] sm:$0xf]
        %v3459 = vld [vmem:[%s721 + $0x80] sm:$0xf]
        %v3460 = vld [vmem:[%s721 + $0x84] sm:$0xf]
        %v3461 = vld [vmem:[%s721 + $0x88] sm:$0xf]
        %v3462 = vld [vmem:[%s721 + $0x8c] sm:$0xf]
        %v3463 = vld [vmem:[%s721 + $0x90] sm:$0xf]
        %v3464 = vld [vmem:[%s721 + $0x94] sm:$0xf]
        %v3465 = vld [vmem:[%s721 + $0x98] sm:$0xf]
        %v3466 = vld [vmem:[%s721 + $0x9c] sm:$0xf]
        %v3467 = vld [vmem:[%s721 + $0xa0] sm:$0xf]
        %v3468 = vld [vmem:[%s721 + $0xa4] sm:$0xf]
        %v3469 = vld [vmem:[%s721 + $0xa8] sm:$0xf]
        %v3470 = vld [vmem:[%s721 + $0xac] sm:$0xf]
        %v3471 = vld [vmem:[%s721 + $0xb0] sm:$0xf]
        %v3472 = vld [vmem:[%s721 + $0xb4] sm:$0xf]
        %v3473 = vld [vmem:[%s721 + $0xb8] sm:$0xf]
        %v3474 = vld [vmem:[%s721 + $0xbc] sm:$0xf]
        %v3475 = vld [vmem:[%s721 + $0xc0] sm:$0xf]
        %v3476 = vld [vmem:[%s721 + $0xc4] sm:$0xf]
        %v3477 = vld [vmem:[%s721 + $0xc8] sm:$0xf]
        %v3478 = vld [vmem:[%s721 + $0xcc] sm:$0xf]
        %v3479 = vld [vmem:[%s721 + $0xd0] sm:$0xf]
        %v3480 = vld [vmem:[%s721 + $0xd4] sm:$0xf]
        %v3481 = vld [vmem:[%s721 + $0xd8] sm:$0xf]
        %v3482 = vld [vmem:[%s721 + $0xdc] sm:$0xf]
        %v3483 = vld [vmem:[%s721 + $0xe0] sm:$0xf]
        %v3484 = vld [vmem:[%s721 + $0xe4] sm:$0xf]
        %v3485 = vld [vmem:[%s721 + $0xe8] sm:$0xf]
        %v3486 = vld [vmem:[%s721 + $0xec] sm:$0xf]
        %v3487 = vld [vmem:[%s721 + $0xf0] sm:$0xf]
        %v3488 = vld [vmem:[%s721 + $0xf4] sm:$0xf]
        %v3489 = vld [vmem:[%s721 + $0xf8] sm:$0xf]
        %v3490 = vld [vmem:[%s721 + $0xfc] sm:$0xf]
        %v3491 = vld [vmem:[%s724] sm:$0x1]
        %v3493 = vlaneseq
        %v3494 = vshrl.u32 %v3493, 7
        %v3495 = vsub.s32 0, %v3494
        %v3496 = vrot.slane %v3491, %v3495
        %v3562 = vunpack.c.l.b16 %v3427
        %v3563 = vunpack.c.l.b16 %v3428
        %v3564 = vunpack.c.l.b16 %v3429
        %v3565 = vunpack.c.l.b16 %v3430
        %v3566 = vunpack.c.l.b16 %v3431
        %v3567 = vunpack.c.l.b16 %v3432
        %v3568 = vunpack.c.l.b16 %v3433
        %v3569 = vunpack.c.l.b16 %v3434
        %v3570 = vunpack.c.l.b16 %v3435
        %v3571 = vunpack.c.l.b16 %v3436
        %v3572 = vunpack.c.l.b16 %v3437
        %v3573 = vunpack.c.l.b16 %v3438
        %v3574 = vunpack.c.l.b16 %v3439
        %v3575 = vunpack.c.l.b16 %v3440
        %v3576 = vunpack.c.l.b16 %v3441
        %v3577 = vunpack.c.l.b16 %v3442
        %v3578 = vunpack.c.l.b16 %v3443
        %v3579 = vunpack.c.l.b16 %v3444
        %v3580 = vunpack.c.l.b16 %v3445
        %v3581 = vunpack.c.l.b16 %v3446
        %v3582 = vunpack.c.l.b16 %v3447
        %v3583 = vunpack.c.l.b16 %v3448
        %v3584 = vunpack.c.l.b16 %v3449
        %v3585 = vunpack.c.l.b16 %v3450
        %v3586 = vunpack.c.l.b16 %v3451
        %v3587 = vunpack.c.l.b16 %v3452
        %v3588 = vunpack.c.l.b16 %v3453
        %v3589 = vunpack.c.l.b16 %v3454
        %v3590 = vunpack.c.l.b16 %v3455
        %v3591 = vunpack.c.l.b16 %v3456
        %v3592 = vunpack.c.l.b16 %v3457
        %v3593 = vunpack.c.l.b16 %v3458
        %v3594 = vunpack.c.l.b16 %v3459
        %v3595 = vunpack.c.l.b16 %v3460
        %v3596 = vunpack.c.l.b16 %v3461
        %v3597 = vunpack.c.l.b16 %v3462
        %v3598 = vunpack.c.l.b16 %v3463
        %v3599 = vunpack.c.l.b16 %v3464
        %v3600 = vunpack.c.l.b16 %v3465
        %v3601 = vunpack.c.l.b16 %v3466
        %v3602 = vunpack.c.l.b16 %v3467
        %v3603 = vunpack.c.l.b16 %v3468
        %v3604 = vunpack.c.l.b16 %v3469
        %v3605 = vunpack.c.l.b16 %v3470
        %v3606 = vunpack.c.l.b16 %v3471
        %v3607 = vunpack.c.l.b16 %v3472
        %v3608 = vunpack.c.l.b16 %v3473
        %v3609 = vunpack.c.l.b16 %v3474
        %v3610 = vunpack.c.l.b16 %v3475
        %v3611 = vunpack.c.l.b16 %v3476
        %v3612 = vunpack.c.l.b16 %v3477
        %v3613 = vunpack.c.l.b16 %v3478
        %v3614 = vunpack.c.l.b16 %v3479
        %v3615 = vunpack.c.l.b16 %v3480
        %v3616 = vunpack.c.l.b16 %v3481
        %v3617 = vunpack.c.l.b16 %v3482
        %v3618 = vunpack.c.l.b16 %v3483
        %v3619 = vunpack.c.l.b16 %v3484
        %v3620 = vunpack.c.l.b16 %v3485
        %v3621 = vunpack.c.l.b16 %v3486
        %v3622 = vunpack.c.l.b16 %v3487
        %v3623 = vunpack.c.l.b16 %v3488
        %v3624 = vunpack.c.l.b16 %v3489
        %v3625 = vunpack.c.l.b16 %v3490
        %v3626 = vpack.c.b16 %v3563, %v3562
        %v3627 = vpack.c.b16 %v3565, %v3564
        %v3628 = vpack.c.b16 %v3567, %v3566
        %v3629 = vpack.c.b16 %v3569, %v3568
        %v3630 = vpack.c.b16 %v3571, %v3570
        %v3631 = vpack.c.b16 %v3573, %v3572
        %v3632 = vpack.c.b16 %v3575, %v3574
        %v3633 = vpack.c.b16 %v3577, %v3576
        %v3634 = vpack.c.b16 %v3579, %v3578
        %v3635 = vpack.c.b16 %v3581, %v3580
        %v3636 = vpack.c.b16 %v3583, %v3582
        %v3637 = vpack.c.b16 %v3585, %v3584
        %v3638 = vpack.c.b16 %v3587, %v3586
        %v3639 = vpack.c.b16 %v3589, %v3588
        %v3640 = vpack.c.b16 %v3591, %v3590
        %v3641 = vpack.c.b16 %v3593, %v3592
        %v3642 = vpack.c.b16 %v3595, %v3594
        %v3643 = vpack.c.b16 %v3597, %v3596
        %v3644 = vpack.c.b16 %v3599, %v3598
        %v3645 = vpack.c.b16 %v3601, %v3600
        %v3646 = vpack.c.b16 %v3603, %v3602
        %v3647 = vpack.c.b16 %v3605, %v3604
        %v3648 = vpack.c.b16 %v3607, %v3606
        %v3649 = vpack.c.b16 %v3609, %v3608
        %v3650 = vpack.c.b16 %v3611, %v3610
        %v3651 = vpack.c.b16 %v3613, %v3612
        %v3652 = vpack.c.b16 %v3615, %v3614
        %v3653 = vpack.c.b16 %v3617, %v3616
        %v3654 = vpack.c.b16 %v3619, %v3618
        %v3655 = vpack.c.b16 %v3621, %v3620
        %v3656 = vpack.c.b16 %v3623, %v3622
        %v3657 = vpack.c.b16 %v3625, %v3624
        %3690 = vmatprep.subr.bf16.mxu0 0
        %3691 = vmatpush1.bf16.msra.mxu0 %v3626
        %3692 = vmatprep.subr.bf16.mxu0 0
        %3693 = vmatpush1.bf16.msra.mxu0 %v3627
        %3694 = vmatprep.subr.bf16.mxu0 0
        %3695 = vmatpush1.bf16.msra.mxu0 %v3628
        %3696 = vmatprep.subr.bf16.mxu0 0
        %3697 = vmatpush1.bf16.msra.mxu0 %v3629
        %3698 = vmatprep.subr.bf16.mxu0 0
        %3699 = vmatpush1.bf16.msra.mxu0 %v3630
        %3700 = vmatprep.subr.bf16.mxu0 0
        %3701 = vmatpush1.bf16.msra.mxu0 %v3631
        %3702 = vmatprep.subr.bf16.mxu0 0
        %3703 = vmatpush1.bf16.msra.mxu0 %v3632
        %3704 = vmatprep.subr.bf16.mxu0 0
        %3705 = vmatpush1.bf16.msra.mxu0 %v3633
        %3706 = vmatprep.subr.bf16.mxu0 0
        %3707 = vmatpush1.bf16.msra.mxu0 %v3634
        %3708 = vmatprep.subr.bf16.mxu0 0
        %3709 = vmatpush1.bf16.msra.mxu0 %v3635
        %3710 = vmatprep.subr.bf16.mxu0 0
        %3711 = vmatpush1.bf16.msra.mxu0 %v3636
        %3712 = vmatprep.subr.bf16.mxu0 0
        %3713 = vmatpush1.bf16.msra.mxu0 %v3637
        %3714 = vmatprep.subr.bf16.mxu0 0
        %3715 = vmatpush1.bf16.msra.mxu0 %v3638
        %3716 = vmatprep.subr.bf16.mxu0 0
        %3717 = vmatpush1.bf16.msra.mxu0 %v3639
        %3718 = vmatprep.subr.bf16.mxu0 0
        %3719 = vmatpush1.bf16.msra.mxu0 %v3640
        %3720 = vmatprep.subr.bf16.mxu0 0
        %3721 = vmatpush1.bf16.msra.mxu0 %v3641
        %3722 = vmatprep.mubr.bf16.mxu0 %v3416
        %3723 = vmatmul.mubr.bf16.gmra.mrb[0].mxu0 %v3415
        %v3724 = vpop.f32.mrb[0].mxu0
        %v3725 = vadd.f32 %v3496, %v3724
        %v3726 = vpop.f32.mrb[0].mxu0
        %v3727 = vpop.f32.mrb[0].mxu0
        %v3728 = vadd.f32 %v3496, %v3727
        %v3729 = vpop.f32.mrb[0].mxu0
        %3730 = vmatprep.mubr.bf16.mxu0 %v3420
        %3731 = vmatmul.mubr.bf16.gmra.mrb[0].mxu0 %v3419
        %v3732 = vpop.f32.mrb[0].mxu0
        %v3733 = vadd.f32 %v3496, %v3732
        %v3734 = vpop.f32.mrb[0].mxu0
        %v3735 = vpop.f32.mrb[0].mxu0
        %v3736 = vadd.f32 %v3496, %v3735
        %v3737 = vpop.f32.mrb[0].mxu0
        %3738 = vmatprep.mubr.bf16.mxu0 %v3424
        %3739 = vmatmul.mubr.bf16.gmra.mrb[0].mxu0 %v3423
        %v3740 = vpop.f32.mrb[0].mxu0
        %v3741 = vadd.f32 %v3496, %v3740
        %v3742 = vpop.f32.mrb[0].mxu0
        %v3743 = vpop.f32.mrb[0].mxu0
        %v3744 = vadd.f32 %v3496, %v3743
        %v3745 = vpop.f32.mrb[0].mxu0
        %3746 = vdwg.mxu0
        %3747 = vmatprep.subr.bf16.mxu0 0
        %3748 = vmatpush1.bf16.msra.mxu0 %v3642
        %3749 = vmatprep.subr.bf16.mxu0 0
        %3750 = vmatpush1.bf16.msra.mxu0 %v3643
        %3751 = vmatprep.subr.bf16.mxu0 0
        %3752 = vmatpush1.bf16.msra.mxu0 %v3644
        %3753 = vmatprep.subr.bf16.mxu0 0
        %3754 = vmatpush1.bf16.msra.mxu0 %v3645
        %3755 = vmatprep.subr.bf16.mxu0 0
        %3756 = vmatpush1.bf16.msra.mxu0 %v3646
        %3757 = vmatprep.subr.bf16.mxu0 0
        %3758 = vmatpush1.bf16.msra.mxu0 %v3647
        %3759 = vmatprep.subr.bf16.mxu0 0
        %3760 = vmatpush1.bf16.msra.mxu0 %v3648
        %3761 = vmatprep.subr.bf16.mxu0 0
        %3762 = vmatpush1.bf16.msra.mxu0 %v3649
        %3763 = vmatprep.subr.bf16.mxu0 0
        %3764 = vmatpush1.bf16.msra.mxu0 %v3650
        %3765 = vmatprep.subr.bf16.mxu0 0
        %3766 = vmatpush1.bf16.msra.mxu0 %v3651
        %3767 = vmatprep.subr.bf16.mxu0 0
        %3768 = vmatpush1.bf16.msra.mxu0 %v3652
        %3769 = vmatprep.subr.bf16.mxu0 0
        %3770 = vmatpush1.bf16.msra.mxu0 %v3653
        %3771 = vmatprep.subr.bf16.mxu0 0
        %3772 = vmatpush1.bf16.msra.mxu0 %v3654
        %3773 = vmatprep.subr.bf16.mxu0 0
        %3774 = vmatpush1.bf16.msra.mxu0 %v3655
        %3775 = vmatprep.subr.bf16.mxu0 0
        %3776 = vmatpush1.bf16.msra.mxu0 %v3656
        %3777 = vmatprep.subr.bf16.mxu0 0
        %3778 = vmatpush1.bf16.msra.mxu0 %v3657
        %3779 = vmatprep.mubr.bf16.mxu0 %v3418
        %3780 = vmatmul.mubr.bf16.gmra.mrb[0].mxu0 %v3417
        %v3781 = vpop.f32.mrb[0].mxu0
        %v3782 = vadd.f32 %v3725, %v3781
        %v3783 = vpop.f32.mrb[0].mxu0
        %v3784 = vpop.f32.mrb[0].mxu0
        %v3785 = vadd.f32 %v3728, %v3784
        %v3786 = vpop.f32.mrb[0].mxu0
        %3787 = vmatprep.mubr.bf16.mxu0 %v3422
        %3788 = vmatmul.mubr.bf16.gmra.mrb[0].mxu0 %v3421
        %v3789 = vpop.f32.mrb[0].mxu0
        %v3790 = vadd.f32 %v3733, %v3789
        %v3791 = vpop.f32.mrb[0].mxu0
        %v3792 = vpop.f32.mrb[0].mxu0
        %v3793 = vadd.f32 %v3736, %v3792
        %v3794 = vpop.f32.mrb[0].mxu0
        %3795 = vmatprep.mubr.bf16.mxu0 %v3426
        %3796 = vmatmul.mubr.bf16.gmra.mrb[0].mxu0 %v3425
        %v3797 = vpop.f32.mrb[0].mxu0
        %v3798 = vadd.f32 %v3741, %v3797
        %v3799 = vpop.f32.mrb[0].mxu0
        %v3800 = vpop.f32.mrb[0].mxu0
        %v3801 = vadd.f32 %v3744, %v3800
        %v3802 = vpop.f32.mrb[0].mxu0
        %3803 = vdwg.mxu0
        %v3804 = vadd.f32 %v2758, %v3782
        %v3805 = vadd.f32 %v2759, %v3785
        %v3806 = vadd.f32 %v2760, %v3790
        %v3807 = vadd.f32 %v2761, %v3793
        %v3808 = vadd.f32 %v2762, %v3798
        %v3809 = vadd.f32 %v2763, %v3801
        %3810 = vst [vmem:[#allocation2] sm:$0xff] %v3804
        %3811 = vst [vmem:[#allocation2 + $0x8] sm:$0xff] %v3805
        %3812 = vst [vmem:[#allocation2 + $0x10] sm:$0xff] %v3806
        %3813 = vst [vmem:[#allocation2 + $0x18] sm:$0xff] %v3807
        %3814 = vst [vmem:[#allocation2 + $0x20] sm:$0xff] %v3808
        %3815 = vst [vmem:[#allocation2 + $0x28] sm:$0xff] %v3809
        %p3816 = scmp.eq.s32.totalorder %s33, 1
        // Predicated region
        $region89: #{_lambda_.3} parent=83 // pred_check
          %p3817 = pneg %p3816
        $region90: #{_lambda_.3} parent=83 // pred_check_branch
          %3819 = sbr.rel (%p3817) target = $region92
        $region91: #{_lambda_.3} parent=83 // pred_region
          %v3821 = vrot.slane %v3807, 7
          %vm3823 = vcmask 1040384
          %v3824 = vsel %vm3823, %v3804, %v3821
          %v3825 = vld [vmem:[%s14] sm:$0x1]
          %v3826 = vld [vmem:[%s15] sm:$0x1]
          %vm3827 = vcmask 1041408
          %v3828 = vsel %vm3827, %v3824, 0.0
          %3829 = vadd.xlane.f32.xlu0 %v3828
          %v3830 = vpop.xlane.xlu0 %3829
          %v3831 = vmul.f32 %v3830, %v763
          %v3832 = vsub.f32 %v3824, %v3831
          %v3833 = vmul.f32 %v3832, %v3832
          %v3834 = vsel %vm3827, %v3833, 0.0
          %3835 = vadd.xlane.f32.xlu0 %v3834
          %v3836 = vpop.xlane.xlu0 %3835
          %v3837 = vmul.f32 %v3836, %v763
          %v3838 = vadd.f32 %v3837, 1e-06
          %v3839 = vrsqrt.pop %v3838
          %v3840 = vmul.f32 %v3832, %v3839
          %v3842 = vlaneseq
          %v3843 = vshrl.u32 %v3842, 7
          %v3844 = vsub.s32 0, %v3843
          %v3845 = vrot.slane %v3825, %v3844
          %v3847 = vmul.f32 %v3840, %v3845
          %v3849 = vlaneseq
          %v3850 = vshrl.u32 %v3849, 7
          %v3851 = vsub.s32 0, %v3850
          %v3852 = vrot.slane %v3826, %v3851
          %v3854 = vadd.f32 %v3847, %v3852
          %3855 = vst [vmem:[#allocation4] sm:$0x3] %v3854
        $region92: #{_lambda_.3} parent=83 // pred_fallthru
          _
        // Predicated region
        $region93: #{_lambda_.3} parent=83 // pred_check
          %p3856 = pneg %p459
        $region94: #{_lambda_.3} parent=83 // pred_check_branch
          %3858 = sbr.rel (%p3856) target = $region96
        $region95: #{_lambda_.3} parent=83 // pred_region
          %s3860 = ssub.s32 32, 32
          %3861 = vsyncadd [#allocation5], %s3860
          %s3862 = smul.addr %s32, 32
          %s3863 = scalar_lea.hbm %s16, %s3862
          %s3865 = sshll.u32 [#allocation4], 4
          %s3866 = int_to_ptr.vmem [resolvable:$true] %s3865
          %3868 = dma.vmem_to_hbm [thread:$0]  %s3866, 32, %s3863, [#allocation5]
        $region96: #{_lambda_.3} parent=83 // pred_fallthru
          _
        // Predicated region
        $region97: #{_lambda_.3} parent=83 // pred_check
          %p3869 = pneg %p459
        $region98: #{_lambda_.3} parent=83 // pred_check_branch
          %3871 = sbr.rel (%p3869) target = $region100
        $region99: #{_lambda_.3} parent=83 // pred_region
          %3872 = dma.done [#allocation5], 32
        $region100: #{_lambda_.3} parent=83 // pred_fallthru
          _
      $region84: #{_lambda_.3} parent=5 // pred_fallthru
        _
      %p3873 = scmp.le.s32.totalorder 2, %s23
      // Predicated region
      $region101: #{_lambda_.3} parent=5 // pred_check
        %p3874 = pneg %p3873
      $region102: #{_lambda_.3} parent=5 // pred_check_branch
        %3876 = sbr.rel (%p3874) target = $region104
      $region103: #{_lambda_.3} parent=5 // pred_region
        %s3877 = ssub.s32 %s23, 2
      $region104: #{_lambda_.3} parent=5 // pred_fallthru
        _
    $region6: #{_lambda_.3} parent=1 // loop_footer
      %s27 = sadd.s32 1, %s23
    $region7: #{_lambda_.3} parent=1 // loop_footer_branch
      %22 = sbr.rel target = $region3
    $region8: #{_lambda_.3} parent=1 // loop_exit
      _
    %3878 = vsyncpa [#allocation5], 1
    %s3879 = scalar_lea.sflag [#allocation5], 1
    %3880 = vsyncpa %s3879, 1

</llo_original>
